<compile_context>
chip_gen: v6e
topology: v6e:2x2x1
jax: 0.10.0
libtpu: 0.0.40
codegen_flags: <defaults>
</compile_context>

<pallas_src>
import jax
import jax.numpy as jnp
from jax.experimental import pallas as pl
from jax.experimental.pallas import tpu as pltpu

_LANE = 128
_SUBLANE = 8


def _round_up(n, m):
    return (n + m - 1) // m * m


# --------------------------------------------------------------------------
# Kernels
# --------------------------------------------------------------------------
def _dense_kernel(x_ref, wm1_ref, bm1_ref, wmlp_ref, wlin_ref, btot_ref, o_ref):
    """y = relu(x@Wm1+bm1)@W_mlp + x@W_lin + b_tot   (folded / lane-packed)."""
    x = x_ref[...]                                                     # [TB, L]
    h = jnp.dot(x, wm1_ref[...], preferred_element_type=jnp.float32)   # [TB, P*Hm]
    h = jnp.maximum(h + bm1_ref[...], 0.0)
    y = jnp.dot(x, wlin_ref[...], preferred_element_type=jnp.float32)  # [TB, L]
    y = y + jnp.dot(h.astype(wmlp_ref.dtype), wmlp_ref[...],
                    preferred_element_type=jnp.float32)
    y = y + btot_ref[...]
    o_ref[...] = y.astype(o_ref.dtype)


def _lowrank_kernel(x_ref, wm1_ref, bm1_ref, wmlp_ref, wl1t_ref, wdht_ref,
                    btot_ref, o_ref):
    """Large-D path: keep the linear branch in low-rank form (no DxD weight)."""
    x = x_ref[...]                                                     # [TB, D]
    h = jnp.dot(x, wm1_ref[...], preferred_element_type=jnp.float32)   # [TB, Hm]
    h = jnp.maximum(h + bm1_ref[...], 0.0)
    t = jnp.dot(x, wl1t_ref[...], preferred_element_type=jnp.float32)  # [TB, H]
    y = jnp.dot(t.astype(wdht_ref.dtype), wdht_ref[...],
                preferred_element_type=jnp.float32)                    # [TB, D]
    y = y + jnp.dot(h.astype(wmlp_ref.dtype), wmlp_ref[...],
                    preferred_element_type=jnp.float32)
    y = y + btot_ref[...]
    o_ref[...] = y.astype(o_ref.dtype)


# --------------------------------------------------------------------------
# Tiling policy
# --------------------------------------------------------------------------
def _choose_tile_rows(rows, stream_row_bytes, stream_budget_bytes,
                      min_grid_steps=2):
    """Pick a batch tile from a streaming-VMEM budget.

    Streaming working set per step is double-buffered x-tile + out-tile:
        2 * tile * stream_row_bytes  <= stream_budget_bytes
    while keeping >= min_grid_steps grid steps (v7x megacore) when possible.
    """
    if rows <= _SUBLANE:
        return rows, rows  # tile == full array dim -> always a legal block
    cap = max(_SUBLANE, int(stream_budget_bytes // max(1, 2 * stream_row_bytes)))
    tile = min(rows, cap)
    if rows >= min_grid_steps * _SUBLANE:
        tile = min(tile, _round_up(pl.cdiv(rows, min_grid_steps), _SUBLANE))
    tile = max(_SUBLANE, (tile // _SUBLANE) * _SUBLANE)
    rows_pad = _round_up(rows, tile)
    return tile, rows_pad


# --------------------------------------------------------------------------
# Wrapper
# --------------------------------------------------------------------------
def mypca_forward(x, folded, *, compute_dtype=jnp.float32, weights_dtype=None,
                  out_dtype=None, stream_budget_bytes=16 << 20,
                  single_buffer_weights=True):
    """x: [B, D]. folded: dict from fold_params()."""
    B, D = x.shape
    weights_dtype = compute_dtype if weights_dtype is None else weights_dtype
    out_dtype = x.dtype if out_dtype is None else out_dtype
    dense = folded["dense"]
    Hm = folded["wm1"].shape[1]

    # Lane packing: P logical rows per 128-lane row (only for the dense fold
    # and when D divides 128). Rows are contiguous in HBM -> reshape is free.
    P = _LANE // D if (dense and D < _LANE and _LANE % D == 0) else 1
    lanes = P * D

    x_c = x.astype(compute_dtype)
    Bp = _round_up(B, P)
    if Bp != B:
        x_c = jnp.pad(x_c, ((0, Bp - B), (0, 0)))
    rows = Bp // P
    x_c = x_c.reshape(rows, lanes)

    def _blockdiag(w):      # replicate W block-diagonally P times
        return w if P == 1 else jnp.kron(jnp.eye(P, dtype=w.dtype), w)

    def _tile_bias(b):      # replicate a [1, n] bias P times along lanes
        return b if P == 1 else jnp.tile(b, (1, P))

    # Weights in weights_dtype (bf16 halves their VMEM footprint and feeds the
    # MXU at native rate); biases stay f32 so adds/ReLU run at full precision.
    wm1 = _blockdiag(folded["wm1"]).astype(weights_dtype)      # [lanes, P*Hm]
    bm1 = _tile_bias(folded["bm1"]).astype(jnp.float32)        # [1, P*Hm]
    w_mlp = _blockdiag(folded["w_mlp"]).astype(weights_dtype)  # [P*Hm, lanes]
    b_tot = _tile_bias(folded["b_tot"]).astype(jnp.float32)    # [1, lanes]

    if dense:
        w_lin = _blockdiag(folded["w_lin"]).astype(weights_dtype)  # [lanes, lanes]
        weight_arrays = (wm1, bm1, w_mlp, w_lin, b_tot)
        kernel = _dense_kernel
    else:
        wl1t = folded["wl1T"].astype(weights_dtype)                # [D, H]
        wdht = folded["wdhT"].astype(weights_dtype)                # [H, D]
        weight_arrays = (wm1, bm1, w_mlp, wl1t, wdht, b_tot)
        kernel = _lowrank_kernel

    # Batch tile from the streaming-VMEM budget.
    x_row_bytes = lanes * jnp.dtype(compute_dtype).itemsize
    o_row_bytes = lanes * jnp.dtype(out_dtype).itemsize
    tile, rows_pad = _choose_tile_rows(rows, x_row_bytes + o_row_bytes,
                                       stream_budget_bytes)
    if rows_pad != rows:
        x_c = jnp.pad(x_c, ((0, rows_pad - rows), (0, 0)))
    grid = (rows_pad // tile,)
    weight_bytes = sum(int(w.size) * w.dtype.itemsize for w in weight_arrays)

    def _run(single_buffer):
        wbuf = 1 if single_buffer else 2
        stream_bytes = 2 * tile * (x_row_bytes + o_row_bytes)
        vmem_need = wbuf * weight_bytes + stream_bytes + (2 << 20)
        # Raise above the v5e(16MiB)/v6e-v7x(32MiB) scoped defaults when needed,
        # but stay below v7x's 64 MiB physical VMEM.
        vmem_limit = int(min(max(vmem_need, 32 << 20), 56 << 20))

        def _weight_spec(shape):
            if single_buffer:
                # Constant index map -> one resident copy is enough; this frees
                # VMEM headroom for larger batch tiles.
                return pl.BlockSpec(shape, lambda i: (0, 0),
                                    pipeline_mode=pl.Buffered(1))
            return pl.BlockSpec(shape, lambda i: (0, 0))

        in_specs = [pl.BlockSpec((tile, lanes), lambda i: (i, 0))] + \
                   [_weight_spec(w.shape) for w in weight_arrays]
        out_specs = pl.BlockSpec((tile, lanes), lambda i: (i, 0))

        call = pl.pallas_call(
            kernel,
            out_shape=jax.ShapeDtypeStruct((rows_pad, lanes), out_dtype),
            grid=grid,
            in_specs=in_specs,
            out_specs=out_specs,
            compiler_params=pltpu.CompilerParams(
                dimension_semantics=("parallel",),
                vmem_limit_bytes=vmem_limit),
        )
        return call(x_c, *weight_arrays)

    try:
        out = _run(single_buffer_weights)
    except Exception:
        if not single_buffer_weights:
            raise
        # Fallback if this JAX build rejects pipeline_mode=Buffered(1) on a
        # top-level pallas_call: default (double-buffered) weight pipelining.
        out = _run(False)

    out = out[:rows].reshape(Bp, D)[:B]
    return out


# --------------------------------------------------------------------------
# Parameter construction (PyTorch layout) and algebraic fold
# --------------------------------------------------------------------------
def make_raw_params(key, input_size, hidden_size=2, mlp_hidden=16):
    """Deterministic synthetic parameters in PyTorch layout ([out, in] weights)."""
    def lin(k, fan_in, fan_out):
        k1, k2 = jax.random.split(k)
        bound = 1.0 / jnp.sqrt(fan_in)
        w = jax.random.uniform(k1, (fan_out, fan_in), jnp.float32, -bound, bound)
        b = jax.random.uniform(k2, (fan_out,), jnp.float32, -bound, bound)
        return w, b

    ks = jax.random.split(key, 4)
    wm1, bm1 = lin(ks[0], input_size, mlp_hidden)      # trained_mlp layer 1
    wm2, bm2 = lin(ks[1], mlp_hidden, 1)               # trained_mlp layer 2
    wl1, bl1 = lin(ks[2], input_size, hidden_size)     # lin1
    wd, bd = lin(ks[3], hidden_size + 1, input_size)   # decoder
    return {"wm1": wm1, "bm1": bm1, "wm2": wm2, "bm2": bm2,
            "wl1": wl1, "bl1": bl1, "wd": wd, "bd": bd}


def fold_params(raw, dense_fold=None, dense_threshold=256):
    """Fold the decoder into both branches.

    dense_fold=True : linear branch folded to a single DxD weight (small D).
    dense_fold=False: keep low-rank factors Wl1.T [D,H], wdh.T [H,D] (large D),
                      avoiding O(B*D^2) FLOPs and a D^2 resident weight.
    """
    D = raw["wm1"].shape[1]
    if dense_fold is None:
        dense_fold = D <= dense_threshold
    wd0 = raw["wd"][:, :1]                     # [D, 1] decoder column for x0
    wdh = raw["wd"][:, 1:]                     # [D, H] decoder columns for x1
    w_mlp = raw["wm2"].T @ wd0.T               # [Hm, 1] @ [1, D] -> [Hm, D]
    b_tot = raw["bd"] + raw["bl1"] @ wdh.T + raw["bm2"] @ wd0.T       # [D]
    folded = {
        "dense": bool(dense_fold),
        "wm1": raw["wm1"].T,                   # [D, Hm]
        "bm1": raw["bm1"][None, :],            # [1, Hm]
        "w_mlp": w_mlp,                        # [Hm, D]
        "b_tot": b_tot[None, :],               # [1, D]
    }
    if dense_fold:
        folded["w_lin"] = raw["wl1"].T @ wdh.T  # [D, D]
    else:
        folded["wl1T"] = raw["wl1"].T           # [D, H]
        folded["wdhT"] = wdh.T                  # [H, D]
    return folded


def mypca_reference(x, raw):
    """Unfolded reference mirroring the PyTorch module exactly."""
    h = jnp.maximum(x @ raw["wm1"].T + raw["bm1"], 0.0)
    x0 = h @ raw["wm2"].T + raw["bm2"]                 # [B, 1]
    x1 = x @ raw["wl1"].T + raw["bl1"]                 # [B, H]
    z = jnp.concatenate([x0, x1], axis=-1)             # [B, H+1]
    return z @ raw["wd"].T + raw["bd"]


# --------------------------------------------------------------------------
# Test
# --------------------------------------------------------------------------
if __name__ == "__main__":
    jax.config.update("jax_default_matmul_precision", "highest")
    key = jax.random.PRNGKey(0)

    # Case 1: small D -> dense fold + 4x lane packing (D=32, P=4), f32 exact.
    B, D, H, HM = 8, 32, 2, 16
    kx, kp, kx2 = jax.random.split(key, 3)
    x = jax.random.normal(kx, (B, D), jnp.float32)
    raw = make_raw_params(kp, input_size=D, hidden_size=H, mlp_hidden=HM)
    folded = fold_params(raw)
    ref = mypca_reference(x, raw)

    out = jax.block_until_ready(mypca_forward(x, folded))
    assert out.shape == (B, D)
    assert jnp.allclose(out, ref, atol=1e-4, rtol=1e-4)

    # Case 2: bf16 fast path (bf16 x / weights / output, f32 accumulation).
    out_bf16 = jax.block_until_ready(
        mypca_forward(x, folded, compute_dtype=jnp.bfloat16,
                      out_dtype=jnp.bfloat16))
    assert out_bf16.shape == (B, D)
    assert out_bf16.dtype == jnp.bfloat16
    assert jnp.allclose(out_bf16.astype(jnp.float32), ref, atol=1.5e-1, rtol=5e-2)

    # Case 3: larger D -> low-rank path (no DxD fold), multi-step parallel grid.
    B3, D3 = 64, 384
    x3 = jax.random.normal(kx2, (B3, D3), jnp.float32)
    raw3 = make_raw_params(jax.random.PRNGKey(1), input_size=D3,
                           hidden_size=H, mlp_hidden=HM)
    folded3 = fold_params(raw3)            # D3 > 256 -> dense=False
    assert not folded3["dense"]
    ref3 = mypca_reference(x3, raw3)
    out3 = jax.block_until_ready(mypca_forward(x3, folded3))
    assert out3.shape == (B3, D3)
    assert jnp.allclose(out3, ref3, atol=2e-3, rtol=2e-3)

    print("KERNEL_OK")
</pallas_src>

<mosaic_0001>
module attributes {stable_mosaic.version = 11 : i64} {
  func.func @_dense_kernel(%arg0: i32, %arg1: memref<2x128xf32, #tpu.memory_space<vmem>>, %arg2: memref<128x64xf32, #tpu.memory_space<vmem>>, %arg3: memref<1x64xf32, #tpu.memory_space<vmem>>, %arg4: memref<64x128xf32, #tpu.memory_space<vmem>>, %arg5: memref<128x128xf32, #tpu.memory_space<vmem>>, %arg6: memref<1x128xf32, #tpu.memory_space<vmem>>, %arg7: memref<2x128xf32, #tpu.memory_space<vmem>>) attributes {dimension_semantics = [#tpu.dimension_semantics<parallel>], iteration_bounds = array<i64: 1>, scalar_prefetch = 0 : i64, scratch_operands = 0 : i64, tpu.core_type = #tpu.core_type<tc>, window_params = [{transform_indices = @transform_0, window_bounds = array<i64: 2, 128>}, {pipeline_mode = #tpu.pipeline_mode<synchronous>, transform_indices = @transform_1, window_bounds = array<i64: 128, 64>}, {pipeline_mode = #tpu.pipeline_mode<synchronous>, transform_indices = @transform_2, window_bounds = array<i64: 1, 64>}, {pipeline_mode = #tpu.pipeline_mode<synchronous>, transform_indices = @transform_3, window_bounds = array<i64: 64, 128>}, {pipeline_mode = #tpu.pipeline_mode<synchronous>, transform_indices = @transform_4, window_bounds = array<i64: 128, 128>}, {pipeline_mode = #tpu.pipeline_mode<synchronous>, transform_indices = @transform_5, window_bounds = array<i64: 1, 128>}, {transform_indices = @transform_6, window_bounds = array<i64: 2, 128>}]} {
    %c0 = arith.constant 0 : index
    %c0_0 = arith.constant 0 : index
    %0 = vector.load %arg1[%c0, %c0_0] : memref<2x128xf32, #tpu.memory_space<vmem>>, vector<2x128xf32>
    %c0_1 = arith.constant 0 : index
    %c0_2 = arith.constant 0 : index
    %1 = vector.load %arg2[%c0_1, %c0_2] : memref<128x64xf32, #tpu.memory_space<vmem>>, vector<128x64xf32>
    %cst = arith.constant dense<0.000000e+00> : vector<2x64xf32>
    %2 = tpu.matmul %0, %1, %cst {dimension_numbers = #tpu.dot_dimension_numbers<[1], [0], [0], [1], [0, 0, 1, 1], [], []>, precision = #tpu.contract_precision<fp32>} : vector<2x128xf32>, vector<128x64xf32>, vector<2x64xf32> -> vector<2x64xf32>
    %c0_3 = arith.constant 0 : index
    %c0_4 = arith.constant 0 : index
    %3 = vector.load %arg3[%c0_3, %c0_4] : memref<1x64xf32, #tpu.memory_space<vmem>>, vector<1x64xf32>
    %4 = vector.broadcast %3 : vector<1x64xf32> to vector<2x64xf32>
    %5 = arith.addf %2, %4 : vector<2x64xf32>
    %cst_5 = arith.constant 0.000000e+00 : f32
    %6 = vector.broadcast %cst_5 : f32 to vector<2x64xf32>
    %7 = arith.maximumf %5, %6 : vector<2x64xf32>
    %c0_6 = arith.constant 0 : index
    %c0_7 = arith.constant 0 : index
    %8 = vector.load %arg5[%c0_6, %c0_7] : memref<128x128xf32, #tpu.memory_space<vmem>>, vector<128x128xf32>
    %cst_8 = arith.constant dense<0.000000e+00> : vector<2x128xf32>
    %9 = tpu.matmul %0, %8, %cst_8 {dimension_numbers = #tpu.dot_dimension_numbers<[1], [0], [0], [1], [0, 0, 1, 1], [], []>, precision = #tpu.contract_precision<fp32>} : vector<2x128xf32>, vector<128x128xf32>, vector<2x128xf32> -> vector<2x128xf32>
    %c0_9 = arith.constant 0 : index
    %c0_10 = arith.constant 0 : index
    %10 = vector.load %arg4[%c0_9, %c0_10] : memref<64x128xf32, #tpu.memory_space<vmem>>, vector<64x128xf32>
    %cst_11 = arith.constant dense<0.000000e+00> : vector<2x128xf32>
    %11 = tpu.matmul %7, %10, %cst_11 {dimension_numbers = #tpu.dot_dimension_numbers<[1], [0], [0], [1], [0, 0, 1, 1], [], []>, precision = #tpu.contract_precision<fp32>} : vector<2x64xf32>, vector<64x128xf32>, vector<2x128xf32> -> vector<2x128xf32>
    %12 = arith.addf %9, %11 : vector<2x128xf32>
    %c0_12 = arith.constant 0 : index
    %c0_13 = arith.constant 0 : index
    %13 = vector.load %arg6[%c0_12, %c0_13] : memref<1x128xf32, #tpu.memory_space<vmem>>, vector<1x128xf32>
    %14 = vector.broadcast %13 : vector<1x128xf32> to vector<2x128xf32>
    %15 = arith.addf %12, %14 : vector<2x128xf32>
    %c0_14 = arith.constant 0 : index
    %c0_15 = arith.constant 0 : index
    %16 = vector.load %arg7[%c0_14, %c0_15] : memref<2x128xf32, #tpu.memory_space<vmem>>, vector<2x128xf32>
    tpu.vector_store %arg7[%c0_14, %c0_15], %15 {strides = array<i32>} : memref<2x128xf32, #tpu.memory_space<vmem>>, vector<2x128xf32>,
    return
  }
  func.func @transform_0(%arg0: i32) -> (i32, i32) {
    %c0_i32 = arith.constant 0 : i32
    %c0_i32_0 = arith.constant 0 : i32
    return %arg0, %c0_i32 : i32, i32
  }
  func.func @transform_1(%arg0: i32) -> (i32, i32) {
    %c0_i32 = arith.constant 0 : i32
    %c0_i32_0 = arith.constant 0 : i32
    %c0_i32_1 = arith.constant 0 : i32
    return %c0_i32, %c0_i32_0 : i32, i32
  }
  func.func @transform_2(%arg0: i32) -> (i32, i32) {
    %c0_i32 = arith.constant 0 : i32
    %c0_i32_0 = arith.constant 0 : i32
    %c0_i32_1 = arith.constant 0 : i32
    return %c0_i32, %c0_i32_0 : i32, i32
  }
  func.func @transform_3(%arg0: i32) -> (i32, i32) {
    %c0_i32 = arith.constant 0 : i32
    %c0_i32_0 = arith.constant 0 : i32
    %c0_i32_1 = arith.constant 0 : i32
    return %c0_i32, %c0_i32_0 : i32, i32
  }
  func.func @transform_4(%arg0: i32) -> (i32, i32) {
    %c0_i32 = arith.constant 0 : i32
    %c0_i32_0 = arith.constant 0 : i32
    %c0_i32_1 = arith.constant 0 : i32
    return %c0_i32, %c0_i32_0 : i32, i32
  }
  func.func @transform_5(%arg0: i32) -> (i32, i32) {
    %c0_i32 = arith.constant 0 : i32
    %c0_i32_0 = arith.constant 0 : i32
    %c0_i32_1 = arith.constant 0 : i32
    return %c0_i32, %c0_i32_0 : i32, i32
  }
  func.func @transform_6(%arg0: i32) -> (i32, i32) {
    %c0_i32 = arith.constant 0 : i32
    %c0_i32_0 = arith.constant 0 : i32
    return %arg0, %c0_i32 : i32, i32
  }
}

module attributes {stable_mosaic.version = 11 : i64} {
  func.func @_dense_kernel(%arg0: i32, %arg1: memref<2x128xf32, #tpu.memory_space<vmem>>, %arg2: memref<128x64xf32, #tpu.memory_space<vmem>>, %arg3: memref<1x64xf32, #tpu.memory_space<vmem>>, %arg4: memref<64x128xf32, #tpu.memory_space<vmem>>, %arg5: memref<128x128xf32, #tpu.memory_space<vmem>>, %arg6: memref<1x128xf32, #tpu.memory_space<vmem>>, %arg7: memref<2x128xf32, #tpu.memory_space<vmem>>) attributes {dimension_semantics = [#tpu.dimension_semantics<parallel>], iteration_bounds = array<i64: 1>, scalar_prefetch = 0 : i64, scratch_operands = 0 : i64, tpu.core_type = #tpu.core_type<tc>, window_params = [{transform_indices = @transform_0, window_bounds = array<i64: 2, 128>}, {pipeline_mode = #tpu.pipeline_mode<synchronous>, transform_indices = @transform_1, window_bounds = array<i64: 128, 64>}, {pipeline_mode = #tpu.pipeline_mode<synchronous>, transform_indices = @transform_2, window_bounds = array<i64: 1, 64>}, {pipeline_mode = #tpu.pipeline_mode<synchronous>, transform_indices = @transform_3, window_bounds = array<i64: 64, 128>}, {pipeline_mode = #tpu.pipeline_mode<synchronous>, transform_indices = @transform_4, window_bounds = array<i64: 128, 128>}, {pipeline_mode = #tpu.pipeline_mode<synchronous>, transform_indices = @transform_5, window_bounds = array<i64: 1, 128>}, {transform_indices = @transform_6, window_bounds = array<i64: 2, 128>}]} {
    %c0 = arith.constant 0 : index
    %c0_0 = arith.constant 0 : index
    %0 = vector.load %arg1[%c0, %c0_0] : memref<2x128xf32, #tpu.memory_space<vmem>>, vector<2x128xf32>
    %c0_1 = arith.constant 0 : index
    %c0_2 = arith.constant 0 : index
    %1 = vector.load %arg2[%c0_1, %c0_2] : memref<128x64xf32, #tpu.memory_space<vmem>>, vector<128x64xf32>
    %cst = arith.constant dense<0.000000e+00> : vector<2x64xf32>
    %2 = tpu.matmul %0, %1, %cst {dimension_numbers = #tpu.dot_dimension_numbers<[1], [0], [0], [1], [0, 0, 1, 1], [], []>, precision = #tpu.contract_precision<fp32>} : vector<2x128xf32>, vector<128x64xf32>, vector<2x64xf32> -> vector<2x64xf32>
    %c0_3 = arith.constant 0 : index
    %c0_4 = arith.constant 0 : index
    %3 = vector.load %arg3[%c0_3, %c0_4] : memref<1x64xf32, #tpu.memory_space<vmem>>, vector<1x64xf32>
    %4 = vector.broadcast %3 : vector<1x64xf32> to vector<2x64xf32>
    %5 = arith.addf %2, %4 : vector<2x64xf32>
    %cst_5 = arith.constant 0.000000e+00 : f32
    %6 = vector.broadcast %cst_5 : f32 to vector<2x64xf32>
    %7 = arith.maximumf %5, %6 : vector<2x64xf32>
    %c0_6 = arith.constant 0 : index
    %c0_7 = arith.constant 0 : index
    %8 = vector.load %arg5[%c0_6, %c0_7] : memref<128x128xf32, #tpu.memory_space<vmem>>, vector<128x128xf32>
    %cst_8 = arith.constant dense<0.000000e+00> : vector<2x128xf32>
    %9 = tpu.matmul %0, %8, %cst_8 {dimension_numbers = #tpu.dot_dimension_numbers<[1], [0], [0], [1], [0, 0, 1, 1], [], []>, precision = #tpu.contract_precision<fp32>} : vector<2x128xf32>, vector<128x128xf32>, vector<2x128xf32> -> vector<2x128xf32>
    %c0_9 = arith.constant 0 : index
    %c0_10 = arith.constant 0 : index
    %10 = vector.load %arg4[%c0_9, %c0_10] : memref<64x128xf32, #tpu.memory_space<vmem>>, vector<64x128xf32>
    %cst_11 = arith.constant dense<0.000000e+00> : vector<2x128xf32>
    %11 = tpu.matmul %7, %10, %cst_11 {dimension_numbers = #tpu.dot_dimension_numbers<[1], [0], [0], [1], [0, 0, 1, 1], [], []>, precision = #tpu.contract_precision<fp32>} : vector<2x64xf32>, vector<64x128xf32>, vector<2x128xf32> -> vector<2x128xf32>
    %12 = arith.addf %9, %11 : vector<2x128xf32>
    %c0_12 = arith.constant 0 : index
    %c0_13 = arith.constant 0 : index
    %13 = vector.load %arg6[%c0_12, %c0_13] : memref<1x128xf32, #tpu.memory_space<vmem>>, vector<1x128xf32>
    %14 = vector.broadcast %13 : vector<1x128xf32> to vector<2x128xf32>
    %15 = arith.addf %12, %14 : vector<2x128xf32>
    %c0_14 = arith.constant 0 : index
    %c0_15 = arith.constant 0 : index
    %16 = vector.load %arg7[%c0_14, %c0_15] : memref<2x128xf32, #tpu.memory_space<vmem>>, vector<2x128xf32>
    tpu.vector_store %arg7[%c0_14, %c0_15], %15 {strides = array<i32>} : memref<2x128xf32, #tpu.memory_space<vmem>>, vector<2x128xf32>,
    return
  }
  func.func @transform_0(%arg0: i32) -> (i32, i32) {
    %c0_i32 = arith.constant 0 : i32
    %c0_i32_0 = arith.constant 0 : i32
    return %arg0, %c0_i32 : i32, i32
  }
  func.func @transform_1(%arg0: i32) -> (i32, i32) {
    %c0_i32 = arith.constant 0 : i32
    %c0_i32_0 = arith.constant 0 : i32
    %c0_i32_1 = arith.constant 0 : i32
    return %c0_i32, %c0_i32_0 : i32, i32
  }
  func.func @transform_2(%arg0: i32) -> (i32, i32) {
    %c0_i32 = arith.constant 0 : i32
    %c0_i32_0 = arith.constant 0 : i32
    %c0_i32_1 = arith.constant 0 : i32
    return %c0_i32, %c0_i32_0 : i32, i32
  }
  func.func @transform_3(%arg0: i32) -> (i32, i32) {
    %c0_i32 = arith.constant 0 : i32
    %c0_i32_0 = arith.constant 0 : i32
    %c0_i32_1 = arith.constant 0 : i32
    return %c0_i32, %c0_i32_0 : i32, i32
  }
  func.func @transform_4(%arg0: i32) -> (i32, i32) {
    %c0_i32 = arith.constant 0 : i32
    %c0_i32_0 = arith.constant 0 : i32
    %c0_i32_1 = arith.constant 0 : i32
    return %c0_i32, %c0_i32_0 : i32, i32
  }
  func.func @transform_5(%arg0: i32) -> (i32, i32) {
    %c0_i32 = arith.constant 0 : i32
    %c0_i32_0 = arith.constant 0 : i32
    %c0_i32_1 = arith.constant 0 : i32
    return %c0_i32, %c0_i32_0 : i32, i32
  }
  func.func @transform_6(%arg0: i32) -> (i32, i32) {
    %c0_i32 = arith.constant 0 : i32
    %c0_i32_0 = arith.constant 0 : i32
    return %arg0, %c0_i32 : i32, i32
  }
}

</mosaic_0001>

<llo_original>
// kernel: tpu_custom_call.1
$region0: #{tpu_custom_call.1}
  #allocation0 [shape = 'u32[]', space=smem, size = 0x4, offset = 0x4, fixed_abs, tag = 'smem constant byte address 0x4 - core index']
  #allocation1 [shape = 'u32[144,128]{1,0:T(1,128)}', space=vmem, size = 0x12000, scoped, tag = 'internal scratch']
  %s0 = inlined_call_operand.vmem [shape: f32[2,128], index: 0, kind: input, shape index: {}]
  %s1 = inlined_call_operand.vmem [shape: f32[128,64], index: 1, kind: input, shape index: {}]
  %s2 = inlined_call_operand.vmem [shape: f32[1,64], index: 2, kind: input, shape index: {}]
  %s3 = inlined_call_operand.vmem [shape: f32[64,128], index: 3, kind: input, shape index: {}]
  %s4 = inlined_call_operand.vmem [shape: f32[128,128], index: 4, kind: input, shape index: {}]
  %s5 = inlined_call_operand.vmem [shape: f32[1,128], index: 5, kind: input, shape index: {}]
  %s6 = inlined_call_operand.hbm [shape: f32[2,128], index: 6, kind: output, shape index: {}]
  %s7 = sld [smem:[#allocation0]]
  $region34: #{tpu_custom_call.1} parent=0
    _
  %s9 = ssub.s32 1, %s7
  %s10 = scalar_select 0, %s9, %s7
  $region1: #{tpu_custom_call.1} parent=0
    #allocation2 [shape = 'u8[1024]{0}', space=vmem, size = 0x400, scoped, tag = 'output window, operand 0, single buffered']
    #allocation3 [shape = 's32[1]{0}', space=sflag, size = 0x4, scoped, tag = 'scoped memory for tpu_custom_call.1']
    %11 = vsyncpa [#allocation3], 0
    // Predicated region
    $region2: #{tpu_custom_call.1} parent=1 // pred_check
      _
    $region3: #{tpu_custom_call.1} parent=1 // pred_check_branch
      %13 = sbr.rel (0) target = $region5
    $region4: #{tpu_custom_call.1} parent=1 // pred_region
      _
    $region5: #{tpu_custom_call.1} parent=1 // pred_fallthru
      _
    // Predicated region
    $region6: #{tpu_custom_call.1} parent=1 // pred_check
      _
    $region7: #{tpu_custom_call.1} parent=1 // pred_check_branch
      %15 = sbr.rel (0) target = $region9
    $region8: #{tpu_custom_call.1} parent=1 // pred_region
      _
    $region9: #{tpu_custom_call.1} parent=1 // pred_fallthru
      _
    // Predicated region
    $region10: #{tpu_custom_call.1} parent=1 // pred_check
      _
    $region11: #{tpu_custom_call.1} parent=1 // pred_check_branch
      %17 = sbr.rel (0) target = $region13
    $region12: #{tpu_custom_call.1} parent=1 // pred_region
      _
    $region13: #{tpu_custom_call.1} parent=1 // pred_fallthru
      _
    // Predicated region
    $region14: #{tpu_custom_call.1} parent=1 // pred_check
      _
    $region15: #{tpu_custom_call.1} parent=1 // pred_check_branch
      %19 = sbr.rel (0) target = $region17
    $region16: #{tpu_custom_call.1} parent=1 // pred_region
      _
    $region17: #{tpu_custom_call.1} parent=1 // pred_fallthru
      _
    // Predicated region
    $region18: #{tpu_custom_call.1} parent=1 // pred_check
      _
    $region19: #{tpu_custom_call.1} parent=1 // pred_check_branch
      %21 = sbr.rel (0) target = $region21
    $region20: #{tpu_custom_call.1} parent=1 // pred_region
      _
    $region21: #{tpu_custom_call.1} parent=1 // pred_fallthru
      _
    // Predicated region
    $region22: #{tpu_custom_call.1} parent=1 // pred_check
      _
    $region23: #{tpu_custom_call.1} parent=1 // pred_check_branch
      %23 = sbr.rel (0) target = $region25
    $region24: #{tpu_custom_call.1} parent=1 // pred_region
      _
    $region25: #{tpu_custom_call.1} parent=1 // pred_fallthru
      _
    %v24 = vld [vmem:[%s0] sm:$0x3]
    %v25 = vld [vmem:[%s1] sm:$0xff]
    %v26 = vld [vmem:[%s1 + $0x8] sm:$0xff]
    %v27 = vld [vmem:[%s1 + $0x10] sm:$0xff]
    %v28 = vld [vmem:[%s1 + $0x18] sm:$0xff]
    %v29 = vld [vmem:[%s1 + $0x20] sm:$0xff]
    %v30 = vld [vmem:[%s1 + $0x28] sm:$0xff]
    %v31 = vld [vmem:[%s1 + $0x30] sm:$0xff]
    %v32 = vld [vmem:[%s1 + $0x38] sm:$0xff]
    %v33 = vld [vmem:[%s1 + $0x40] sm:$0xff]
    %v34 = vld [vmem:[%s1 + $0x48] sm:$0xff]
    %v35 = vld [vmem:[%s1 + $0x50] sm:$0xff]
    %v36 = vld [vmem:[%s1 + $0x58] sm:$0xff]
    %v37 = vld [vmem:[%s1 + $0x60] sm:$0xff]
    %v38 = vld [vmem:[%s1 + $0x68] sm:$0xff]
    %v39 = vld [vmem:[%s1 + $0x70] sm:$0xff]
    %v40 = vld [vmem:[%s1 + $0x78] sm:$0xff]
    %v41 = vld [vmem:[%s2] sm:$0x1]
    %v43 = vlaneseq
    %v44 = vshrl.u32 %v43, 7
    %v45 = vsub.s32 0, %v44
    %v46 = vrot.slane %v41, %v45
    %48 = vmatprep.subr.mxu0 0.0
    %v49 = vand.u32 %v40, 4294901760
    %50 = vmatpush1.msra.mxu0 %v49
    %51 = vmatprep.subr.mxu0 0.0
    %v52 = vand.u32 %v39, 4294901760
    %53 = vmatpush1.msra.mxu0 %v52
    %54 = vmatprep.subr.mxu0 0.0
    %v55 = vand.u32 %v38, 4294901760
    %56 = vmatpush1.msra.mxu0 %v55
    %57 = vmatprep.subr.mxu0 0.0
    %v58 = vand.u32 %v37, 4294901760
    %59 = vmatpush1.msra.mxu0 %v58
    %60 = vmatprep.subr.mxu0 0.0
    %v61 = vand.u32 %v36, 4294901760
    %62 = vmatpush1.msra.mxu0 %v61
    %63 = vmatprep.subr.mxu0 0.0
    %v64 = vand.u32 %v35, 4294901760
    %65 = vmatpush1.msra.mxu0 %v64
    %66 = vmatprep.subr.mxu0 0.0
    %v67 = vand.u32 %v34, 4294901760
    %68 = vmatpush1.msra.mxu0 %v67
    %69 = vmatprep.subr.mxu0 0.0
    %v70 = vand.u32 %v33, 4294901760
    %71 = vmatpush1.msra.mxu0 %v70
    %72 = vmatprep.subr.mxu0 0.0
    %v73 = vand.u32 %v32, 4294901760
    %74 = vmatpush1.msra.mxu0 %v73
    %75 = vmatprep.subr.mxu0 0.0
    %v76 = vand.u32 %v31, 4294901760
    %77 = vmatpush1.msra.mxu0 %v76
    %78 = vmatprep.subr.mxu0 0.0
    %v79 = vand.u32 %v30, 4294901760
    %80 = vmatpush1.msra.mxu0 %v79
    %81 = vmatprep.subr.mxu0 0.0
    %v82 = vand.u32 %v29, 4294901760
    %83 = vmatpush1.msra.mxu0 %v82
    %84 = vmatprep.subr.mxu0 0.0
    %v85 = vand.u32 %v28, 4294901760
    %86 = vmatpush1.msra.mxu0 %v85
    %87 = vmatprep.subr.mxu0 0.0
    %v88 = vand.u32 %v27, 4294901760
    %89 = vmatpush1.msra.mxu0 %v88
    %90 = vmatprep.subr.mxu0 0.0
    %v91 = vand.u32 %v26, 4294901760
    %92 = vmatpush1.msra.mxu0 %v91
    %93 = vmatprep.subr.mxu0 0.0
    %v94 = vand.u32 %v25, 4294901760
    %95 = vmatpush1.msra.mxu0 %v94
    %96 = vmatprep.subr.mxu0 0.0
    %97 = vmatpush2.msra.mxu0 0.0
    %98 = vmatprep.subr.mxu0 0.0
    %99 = vmatpush2.msra.mxu0 0.0
    %100 = vmatprep.subr.mxu0 0.0
    %101 = vmatpush2.msra.mxu0 0.0
    %102 = vmatprep.subr.mxu0 0.0
    %103 = vmatpush2.msra.mxu0 0.0
    %104 = vmatprep.subr.mxu0 0.0
    %105 = vmatpush2.msra.mxu0 0.0
    %106 = vmatprep.subr.mxu0 0.0
    %107 = vmatpush2.msra.mxu0 0.0
    %108 = vmatprep.subr.mxu0 0.0
    %109 = vmatpush2.msra.mxu0 0.0
    %110 = vmatprep.subr.mxu0 0.0
    %111 = vmatpush2.msra.mxu0 0.0
    %112 = vmatprep.subr.mxu0 0.0
    %113 = vmatpush2.msra.mxu0 0.0
    %114 = vmatprep.subr.mxu0 0.0
    %115 = vmatpush2.msra.mxu0 0.0
    %116 = vmatprep.subr.mxu0 0.0
    %117 = vmatpush2.msra.mxu0 0.0
    %118 = vmatprep.subr.mxu0 0.0
    %119 = vmatpush2.msra.mxu0 0.0
    %120 = vmatprep.subr.mxu0 0.0
    %121 = vmatpush2.msra.mxu0 0.0
    %122 = vmatprep.subr.mxu0 0.0
    %123 = vmatpush2.msra.mxu0 0.0
    %124 = vmatprep.subr.mxu0 0.0
    %125 = vmatpush2.msra.mxu0 0.0
    %126 = vmatprep.subr.mxu0 0.0
    %127 = vmatpush2.msra.mxu0 0.0
    %128 = vmatprep.mubr.f32.mxu0 0.0
    %v129 = vand.u32 %v24, 4294901760
    %v130 = vsub.f32 %v24, %v129
    %v131 = vand.u32 %v130, 4294901760
    %v132 = vsub.f32 %v130, %v131
    %v133 = vand.u32 %v132, 4294901760
    %134 = vmatmul.mubr.f32.gmra.mxu0 %v133
    %v135 = vpop.f32.mrf.mxu0
    %v136 = vadd.f32 %v46, %v135
    %v137 = vpop.f32.mrf.mxu0
    %138 = vdwg.mxu0
    %139 = vmatprep.subr.mxu0 0.0
    %v140 = vand.u32 %v40, 4294901760
    %v141 = vsub.f32 %v40, %v140
    %v142 = vand.u32 %v141, 4294901760
    %v143 = vsub.f32 %v141, %v142
    %v144 = vand.u32 %v143, 4294901760
    %145 = vmatpush1.msra.mxu0 %v144
    %146 = vmatprep.subr.mxu0 0.0
    %v147 = vand.u32 %v39, 4294901760
    %v148 = vsub.f32 %v39, %v147
    %v149 = vand.u32 %v148, 4294901760
    %v150 = vsub.f32 %v148, %v149
    %v151 = vand.u32 %v150, 4294901760
    %152 = vmatpush1.msra.mxu0 %v151
    %153 = vmatprep.subr.mxu0 0.0
    %v154 = vand.u32 %v38, 4294901760
    %v155 = vsub.f32 %v38, %v154
    %v156 = vand.u32 %v155, 4294901760
    %v157 = vsub.f32 %v155, %v156
    %v158 = vand.u32 %v157, 4294901760
    %159 = vmatpush1.msra.mxu0 %v158
    %160 = vmatprep.subr.mxu0 0.0
    %v161 = vand.u32 %v37, 4294901760
    %v162 = vsub.f32 %v37, %v161
    %v163 = vand.u32 %v162, 4294901760
    %v164 = vsub.f32 %v162, %v163
    %v165 = vand.u32 %v164, 4294901760
    %166 = vmatpush1.msra.mxu0 %v165
    %167 = vmatprep.subr.mxu0 0.0
    %v168 = vand.u32 %v36, 4294901760
    %v169 = vsub.f32 %v36, %v168
    %v170 = vand.u32 %v169, 4294901760
    %v171 = vsub.f32 %v169, %v170
    %v172 = vand.u32 %v171, 4294901760
    %173 = vmatpush1.msra.mxu0 %v172
    %174 = vmatprep.subr.mxu0 0.0
    %v175 = vand.u32 %v35, 4294901760
    %v176 = vsub.f32 %v35, %v175
    %v177 = vand.u32 %v176, 4294901760
    %v178 = vsub.f32 %v176, %v177
    %v179 = vand.u32 %v178, 4294901760
    %180 = vmatpush1.msra.mxu0 %v179
    %181 = vmatprep.subr.mxu0 0.0
    %v182 = vand.u32 %v34, 4294901760
    %v183 = vsub.f32 %v34, %v182
    %v184 = vand.u32 %v183, 4294901760
    %v185 = vsub.f32 %v183, %v184
    %v186 = vand.u32 %v185, 4294901760
    %187 = vmatpush1.msra.mxu0 %v186
    %188 = vmatprep.subr.mxu0 0.0
    %v189 = vand.u32 %v33, 4294901760
    %v190 = vsub.f32 %v33, %v189
    %v191 = vand.u32 %v190, 4294901760
    %v192 = vsub.f32 %v190, %v191
    %v193 = vand.u32 %v192, 4294901760
    %194 = vmatpush1.msra.mxu0 %v193
    %195 = vmatprep.subr.mxu0 0.0
    %v196 = vand.u32 %v32, 4294901760
    %v197 = vsub.f32 %v32, %v196
    %v198 = vand.u32 %v197, 4294901760
    %v199 = vsub.f32 %v197, %v198
    %v200 = vand.u32 %v199, 4294901760
    %201 = vmatpush1.msra.mxu0 %v200
    %202 = vmatprep.subr.mxu0 0.0
    %v203 = vand.u32 %v31, 4294901760
    %v204 = vsub.f32 %v31, %v203
    %v205 = vand.u32 %v204, 4294901760
    %v206 = vsub.f32 %v204, %v205
    %v207 = vand.u32 %v206, 4294901760
    %208 = vmatpush1.msra.mxu0 %v207
    %209 = vmatprep.subr.mxu0 0.0
    %v210 = vand.u32 %v30, 4294901760
    %v211 = vsub.f32 %v30, %v210
    %v212 = vand.u32 %v211, 4294901760
    %v213 = vsub.f32 %v211, %v212
    %v214 = vand.u32 %v213, 4294901760
    %215 = vmatpush1.msra.mxu0 %v214
    %216 = vmatprep.subr.mxu0 0.0
    %v217 = vand.u32 %v29, 4294901760
    %v218 = vsub.f32 %v29, %v217
    %v219 = vand.u32 %v218, 4294901760
    %v220 = vsub.f32 %v218, %v219
    %v221 = vand.u32 %v220, 4294901760
    %222 = vmatpush1.msra.mxu0 %v221
    %223 = vmatprep.subr.mxu0 0.0
    %v224 = vand.u32 %v28, 4294901760
    %v225 = vsub.f32 %v28, %v224
    %v226 = vand.u32 %v225, 4294901760
    %v227 = vsub.f32 %v225, %v226
    %v228 = vand.u32 %v227, 4294901760
    %229 = vmatpush1.msra.mxu0 %v228
    %230 = vmatprep.subr.mxu0 0.0
    %v231 = vand.u32 %v27, 4294901760
    %v232 = vsub.f32 %v27, %v231
    %v233 = vand.u32 %v232, 4294901760
    %v234 = vsub.f32 %v232, %v233
    %v235 = vand.u32 %v234, 4294901760
    %236 = vmatpush1.msra.mxu0 %v235
    %237 = vmatprep.subr.mxu0 0.0
    %v238 = vand.u32 %v26, 4294901760
    %v239 = vsub.f32 %v26, %v238
    %v240 = vand.u32 %v239, 4294901760
    %v241 = vsub.f32 %v239, %v240
    %v242 = vand.u32 %v241, 4294901760
    %243 = vmatpush1.msra.mxu0 %v242
    %244 = vmatprep.subr.mxu0 0.0
    %v245 = vand.u32 %v25, 4294901760
    %v246 = vsub.f32 %v25, %v245
    %v247 = vand.u32 %v246, 4294901760
    %v248 = vsub.f32 %v246, %v247
    %v249 = vand.u32 %v248, 4294901760
    %250 = vmatpush1.msra.mxu0 %v249
    %251 = vmatprep.subr.mxu0 0.0
    %252 = vmatpush2.msra.mxu0 0.0
    %253 = vmatprep.subr.mxu0 0.0
    %254 = vmatpush2.msra.mxu0 0.0
    %255 = vmatprep.subr.mxu0 0.0
    %256 = vmatpush2.msra.mxu0 0.0
    %257 = vmatprep.subr.mxu0 0.0
    %258 = vmatpush2.msra.mxu0 0.0
    %259 = vmatprep.subr.mxu0 0.0
    %260 = vmatpush2.msra.mxu0 0.0
    %261 = vmatprep.subr.mxu0 0.0
    %262 = vmatpush2.msra.mxu0 0.0
    %263 = vmatprep.subr.mxu0 0.0
    %264 = vmatpush2.msra.mxu0 0.0
    %265 = vmatprep.subr.mxu0 0.0
    %266 = vmatpush2.msra.mxu0 0.0
    %267 = vmatprep.subr.mxu0 0.0
    %268 = vmatpush2.msra.mxu0 0.0
    %269 = vmatprep.subr.mxu0 0.0
    %270 = vmatpush2.msra.mxu0 0.0
    %271 = vmatprep.subr.mxu0 0.0
    %272 = vmatpush2.msra.mxu0 0.0
    %273 = vmatprep.subr.mxu0 0.0
    %274 = vmatpush2.msra.mxu0 0.0
    %275 = vmatprep.subr.mxu0 0.0
    %276 = vmatpush2.msra.mxu0 0.0
    %277 = vmatprep.subr.mxu0 0.0
    %278 = vmatpush2.msra.mxu0 0.0
    %279 = vmatprep.subr.mxu0 0.0
    %280 = vmatpush2.msra.mxu0 0.0
    %281 = vmatprep.subr.mxu0 0.0
    %282 = vmatpush2.msra.mxu0 0.0
    %283 = vmatprep.mubr.f32.mxu0 0.0
    %v284 = vand.u32 %v24, 4294901760
    %285 = vmatmul.mubr.f32.gmra.mxu0 %v284
    %v286 = vpop.f32.mrf.mxu0
    %v287 = vadd.f32 %v136, %v286
    %v288 = vpop.f32.mrf.mxu0
    %289 = vdwg.mxu0
    %290 = vmatprep.subr.mxu0 0.0
    %v291 = vand.u32 %v40, 4294901760
    %v292 = vsub.f32 %v40, %v291
    %293 = vmatpush1.msra.mxu0 %v292
    %294 = vmatprep.subr.mxu0 0.0
    %v295 = vand.u32 %v39, 4294901760
    %v296 = vsub.f32 %v39, %v295
    %297 = vmatpush1.msra.mxu0 %v296
    %298 = vmatprep.subr.mxu0 0.0
    %v299 = vand.u32 %v38, 4294901760
    %v300 = vsub.f32 %v38, %v299
    %301 = vmatpush1.msra.mxu0 %v300
    %302 = vmatprep.subr.mxu0 0.0
    %v303 = vand.u32 %v37, 4294901760
    %v304 = vsub.f32 %v37, %v303
    %305 = vmatpush1.msra.mxu0 %v304
    %306 = vmatprep.subr.mxu0 0.0
    %v307 = vand.u32 %v36, 4294901760
    %v308 = vsub.f32 %v36, %v307
    %309 = vmatpush1.msra.mxu0 %v308
    %310 = vmatprep.subr.mxu0 0.0
    %v311 = vand.u32 %v35, 4294901760
    %v312 = vsub.f32 %v35, %v311
    %313 = vmatpush1.msra.mxu0 %v312
    %314 = vmatprep.subr.mxu0 0.0
    %v315 = vand.u32 %v34, 4294901760
    %v316 = vsub.f32 %v34, %v315
    %317 = vmatpush1.msra.mxu0 %v316
    %318 = vmatprep.subr.mxu0 0.0
    %v319 = vand.u32 %v33, 4294901760
    %v320 = vsub.f32 %v33, %v319
    %321 = vmatpush1.msra.mxu0 %v320
    %322 = vmatprep.subr.mxu0 0.0
    %v323 = vand.u32 %v32, 4294901760
    %v324 = vsub.f32 %v32, %v323
    %325 = vmatpush1.msra.mxu0 %v324
    %326 = vmatprep.subr.mxu0 0.0
    %v327 = vand.u32 %v31, 4294901760
    %v328 = vsub.f32 %v31, %v327
    %329 = vmatpush1.msra.mxu0 %v328
    %330 = vmatprep.subr.mxu0 0.0
    %v331 = vand.u32 %v30, 4294901760
    %v332 = vsub.f32 %v30, %v331
    %333 = vmatpush1.msra.mxu0 %v332
    %334 = vmatprep.subr.mxu0 0.0
    %v335 = vand.u32 %v29, 4294901760
    %v336 = vsub.f32 %v29, %v335
    %337 = vmatpush1.msra.mxu0 %v336
    %338 = vmatprep.subr.mxu0 0.0
    %v339 = vand.u32 %v28, 4294901760
    %v340 = vsub.f32 %v28, %v339
    %341 = vmatpush1.msra.mxu0 %v340
    %342 = vmatprep.subr.mxu0 0.0
    %v343 = vand.u32 %v27, 4294901760
    %v344 = vsub.f32 %v27, %v343
    %345 = vmatpush1.msra.mxu0 %v344
    %346 = vmatprep.subr.mxu0 0.0
    %v347 = vand.u32 %v26, 4294901760
    %v348 = vsub.f32 %v26, %v347
    %349 = vmatpush1.msra.mxu0 %v348
    %350 = vmatprep.subr.mxu0 0.0
    %v351 = vand.u32 %v25, 4294901760
    %v352 = vsub.f32 %v25, %v351
    %353 = vmatpush1.msra.mxu0 %v352
    %354 = vmatprep.subr.mxu0 0.0
    %355 = vmatpush2.msra.mxu0 0.0
    %356 = vmatprep.subr.mxu0 0.0
    %357 = vmatpush2.msra.mxu0 0.0
    %358 = vmatprep.subr.mxu0 0.0
    %359 = vmatpush2.msra.mxu0 0.0
    %360 = vmatprep.subr.mxu0 0.0
    %361 = vmatpush2.msra.mxu0 0.0
    %362 = vmatprep.subr.mxu0 0.0
    %363 = vmatpush2.msra.mxu0 0.0
    %364 = vmatprep.subr.mxu0 0.0
    %365 = vmatpush2.msra.mxu0 0.0
    %366 = vmatprep.subr.mxu0 0.0
    %367 = vmatpush2.msra.mxu0 0.0
    %368 = vmatprep.subr.mxu0 0.0
    %369 = vmatpush2.msra.mxu0 0.0
    %370 = vmatprep.subr.mxu0 0.0
    %371 = vmatpush2.msra.mxu0 0.0
    %372 = vmatprep.subr.mxu0 0.0
    %373 = vmatpush2.msra.mxu0 0.0
    %374 = vmatprep.subr.mxu0 0.0
    %375 = vmatpush2.msra.mxu0 0.0
    %376 = vmatprep.subr.mxu0 0.0
    %377 = vmatpush2.msra.mxu0 0.0
    %378 = vmatprep.subr.mxu0 0.0
    %379 = vmatpush2.msra.mxu0 0.0
    %380 = vmatprep.subr.mxu0 0.0
    %381 = vmatpush2.msra.mxu0 0.0
    %382 = vmatprep.subr.mxu0 0.0
    %383 = vmatpush2.msra.mxu0 0.0
    %384 = vmatprep.subr.mxu0 0.0
    %385 = vmatpush2.msra.mxu0 0.0
    %386 = vmatprep.mubr.f32.mxu0 0.0
    %v387 = vand.u32 %v24, 4294901760
    %v388 = vsub.f32 %v24, %v387
    %389 = vmatmul.mubr.f32.gmra.mxu0 %v388
    %v390 = vpop.f32.mrf.mxu0
    %v391 = vadd.f32 %v287, %v390
    %v392 = vpop.f32.mrf.mxu0
    %393 = vdwg.mxu0
    %394 = vmatprep.subr.mxu0 0.0
    %v395 = vand.u32 %v40, 4294901760
    %396 = vmatpush1.msra.mxu0 %v395
    %397 = vmatprep.subr.mxu0 0.0
    %v398 = vand.u32 %v39, 4294901760
    %399 = vmatpush1.msra.mxu0 %v398
    %400 = vmatprep.subr.mxu0 0.0
    %v401 = vand.u32 %v38, 4294901760
    %402 = vmatpush1.msra.mxu0 %v401
    %403 = vmatprep.subr.mxu0 0.0
    %v404 = vand.u32 %v37, 4294901760
    %405 = vmatpush1.msra.mxu0 %v404
    %406 = vmatprep.subr.mxu0 0.0
    %v407 = vand.u32 %v36, 4294901760
    %408 = vmatpush1.msra.mxu0 %v407
    %409 = vmatprep.subr.mxu0 0.0
    %v410 = vand.u32 %v35, 4294901760
    %411 = vmatpush1.msra.mxu0 %v410
    %412 = vmatprep.subr.mxu0 0.0
    %v413 = vand.u32 %v34, 4294901760
    %414 = vmatpush1.msra.mxu0 %v413
    %415 = vmatprep.subr.mxu0 0.0
    %v416 = vand.u32 %v33, 4294901760
    %417 = vmatpush1.msra.mxu0 %v416
    %418 = vmatprep.subr.mxu0 0.0
    %v419 = vand.u32 %v32, 4294901760
    %420 = vmatpush1.msra.mxu0 %v419
    %421 = vmatprep.subr.mxu0 0.0
    %v422 = vand.u32 %v31, 4294901760
    %423 = vmatpush1.msra.mxu0 %v422
    %424 = vmatprep.subr.mxu0 0.0
    %v425 = vand.u32 %v30, 4294901760
    %426 = vmatpush1.msra.mxu0 %v425
    %427 = vmatprep.subr.mxu0 0.0
    %v428 = vand.u32 %v29, 4294901760
    %429 = vmatpush1.msra.mxu0 %v428
    %430 = vmatprep.subr.mxu0 0.0
    %v431 = vand.u32 %v28, 4294901760
    %432 = vmatpush1.msra.mxu0 %v431
    %433 = vmatprep.subr.mxu0 0.0
    %v434 = vand.u32 %v27, 4294901760
    %435 = vmatpush1.msra.mxu0 %v434
    %436 = vmatprep.subr.mxu0 0.0
    %v437 = vand.u32 %v26, 4294901760
    %438 = vmatpush1.msra.mxu0 %v437
    %439 = vmatprep.subr.mxu0 0.0
    %v440 = vand.u32 %v25, 4294901760
    %441 = vmatpush1.msra.mxu0 %v440
    %442 = vmatprep.subr.mxu0 0.0
    %443 = vmatpush2.msra.mxu0 0.0
    %444 = vmatprep.subr.mxu0 0.0
    %445 = vmatpush2.msra.mxu0 0.0
    %446 = vmatprep.subr.mxu0 0.0
    %447 = vmatpush2.msra.mxu0 0.0
    %448 = vmatprep.subr.mxu0 0.0
    %449 = vmatpush2.msra.mxu0 0.0
    %450 = vmatprep.subr.mxu0 0.0
    %451 = vmatpush2.msra.mxu0 0.0
    %452 = vmatprep.subr.mxu0 0.0
    %453 = vmatpush2.msra.mxu0 0.0
    %454 = vmatprep.subr.mxu0 0.0
    %455 = vmatpush2.msra.mxu0 0.0
    %456 = vmatprep.subr.mxu0 0.0
    %457 = vmatpush2.msra.mxu0 0.0
    %458 = vmatprep.subr.mxu0 0.0
    %459 = vmatpush2.msra.mxu0 0.0
    %460 = vmatprep.subr.mxu0 0.0
    %461 = vmatpush2.msra.mxu0 0.0
    %462 = vmatprep.subr.mxu0 0.0
    %463 = vmatpush2.msra.mxu0 0.0
    %464 = vmatprep.subr.mxu0 0.0
    %465 = vmatpush2.msra.mxu0 0.0
    %466 = vmatprep.subr.mxu0 0.0
    %467 = vmatpush2.msra.mxu0 0.0
    %468 = vmatprep.subr.mxu0 0.0
    %469 = vmatpush2.msra.mxu0 0.0
    %470 = vmatprep.subr.mxu0 0.0
    %471 = vmatpush2.msra.mxu0 0.0
    %472 = vmatprep.subr.mxu0 0.0
    %473 = vmatpush2.msra.mxu0 0.0
    %474 = vmatprep.mubr.f32.mxu0 0.0
    %v475 = vand.u32 %v24, 4294901760
    %v476 = vsub.f32 %v24, %v475
    %v477 = vand.u32 %v476, 4294901760
    %478 = vmatmul.mubr.f32.gmra.mxu0 %v477
    %v479 = vpop.f32.mrf.mxu0
    %v480 = vadd.f32 %v391, %v479
    %v481 = vpop.f32.mrf.mxu0
    %482 = vdwg.mxu0
    %483 = vmatprep.subr.mxu0 0.0
    %v484 = vand.u32 %v40, 4294901760
    %v485 = vsub.f32 %v40, %v484
    %v486 = vand.u32 %v485, 4294901760
    %487 = vmatpush1.msra.mxu0 %v486
    %488 = vmatprep.subr.mxu0 0.0
    %v489 = vand.u32 %v39, 4294901760
    %v490 = vsub.f32 %v39, %v489
    %v491 = vand.u32 %v490, 4294901760
    %492 = vmatpush1.msra.mxu0 %v491
    %493 = vmatprep.subr.mxu0 0.0
    %v494 = vand.u32 %v38, 4294901760
    %v495 = vsub.f32 %v38, %v494
    %v496 = vand.u32 %v495, 4294901760
    %497 = vmatpush1.msra.mxu0 %v496
    %498 = vmatprep.subr.mxu0 0.0
    %v499 = vand.u32 %v37, 4294901760
    %v500 = vsub.f32 %v37, %v499
    %v501 = vand.u32 %v500, 4294901760
    %502 = vmatpush1.msra.mxu0 %v501
    %503 = vmatprep.subr.mxu0 0.0
    %v504 = vand.u32 %v36, 4294901760
    %v505 = vsub.f32 %v36, %v504
    %v506 = vand.u32 %v505, 4294901760
    %507 = vmatpush1.msra.mxu0 %v506
    %508 = vmatprep.subr.mxu0 0.0
    %v509 = vand.u32 %v35, 4294901760
    %v510 = vsub.f32 %v35, %v509
    %v511 = vand.u32 %v510, 4294901760
    %512 = vmatpush1.msra.mxu0 %v511
    %513 = vmatprep.subr.mxu0 0.0
    %v514 = vand.u32 %v34, 4294901760
    %v515 = vsub.f32 %v34, %v514
    %v516 = vand.u32 %v515, 4294901760
    %517 = vmatpush1.msra.mxu0 %v516
    %518 = vmatprep.subr.mxu0 0.0
    %v519 = vand.u32 %v33, 4294901760
    %v520 = vsub.f32 %v33, %v519
    %v521 = vand.u32 %v520, 4294901760
    %522 = vmatpush1.msra.mxu0 %v521
    %523 = vmatprep.subr.mxu0 0.0
    %v524 = vand.u32 %v32, 4294901760
    %v525 = vsub.f32 %v32, %v524
    %v526 = vand.u32 %v525, 4294901760
    %527 = vmatpush1.msra.mxu0 %v526
    %528 = vmatprep.subr.mxu0 0.0
    %v529 = vand.u32 %v31, 4294901760
    %v530 = vsub.f32 %v31, %v529
    %v531 = vand.u32 %v530, 4294901760
    %532 = vmatpush1.msra.mxu0 %v531
    %533 = vmatprep.subr.mxu0 0.0
    %v534 = vand.u32 %v30, 4294901760
    %v535 = vsub.f32 %v30, %v534
    %v536 = vand.u32 %v535, 4294901760
    %537 = vmatpush1.msra.mxu0 %v536
    %538 = vmatprep.subr.mxu0 0.0
    %v539 = vand.u32 %v29, 4294901760
    %v540 = vsub.f32 %v29, %v539
    %v541 = vand.u32 %v540, 4294901760
    %542 = vmatpush1.msra.mxu0 %v541
    %543 = vmatprep.subr.mxu0 0.0
    %v544 = vand.u32 %v28, 4294901760
    %v545 = vsub.f32 %v28, %v544
    %v546 = vand.u32 %v545, 4294901760
    %547 = vmatpush1.msra.mxu0 %v546
    %548 = vmatprep.subr.mxu0 0.0
    %v549 = vand.u32 %v27, 4294901760
    %v550 = vsub.f32 %v27, %v549
    %v551 = vand.u32 %v550, 4294901760
    %552 = vmatpush1.msra.mxu0 %v551
    %553 = vmatprep.subr.mxu0 0.0
    %v554 = vand.u32 %v26, 4294901760
    %v555 = vsub.f32 %v26, %v554
    %v556 = vand.u32 %v555, 4294901760
    %557 = vmatpush1.msra.mxu0 %v556
    %558 = vmatprep.subr.mxu0 0.0
    %v559 = vand.u32 %v25, 4294901760
    %v560 = vsub.f32 %v25, %v559
    %v561 = vand.u32 %v560, 4294901760
    %562 = vmatpush1.msra.mxu0 %v561
    %563 = vmatprep.subr.mxu0 0.0
    %564 = vmatpush2.msra.mxu0 0.0
    %565 = vmatprep.subr.mxu0 0.0
    %566 = vmatpush2.msra.mxu0 0.0
    %567 = vmatprep.subr.mxu0 0.0
    %568 = vmatpush2.msra.mxu0 0.0
    %569 = vmatprep.subr.mxu0 0.0
    %570 = vmatpush2.msra.mxu0 0.0
    %571 = vmatprep.subr.mxu0 0.0
    %572 = vmatpush2.msra.mxu0 0.0
    %573 = vmatprep.subr.mxu0 0.0
    %574 = vmatpush2.msra.mxu0 0.0
    %575 = vmatprep.subr.mxu0 0.0
    %576 = vmatpush2.msra.mxu0 0.0
    %577 = vmatprep.subr.mxu0 0.0
    %578 = vmatpush2.msra.mxu0 0.0
    %579 = vmatprep.subr.mxu0 0.0
    %580 = vmatpush2.msra.mxu0 0.0
    %581 = vmatprep.subr.mxu0 0.0
    %582 = vmatpush2.msra.mxu0 0.0
    %583 = vmatprep.subr.mxu0 0.0
    %584 = vmatpush2.msra.mxu0 0.0
    %585 = vmatprep.subr.mxu0 0.0
    %586 = vmatpush2.msra.mxu0 0.0
    %587 = vmatprep.subr.mxu0 0.0
    %588 = vmatpush2.msra.mxu0 0.0
    %589 = vmatprep.subr.mxu0 0.0
    %590 = vmatpush2.msra.mxu0 0.0
    %591 = vmatprep.subr.mxu0 0.0
    %592 = vmatpush2.msra.mxu0 0.0
    %593 = vmatprep.subr.mxu0 0.0
    %594 = vmatpush2.msra.mxu0 0.0
    %595 = vmatprep.mubr.f32.mxu0 0.0
    %v596 = vand.u32 %v24, 4294901760
    %597 = vmatmul.mubr.f32.gmra.mxu0 %v596
    %v598 = vpop.f32.mrf.mxu0
    %v599 = vadd.f32 %v480, %v598
    %v600 = vpop.f32.mrf.mxu0
    %601 = vdwg.mxu0
    %602 = vmatprep.subr.mxu0 0.0
    %v603 = vand.u32 %v40, 4294901760
    %604 = vmatpush1.msra.mxu0 %v603
    %605 = vmatprep.subr.mxu0 0.0
    %v606 = vand.u32 %v39, 4294901760
    %607 = vmatpush1.msra.mxu0 %v606
    %608 = vmatprep.subr.mxu0 0.0
    %v609 = vand.u32 %v38, 4294901760
    %610 = vmatpush1.msra.mxu0 %v609
    %611 = vmatprep.subr.mxu0 0.0
    %v612 = vand.u32 %v37, 4294901760
    %613 = vmatpush1.msra.mxu0 %v612
    %614 = vmatprep.subr.mxu0 0.0
    %v615 = vand.u32 %v36, 4294901760
    %616 = vmatpush1.msra.mxu0 %v615
    %617 = vmatprep.subr.mxu0 0.0
    %v618 = vand.u32 %v35, 4294901760
    %619 = vmatpush1.msra.mxu0 %v618
    %620 = vmatprep.subr.mxu0 0.0
    %v621 = vand.u32 %v34, 4294901760
    %622 = vmatpush1.msra.mxu0 %v621
    %623 = vmatprep.subr.mxu0 0.0
    %v624 = vand.u32 %v33, 4294901760
    %625 = vmatpush1.msra.mxu0 %v624
    %626 = vmatprep.subr.mxu0 0.0
    %v627 = vand.u32 %v32, 4294901760
    %628 = vmatpush1.msra.mxu0 %v627
    %629 = vmatprep.subr.mxu0 0.0
    %v630 = vand.u32 %v31, 4294901760
    %631 = vmatpush1.msra.mxu0 %v630
    %632 = vmatprep.subr.mxu0 0.0
    %v633 = vand.u32 %v30, 4294901760
    %634 = vmatpush1.msra.mxu0 %v633
    %635 = vmatprep.subr.mxu0 0.0
    %v636 = vand.u32 %v29, 4294901760
    %637 = vmatpush1.msra.mxu0 %v636
    %638 = vmatprep.subr.mxu0 0.0
    %v639 = vand.u32 %v28, 4294901760
    %640 = vmatpush1.msra.mxu0 %v639
    %641 = vmatprep.subr.mxu0 0.0
    %v642 = vand.u32 %v27, 4294901760
    %643 = vmatpush1.msra.mxu0 %v642
    %644 = vmatprep.subr.mxu0 0.0
    %v645 = vand.u32 %v26, 4294901760
    %646 = vmatpush1.msra.mxu0 %v645
    %647 = vmatprep.subr.mxu0 0.0
    %v648 = vand.u32 %v25, 4294901760
    %649 = vmatpush1.msra.mxu0 %v648
    %650 = vmatprep.subr.mxu0 0.0
    %651 = vmatpush2.msra.mxu0 0.0
    %652 = vmatprep.subr.mxu0 0.0
    %653 = vmatpush2.msra.mxu0 0.0
    %654 = vmatprep.subr.mxu0 0.0
    %655 = vmatpush2.msra.mxu0 0.0
    %656 = vmatprep.subr.mxu0 0.0
    %657 = vmatpush2.msra.mxu0 0.0
    %658 = vmatprep.subr.mxu0 0.0
    %659 = vmatpush2.msra.mxu0 0.0
    %660 = vmatprep.subr.mxu0 0.0
    %661 = vmatpush2.msra.mxu0 0.0
    %662 = vmatprep.subr.mxu0 0.0
    %663 = vmatpush2.msra.mxu0 0.0
    %664 = vmatprep.subr.mxu0 0.0
    %665 = vmatpush2.msra.mxu0 0.0
    %666 = vmatprep.subr.mxu0 0.0
    %667 = vmatpush2.msra.mxu0 0.0
    %668 = vmatprep.subr.mxu0 0.0
    %669 = vmatpush2.msra.mxu0 0.0
    %670 = vmatprep.subr.mxu0 0.0
    %671 = vmatpush2.msra.mxu0 0.0
    %672 = vmatprep.subr.mxu0 0.0
    %673 = vmatpush2.msra.mxu0 0.0
    %674 = vmatprep.subr.mxu0 0.0
    %675 = vmatpush2.msra.mxu0 0.0
    %676 = vmatprep.subr.mxu0 0.0
    %677 = vmatpush2.msra.mxu0 0.0
    %678 = vmatprep.subr.mxu0 0.0
    %679 = vmatpush2.msra.mxu0 0.0
    %680 = vmatprep.subr.mxu0 0.0
    %681 = vmatpush2.msra.mxu0 0.0
    %682 = vmatprep.mubr.f32.mxu0 0.0
    %v683 = vand.u32 %v24, 4294901760
    %684 = vmatmul.mubr.f32.gmra.mxu0 %v683
    %v685 = vpop.f32.mrf.mxu0
    %v686 = vadd.f32 %v599, %v685
    %v687 = vpop.f32.mrf.mxu0
    %688 = vdwg.mxu0
    %v689 = vmax.f32 %v686, 0.0
    %v690 = vld [vmem:[%s4] sm:$0xff]
    %v691 = vld [vmem:[%s4 + $0x8] sm:$0xff]
    %v692 = vld [vmem:[%s4 + $0x10] sm:$0xff]
    %v693 = vld [vmem:[%s4 + $0x18] sm:$0xff]
    %v694 = vld [vmem:[%s4 + $0x20] sm:$0xff]
    %v695 = vld [vmem:[%s4 + $0x28] sm:$0xff]
    %v696 = vld [vmem:[%s4 + $0x30] sm:$0xff]
    %v697 = vld [vmem:[%s4 + $0x38] sm:$0xff]
    %v698 = vld [vmem:[%s4 + $0x40] sm:$0xff]
    %v699 = vld [vmem:[%s4 + $0x48] sm:$0xff]
    %v700 = vld [vmem:[%s4 + $0x50] sm:$0xff]
    %v701 = vld [vmem:[%s4 + $0x58] sm:$0xff]
    %v702 = vld [vmem:[%s4 + $0x60] sm:$0xff]
    %v703 = vld [vmem:[%s4 + $0x68] sm:$0xff]
    %v704 = vld [vmem:[%s4 + $0x70] sm:$0xff]
    %v705 = vld [vmem:[%s4 + $0x78] sm:$0xff]
    %v706 = vld [vmem:[%s3] sm:$0xff]
    %v707 = vld [vmem:[%s3 + $0x8] sm:$0xff]
    %v708 = vld [vmem:[%s3 + $0x10] sm:$0xff]
    %v709 = vld [vmem:[%s3 + $0x18] sm:$0xff]
    %v710 = vld [vmem:[%s3 + $0x20] sm:$0xff]
    %v711 = vld [vmem:[%s3 + $0x28] sm:$0xff]
    %v712 = vld [vmem:[%s3 + $0x30] sm:$0xff]
    %v713 = vld [vmem:[%s3 + $0x38] sm:$0xff]
    %vm714 = vcmask 523264
    %v716 = vsel %vm714, %v689, 0
    %718 = vmatprep.subr.mxu0 0.0
    %719 = vmatpush1.msra.mxu0 0.0
    %720 = vmatprep.subr.mxu0 0.0
    %721 = vmatpush1.msra.mxu0 0.0
    %722 = vmatprep.subr.mxu0 0.0
    %723 = vmatpush1.msra.mxu0 0.0
    %724 = vmatprep.subr.mxu0 0.0
    %725 = vmatpush1.msra.mxu0 0.0
    %726 = vmatprep.subr.mxu0 0.0
    %727 = vmatpush1.msra.mxu0 0.0
    %728 = vmatprep.subr.mxu0 0.0
    %729 = vmatpush1.msra.mxu0 0.0
    %730 = vmatprep.subr.mxu0 0.0
    %731 = vmatpush1.msra.mxu0 0.0
    %732 = vmatprep.subr.mxu0 0.0
    %733 = vmatpush1.msra.mxu0 0.0
    %734 = vmatprep.subr.mxu0 0.0
    %v735 = vand.u32 %v713, 4294901760
    %736 = vmatpush1.msra.mxu0 %v735
    %737 = vmatprep.subr.mxu0 0.0
    %v738 = vand.u32 %v712, 4294901760
    %739 = vmatpush1.msra.mxu0 %v738
    %740 = vmatprep.subr.mxu0 0.0
    %v741 = vand.u32 %v711, 4294901760
    %742 = vmatpush1.msra.mxu0 %v741
    %743 = vmatprep.subr.mxu0 0.0
    %v744 = vand.u32 %v710, 4294901760
    %745 = vmatpush1.msra.mxu0 %v744
    %746 = vmatprep.subr.mxu0 0.0
    %v747 = vand.u32 %v709, 4294901760
    %748 = vmatpush1.msra.mxu0 %v747
    %749 = vmatprep.subr.mxu0 0.0
    %v750 = vand.u32 %v708, 4294901760
    %751 = vmatpush1.msra.mxu0 %v750
    %752 = vmatprep.subr.mxu0 0.0
    %v753 = vand.u32 %v707, 4294901760
    %754 = vmatpush1.msra.mxu0 %v753
    %755 = vmatprep.subr.mxu0 0.0
    %v756 = vand.u32 %v706, 4294901760
    %757 = vmatpush1.msra.mxu0 %v756
    %758 = vmatprep.subr.mxu0 0.0
    %759 = vmatpush2.msra.mxu0 0.0
    %760 = vmatprep.subr.mxu0 0.0
    %761 = vmatpush2.msra.mxu0 0.0
    %762 = vmatprep.subr.mxu0 0.0
    %763 = vmatpush2.msra.mxu0 0.0
    %764 = vmatprep.subr.mxu0 0.0
    %765 = vmatpush2.msra.mxu0 0.0
    %766 = vmatprep.subr.mxu0 0.0
    %767 = vmatpush2.msra.mxu0 0.0
    %768 = vmatprep.subr.mxu0 0.0
    %769 = vmatpush2.msra.mxu0 0.0
    %770 = vmatprep.subr.mxu0 0.0
    %771 = vmatpush2.msra.mxu0 0.0
    %772 = vmatprep.subr.mxu0 0.0
    %773 = vmatpush2.msra.mxu0 0.0
    %774 = vmatprep.subr.mxu0 0.0
    %775 = vmatpush2.msra.mxu0 0.0
    %776 = vmatprep.subr.mxu0 0.0
    %777 = vmatpush2.msra.mxu0 0.0
    %778 = vmatprep.subr.mxu0 0.0
    %779 = vmatpush2.msra.mxu0 0.0
    %780 = vmatprep.subr.mxu0 0.0
    %781 = vmatpush2.msra.mxu0 0.0
    %782 = vmatprep.subr.mxu0 0.0
    %783 = vmatpush2.msra.mxu0 0.0
    %784 = vmatprep.subr.mxu0 0.0
    %785 = vmatpush2.msra.mxu0 0.0
    %786 = vmatprep.subr.mxu0 0.0
    %787 = vmatpush2.msra.mxu0 0.0
    %788 = vmatprep.subr.mxu0 0.0
    %789 = vmatpush2.msra.mxu0 0.0
    %790 = vmatprep.mubr.f32.mxu0 0.0
    %v791 = vand.u32 %v716, 4294901760
    %v792 = vsub.f32 %v716, %v791
    %v793 = vand.u32 %v792, 4294901760
    %v794 = vsub.f32 %v792, %v793
    %v795 = vand.u32 %v794, 4294901760
    %796 = vmatmul.mubr.f32.gmra.mxu0 %v795
    %v797 = vpop.f32.mrf.mxu0
    %v798 = vadd.f32 0.0, %v797
    %v799 = vpop.f32.mrf.mxu0
    %800 = vdwg.mxu0
    %801 = vmatprep.subr.mxu0 0.0
    %802 = vmatpush1.msra.mxu0 0.0
    %803 = vmatprep.subr.mxu0 0.0
    %804 = vmatpush1.msra.mxu0 0.0
    %805 = vmatprep.subr.mxu0 0.0
    %806 = vmatpush1.msra.mxu0 0.0
    %807 = vmatprep.subr.mxu0 0.0
    %808 = vmatpush1.msra.mxu0 0.0
    %809 = vmatprep.subr.mxu0 0.0
    %810 = vmatpush1.msra.mxu0 0.0
    %811 = vmatprep.subr.mxu0 0.0
    %812 = vmatpush1.msra.mxu0 0.0
    %813 = vmatprep.subr.mxu0 0.0
    %814 = vmatpush1.msra.mxu0 0.0
    %815 = vmatprep.subr.mxu0 0.0
    %816 = vmatpush1.msra.mxu0 0.0
    %817 = vmatprep.subr.mxu0 0.0
    %v818 = vand.u32 %v713, 4294901760
    %v819 = vsub.f32 %v713, %v818
    %v820 = vand.u32 %v819, 4294901760
    %v821 = vsub.f32 %v819, %v820
    %v822 = vand.u32 %v821, 4294901760
    %823 = vmatpush1.msra.mxu0 %v822
    %824 = vmatprep.subr.mxu0 0.0
    %v825 = vand.u32 %v712, 4294901760
    %v826 = vsub.f32 %v712, %v825
    %v827 = vand.u32 %v826, 4294901760
    %v828 = vsub.f32 %v826, %v827
    %v829 = vand.u32 %v828, 4294901760
    %830 = vmatpush1.msra.mxu0 %v829
    %831 = vmatprep.subr.mxu0 0.0
    %v832 = vand.u32 %v711, 4294901760
    %v833 = vsub.f32 %v711, %v832
    %v834 = vand.u32 %v833, 4294901760
    %v835 = vsub.f32 %v833, %v834
    %v836 = vand.u32 %v835, 4294901760
    %837 = vmatpush1.msra.mxu0 %v836
    %838 = vmatprep.subr.mxu0 0.0
    %v839 = vand.u32 %v710, 4294901760
    %v840 = vsub.f32 %v710, %v839
    %v841 = vand.u32 %v840, 4294901760
    %v842 = vsub.f32 %v840, %v841
    %v843 = vand.u32 %v842, 4294901760
    %844 = vmatpush1.msra.mxu0 %v843
    %845 = vmatprep.subr.mxu0 0.0
    %v846 = vand.u32 %v709, 4294901760
    %v847 = vsub.f32 %v709, %v846
    %v848 = vand.u32 %v847, 4294901760
    %v849 = vsub.f32 %v847, %v848
    %v850 = vand.u32 %v849, 4294901760
    %851 = vmatpush1.msra.mxu0 %v850
    %852 = vmatprep.subr.mxu0 0.0
    %v853 = vand.u32 %v708, 4294901760
    %v854 = vsub.f32 %v708, %v853
    %v855 = vand.u32 %v854, 4294901760
    %v856 = vsub.f32 %v854, %v855
    %v857 = vand.u32 %v856, 4294901760
    %858 = vmatpush1.msra.mxu0 %v857
    %859 = vmatprep.subr.mxu0 0.0
    %v860 = vand.u32 %v707, 4294901760
    %v861 = vsub.f32 %v707, %v860
    %v862 = vand.u32 %v861, 4294901760
    %v863 = vsub.f32 %v861, %v862
    %v864 = vand.u32 %v863, 4294901760
    %865 = vmatpush1.msra.mxu0 %v864
    %866 = vmatprep.subr.mxu0 0.0
    %v867 = vand.u32 %v706, 4294901760
    %v868 = vsub.f32 %v706, %v867
    %v869 = vand.u32 %v868, 4294901760
    %v870 = vsub.f32 %v868, %v869
    %v871 = vand.u32 %v870, 4294901760
    %872 = vmatpush1.msra.mxu0 %v871
    %873 = vmatprep.subr.mxu0 0.0
    %874 = vmatpush2.msra.mxu0 0.0
    %875 = vmatprep.subr.mxu0 0.0
    %876 = vmatpush2.msra.mxu0 0.0
    %877 = vmatprep.subr.mxu0 0.0
    %878 = vmatpush2.msra.mxu0 0.0
    %879 = vmatprep.subr.mxu0 0.0
    %880 = vmatpush2.msra.mxu0 0.0
    %881 = vmatprep.subr.mxu0 0.0
    %882 = vmatpush2.msra.mxu0 0.0
    %883 = vmatprep.subr.mxu0 0.0
    %884 = vmatpush2.msra.mxu0 0.0
    %885 = vmatprep.subr.mxu0 0.0
    %886 = vmatpush2.msra.mxu0 0.0
    %887 = vmatprep.subr.mxu0 0.0
    %888 = vmatpush2.msra.mxu0 0.0
    %889 = vmatprep.subr.mxu0 0.0
    %890 = vmatpush2.msra.mxu0 0.0
    %891 = vmatprep.subr.mxu0 0.0
    %892 = vmatpush2.msra.mxu0 0.0
    %893 = vmatprep.subr.mxu0 0.0
    %894 = vmatpush2.msra.mxu0 0.0
    %895 = vmatprep.subr.mxu0 0.0
    %896 = vmatpush2.msra.mxu0 0.0
    %897 = vmatprep.subr.mxu0 0.0
    %898 = vmatpush2.msra.mxu0 0.0
    %899 = vmatprep.subr.mxu0 0.0
    %900 = vmatpush2.msra.mxu0 0.0
    %901 = vmatprep.subr.mxu0 0.0
    %902 = vmatpush2.msra.mxu0 0.0
    %903 = vmatprep.subr.mxu0 0.0
    %904 = vmatpush2.msra.mxu0 0.0
    %905 = vmatprep.mubr.f32.mxu0 0.0
    %v906 = vand.u32 %v716, 4294901760
    %907 = vmatmul.mubr.f32.gmra.mxu0 %v906
    %v908 = vpop.f32.mrf.mxu0
    %v909 = vadd.f32 %v798, %v908
    %v910 = vpop.f32.mrf.mxu0
    %911 = vdwg.mxu0
    %912 = vmatprep.subr.mxu0 0.0
    %913 = vmatpush1.msra.mxu0 0.0
    %914 = vmatprep.subr.mxu0 0.0
    %915 = vmatpush1.msra.mxu0 0.0
    %916 = vmatprep.subr.mxu0 0.0
    %917 = vmatpush1.msra.mxu0 0.0
    %918 = vmatprep.subr.mxu0 0.0
    %919 = vmatpush1.msra.mxu0 0.0
    %920 = vmatprep.subr.mxu0 0.0
    %921 = vmatpush1.msra.mxu0 0.0
    %922 = vmatprep.subr.mxu0 0.0
    %923 = vmatpush1.msra.mxu0 0.0
    %924 = vmatprep.subr.mxu0 0.0
    %925 = vmatpush1.msra.mxu0 0.0
    %926 = vmatprep.subr.mxu0 0.0
    %927 = vmatpush1.msra.mxu0 0.0
    %928 = vmatprep.subr.mxu0 0.0
    %v929 = vand.u32 %v713, 4294901760
    %v930 = vsub.f32 %v713, %v929
    %931 = vmatpush1.msra.mxu0 %v930
    %932 = vmatprep.subr.mxu0 0.0
    %v933 = vand.u32 %v712, 4294901760
    %v934 = vsub.f32 %v712, %v933
    %935 = vmatpush1.msra.mxu0 %v934
    %936 = vmatprep.subr.mxu0 0.0
    %v937 = vand.u32 %v711, 4294901760
    %v938 = vsub.f32 %v711, %v937
    %939 = vmatpush1.msra.mxu0 %v938
    %940 = vmatprep.subr.mxu0 0.0
    %v941 = vand.u32 %v710, 4294901760
    %v942 = vsub.f32 %v710, %v941
    %943 = vmatpush1.msra.mxu0 %v942
    %944 = vmatprep.subr.mxu0 0.0
    %v945 = vand.u32 %v709, 4294901760
    %v946 = vsub.f32 %v709, %v945
    %947 = vmatpush1.msra.mxu0 %v946
    %948 = vmatprep.subr.mxu0 0.0
    %v949 = vand.u32 %v708, 4294901760
    %v950 = vsub.f32 %v708, %v949
    %951 = vmatpush1.msra.mxu0 %v950
    %952 = vmatprep.subr.mxu0 0.0
    %v953 = vand.u32 %v707, 4294901760
    %v954 = vsub.f32 %v707, %v953
    %955 = vmatpush1.msra.mxu0 %v954
    %956 = vmatprep.subr.mxu0 0.0
    %v957 = vand.u32 %v706, 4294901760
    %v958 = vsub.f32 %v706, %v957
    %959 = vmatpush1.msra.mxu0 %v958
    %960 = vmatprep.subr.mxu0 0.0
    %961 = vmatpush2.msra.mxu0 0.0
    %962 = vmatprep.subr.mxu0 0.0
    %963 = vmatpush2.msra.mxu0 0.0
    %964 = vmatprep.subr.mxu0 0.0
    %965 = vmatpush2.msra.mxu0 0.0
    %966 = vmatprep.subr.mxu0 0.0
    %967 = vmatpush2.msra.mxu0 0.0
    %968 = vmatprep.subr.mxu0 0.0
    %969 = vmatpush2.msra.mxu0 0.0
    %970 = vmatprep.subr.mxu0 0.0
    %971 = vmatpush2.msra.mxu0 0.0
    %972 = vmatprep.subr.mxu0 0.0
    %973 = vmatpush2.msra.mxu0 0.0
    %974 = vmatprep.subr.mxu0 0.0
    %975 = vmatpush2.msra.mxu0 0.0
    %976 = vmatprep.subr.mxu0 0.0
    %977 = vmatpush2.msra.mxu0 0.0
    %978 = vmatprep.subr.mxu0 0.0
    %979 = vmatpush2.msra.mxu0 0.0
    %980 = vmatprep.subr.mxu0 0.0
    %981 = vmatpush2.msra.mxu0 0.0
    %982 = vmatprep.subr.mxu0 0.0
    %983 = vmatpush2.msra.mxu0 0.0
    %984 = vmatprep.subr.mxu0 0.0
    %985 = vmatpush2.msra.mxu0 0.0
    %986 = vmatprep.subr.mxu0 0.0
    %987 = vmatpush2.msra.mxu0 0.0
    %988 = vmatprep.subr.mxu0 0.0
    %989 = vmatpush2.msra.mxu0 0.0
    %990 = vmatprep.subr.mxu0 0.0
    %991 = vmatpush2.msra.mxu0 0.0
    %992 = vmatprep.mubr.f32.mxu0 0.0
    %v993 = vand.u32 %v716, 4294901760
    %v994 = vsub.f32 %v716, %v993
    %995 = vmatmul.mubr.f32.gmra.mxu0 %v994
    %v996 = vpop.f32.mrf.mxu0
    %v997 = vadd.f32 %v909, %v996
    %v998 = vpop.f32.mrf.mxu0
    %999 = vdwg.mxu0
    %1000 = vmatprep.subr.mxu0 0.0
    %1001 = vmatpush1.msra.mxu0 0.0
    %1002 = vmatprep.subr.mxu0 0.0
    %1003 = vmatpush1.msra.mxu0 0.0
    %1004 = vmatprep.subr.mxu0 0.0
    %1005 = vmatpush1.msra.mxu0 0.0
    %1006 = vmatprep.subr.mxu0 0.0
    %1007 = vmatpush1.msra.mxu0 0.0
    %1008 = vmatprep.subr.mxu0 0.0
    %1009 = vmatpush1.msra.mxu0 0.0
    %1010 = vmatprep.subr.mxu0 0.0
    %1011 = vmatpush1.msra.mxu0 0.0
    %1012 = vmatprep.subr.mxu0 0.0
    %1013 = vmatpush1.msra.mxu0 0.0
    %1014 = vmatprep.subr.mxu0 0.0
    %1015 = vmatpush1.msra.mxu0 0.0
    %1016 = vmatprep.subr.mxu0 0.0
    %v1017 = vand.u32 %v713, 4294901760
    %1018 = vmatpush1.msra.mxu0 %v1017
    %1019 = vmatprep.subr.mxu0 0.0
    %v1020 = vand.u32 %v712, 4294901760
    %1021 = vmatpush1.msra.mxu0 %v1020
    %1022 = vmatprep.subr.mxu0 0.0
    %v1023 = vand.u32 %v711, 4294901760
    %1024 = vmatpush1.msra.mxu0 %v1023
    %1025 = vmatprep.subr.mxu0 0.0
    %v1026 = vand.u32 %v710, 4294901760
    %1027 = vmatpush1.msra.mxu0 %v1026
    %1028 = vmatprep.subr.mxu0 0.0
    %v1029 = vand.u32 %v709, 4294901760
    %1030 = vmatpush1.msra.mxu0 %v1029
    %1031 = vmatprep.subr.mxu0 0.0
    %v1032 = vand.u32 %v708, 4294901760
    %1033 = vmatpush1.msra.mxu0 %v1032
    %1034 = vmatprep.subr.mxu0 0.0
    %v1035 = vand.u32 %v707, 4294901760
    %1036 = vmatpush1.msra.mxu0 %v1035
    %1037 = vmatprep.subr.mxu0 0.0
    %v1038 = vand.u32 %v706, 4294901760
    %1039 = vmatpush1.msra.mxu0 %v1038
    %1040 = vmatprep.subr.mxu0 0.0
    %1041 = vmatpush2.msra.mxu0 0.0
    %1042 = vmatprep.subr.mxu0 0.0
    %1043 = vmatpush2.msra.mxu0 0.0
    %1044 = vmatprep.subr.mxu0 0.0
    %1045 = vmatpush2.msra.mxu0 0.0
    %1046 = vmatprep.subr.mxu0 0.0
    %1047 = vmatpush2.msra.mxu0 0.0
    %1048 = vmatprep.subr.mxu0 0.0
    %1049 = vmatpush2.msra.mxu0 0.0
    %1050 = vmatprep.subr.mxu0 0.0
    %1051 = vmatpush2.msra.mxu0 0.0
    %1052 = vmatprep.subr.mxu0 0.0
    %1053 = vmatpush2.msra.mxu0 0.0
    %1054 = vmatprep.subr.mxu0 0.0
    %1055 = vmatpush2.msra.mxu0 0.0
    %1056 = vmatprep.subr.mxu0 0.0
    %1057 = vmatpush2.msra.mxu0 0.0
    %1058 = vmatprep.subr.mxu0 0.0
    %1059 = vmatpush2.msra.mxu0 0.0
    %1060 = vmatprep.subr.mxu0 0.0
    %1061 = vmatpush2.msra.mxu0 0.0
    %1062 = vmatprep.subr.mxu0 0.0
    %1063 = vmatpush2.msra.mxu0 0.0
    %1064 = vmatprep.subr.mxu0 0.0
    %1065 = vmatpush2.msra.mxu0 0.0
    %1066 = vmatprep.subr.mxu0 0.0
    %1067 = vmatpush2.msra.mxu0 0.0
    %1068 = vmatprep.subr.mxu0 0.0
    %1069 = vmatpush2.msra.mxu0 0.0
    %1070 = vmatprep.subr.mxu0 0.0
    %1071 = vmatpush2.msra.mxu0 0.0
    %1072 = vmatprep.mubr.f32.mxu0 0.0
    %v1073 = vand.u32 %v716, 4294901760
    %v1074 = vsub.f32 %v716, %v1073
    %v1075 = vand.u32 %v1074, 4294901760
    %1076 = vmatmul.mubr.f32.gmra.mxu0 %v1075
    %v1077 = vpop.f32.mrf.mxu0
    %v1078 = vadd.f32 %v997, %v1077
    %v1079 = vpop.f32.mrf.mxu0
    %1080 = vdwg.mxu0
    %1081 = vmatprep.subr.mxu0 0.0
    %1082 = vmatpush1.msra.mxu0 0.0
    %1083 = vmatprep.subr.mxu0 0.0
    %1084 = vmatpush1.msra.mxu0 0.0
    %1085 = vmatprep.subr.mxu0 0.0
    %1086 = vmatpush1.msra.mxu0 0.0
    %1087 = vmatprep.subr.mxu0 0.0
    %1088 = vmatpush1.msra.mxu0 0.0
    %1089 = vmatprep.subr.mxu0 0.0
    %1090 = vmatpush1.msra.mxu0 0.0
    %1091 = vmatprep.subr.mxu0 0.0
    %1092 = vmatpush1.msra.mxu0 0.0
    %1093 = vmatprep.subr.mxu0 0.0
    %1094 = vmatpush1.msra.mxu0 0.0
    %1095 = vmatprep.subr.mxu0 0.0
    %1096 = vmatpush1.msra.mxu0 0.0
    %1097 = vmatprep.subr.mxu0 0.0
    %v1098 = vand.u32 %v713, 4294901760
    %v1099 = vsub.f32 %v713, %v1098
    %v1100 = vand.u32 %v1099, 4294901760
    %1101 = vmatpush1.msra.mxu0 %v1100
    %1102 = vmatprep.subr.mxu0 0.0
    %v1103 = vand.u32 %v712, 4294901760
    %v1104 = vsub.f32 %v712, %v1103
    %v1105 = vand.u32 %v1104, 4294901760
    %1106 = vmatpush1.msra.mxu0 %v1105
    %1107 = vmatprep.subr.mxu0 0.0
    %v1108 = vand.u32 %v711, 4294901760
    %v1109 = vsub.f32 %v711, %v1108
    %v1110 = vand.u32 %v1109, 4294901760
    %1111 = vmatpush1.msra.mxu0 %v1110
    %1112 = vmatprep.subr.mxu0 0.0
    %v1113 = vand.u32 %v710, 4294901760
    %v1114 = vsub.f32 %v710, %v1113
    %v1115 = vand.u32 %v1114, 4294901760
    %1116 = vmatpush1.msra.mxu0 %v1115
    %1117 = vmatprep.subr.mxu0 0.0
    %v1118 = vand.u32 %v709, 4294901760
    %v1119 = vsub.f32 %v709, %v1118
    %v1120 = vand.u32 %v1119, 4294901760
    %1121 = vmatpush1.msra.mxu0 %v1120
    %1122 = vmatprep.subr.mxu0 0.0
    %v1123 = vand.u32 %v708, 4294901760
    %v1124 = vsub.f32 %v708, %v1123
    %v1125 = vand.u32 %v1124, 4294901760
    %1126 = vmatpush1.msra.mxu0 %v1125
    %1127 = vmatprep.subr.mxu0 0.0
    %v1128 = vand.u32 %v707, 4294901760
    %v1129 = vsub.f32 %v707, %v1128
    %v1130 = vand.u32 %v1129, 4294901760
    %1131 = vmatpush1.msra.mxu0 %v1130
    %1132 = vmatprep.subr.mxu0 0.0
    %v1133 = vand.u32 %v706, 4294901760
    %v1134 = vsub.f32 %v706, %v1133
    %v1135 = vand.u32 %v1134, 4294901760
    %1136 = vmatpush1.msra.mxu0 %v1135
    %1137 = vmatprep.subr.mxu0 0.0
    %1138 = vmatpush2.msra.mxu0 0.0
    %1139 = vmatprep.subr.mxu0 0.0
    %1140 = vmatpush2.msra.mxu0 0.0
    %1141 = vmatprep.subr.mxu0 0.0
    %1142 = vmatpush2.msra.mxu0 0.0
    %1143 = vmatprep.subr.mxu0 0.0
    %1144 = vmatpush2.msra.mxu0 0.0
    %1145 = vmatprep.subr.mxu0 0.0
    %1146 = vmatpush2.msra.mxu0 0.0
    %1147 = vmatprep.subr.mxu0 0.0
    %1148 = vmatpush2.msra.mxu0 0.0
    %1149 = vmatprep.subr.mxu0 0.0
    %1150 = vmatpush2.msra.mxu0 0.0
    %1151 = vmatprep.subr.mxu0 0.0
    %1152 = vmatpush2.msra.mxu0 0.0
    %1153 = vmatprep.subr.mxu0 0.0
    %1154 = vmatpush2.msra.mxu0 0.0
    %1155 = vmatprep.subr.mxu0 0.0
    %1156 = vmatpush2.msra.mxu0 0.0
    %1157 = vmatprep.subr.mxu0 0.0
    %1158 = vmatpush2.msra.mxu0 0.0
    %1159 = vmatprep.subr.mxu0 0.0
    %1160 = vmatpush2.msra.mxu0 0.0
    %1161 = vmatprep.subr.mxu0 0.0
    %1162 = vmatpush2.msra.mxu0 0.0
    %1163 = vmatprep.subr.mxu0 0.0
    %1164 = vmatpush2.msra.mxu0 0.0
    %1165 = vmatprep.subr.mxu0 0.0
    %1166 = vmatpush2.msra.mxu0 0.0
    %1167 = vmatprep.subr.mxu0 0.0
    %1168 = vmatpush2.msra.mxu0 0.0
    %1169 = vmatprep.mubr.f32.mxu0 0.0
    %v1170 = vand.u32 %v716, 4294901760
    %1171 = vmatmul.mubr.f32.gmra.mxu0 %v1170
    %v1172 = vpop.f32.mrf.mxu0
    %v1173 = vadd.f32 %v1078, %v1172
    %v1174 = vpop.f32.mrf.mxu0
    %1175 = vdwg.mxu0
    %1176 = vmatprep.subr.mxu0 0.0
    %1177 = vmatpush1.msra.mxu0 0.0
    %1178 = vmatprep.subr.mxu0 0.0
    %1179 = vmatpush1.msra.mxu0 0.0
    %1180 = vmatprep.subr.mxu0 0.0
    %1181 = vmatpush1.msra.mxu0 0.0
    %1182 = vmatprep.subr.mxu0 0.0
    %1183 = vmatpush1.msra.mxu0 0.0
    %1184 = vmatprep.subr.mxu0 0.0
    %1185 = vmatpush1.msra.mxu0 0.0
    %1186 = vmatprep.subr.mxu0 0.0
    %1187 = vmatpush1.msra.mxu0 0.0
    %1188 = vmatprep.subr.mxu0 0.0
    %1189 = vmatpush1.msra.mxu0 0.0
    %1190 = vmatprep.subr.mxu0 0.0
    %1191 = vmatpush1.msra.mxu0 0.0
    %1192 = vmatprep.subr.mxu0 0.0
    %v1193 = vand.u32 %v713, 4294901760
    %1194 = vmatpush1.msra.mxu0 %v1193
    %1195 = vmatprep.subr.mxu0 0.0
    %v1196 = vand.u32 %v712, 4294901760
    %1197 = vmatpush1.msra.mxu0 %v1196
    %1198 = vmatprep.subr.mxu0 0.0
    %v1199 = vand.u32 %v711, 4294901760
    %1200 = vmatpush1.msra.mxu0 %v1199
    %1201 = vmatprep.subr.mxu0 0.0
    %v1202 = vand.u32 %v710, 4294901760
    %1203 = vmatpush1.msra.mxu0 %v1202
    %1204 = vmatprep.subr.mxu0 0.0
    %v1205 = vand.u32 %v709, 4294901760
    %1206 = vmatpush1.msra.mxu0 %v1205
    %1207 = vmatprep.subr.mxu0 0.0
    %v1208 = vand.u32 %v708, 4294901760
    %1209 = vmatpush1.msra.mxu0 %v1208
    %1210 = vmatprep.subr.mxu0 0.0
    %v1211 = vand.u32 %v707, 4294901760
    %1212 = vmatpush1.msra.mxu0 %v1211
    %1213 = vmatprep.subr.mxu0 0.0
    %v1214 = vand.u32 %v706, 4294901760
    %1215 = vmatpush1.msra.mxu0 %v1214
    %1216 = vmatprep.subr.mxu0 0.0
    %1217 = vmatpush2.msra.mxu0 0.0
    %1218 = vmatprep.subr.mxu0 0.0
    %1219 = vmatpush2.msra.mxu0 0.0
    %1220 = vmatprep.subr.mxu0 0.0
    %1221 = vmatpush2.msra.mxu0 0.0
    %1222 = vmatprep.subr.mxu0 0.0
    %1223 = vmatpush2.msra.mxu0 0.0
    %1224 = vmatprep.subr.mxu0 0.0
    %1225 = vmatpush2.msra.mxu0 0.0
    %1226 = vmatprep.subr.mxu0 0.0
    %1227 = vmatpush2.msra.mxu0 0.0
    %1228 = vmatprep.subr.mxu0 0.0
    %1229 = vmatpush2.msra.mxu0 0.0
    %1230 = vmatprep.subr.mxu0 0.0
    %1231 = vmatpush2.msra.mxu0 0.0
    %1232 = vmatprep.subr.mxu0 0.0
    %1233 = vmatpush2.msra.mxu0 0.0
    %1234 = vmatprep.subr.mxu0 0.0
    %1235 = vmatpush2.msra.mxu0 0.0
    %1236 = vmatprep.subr.mxu0 0.0
    %1237 = vmatpush2.msra.mxu0 0.0
    %1238 = vmatprep.subr.mxu0 0.0
    %1239 = vmatpush2.msra.mxu0 0.0
    %1240 = vmatprep.subr.mxu0 0.0
    %1241 = vmatpush2.msra.mxu0 0.0
    %1242 = vmatprep.subr.mxu0 0.0
    %1243 = vmatpush2.msra.mxu0 0.0
    %1244 = vmatprep.subr.mxu0 0.0
    %1245 = vmatpush2.msra.mxu0 0.0
    %1246 = vmatprep.subr.mxu0 0.0
    %1247 = vmatpush2.msra.mxu0 0.0
    %1248 = vmatprep.mubr.f32.mxu0 0.0
    %v1249 = vand.u32 %v716, 4294901760
    %1250 = vmatmul.mubr.f32.gmra.mxu0 %v1249
    %v1251 = vpop.f32.mrf.mxu0
    %v1252 = vadd.f32 %v1173, %v1251
    %v1253 = vpop.f32.mrf.mxu0
    %1254 = vdwg.mxu0
    %1255 = vmatprep.subr.mxu0 0.0
    %v1256 = vand.u32 %v705, 4294901760
    %1257 = vmatpush1.msra.mxu0 %v1256
    %1258 = vmatprep.subr.mxu0 0.0
    %v1259 = vand.u32 %v704, 4294901760
    %1260 = vmatpush1.msra.mxu0 %v1259
    %1261 = vmatprep.subr.mxu0 0.0
    %v1262 = vand.u32 %v703, 4294901760
    %1263 = vmatpush1.msra.mxu0 %v1262
    %1264 = vmatprep.subr.mxu0 0.0
    %v1265 = vand.u32 %v702, 4294901760
    %1266 = vmatpush1.msra.mxu0 %v1265
    %1267 = vmatprep.subr.mxu0 0.0
    %v1268 = vand.u32 %v701, 4294901760
    %1269 = vmatpush1.msra.mxu0 %v1268
    %1270 = vmatprep.subr.mxu0 0.0
    %v1271 = vand.u32 %v700, 4294901760
    %1272 = vmatpush1.msra.mxu0 %v1271
    %1273 = vmatprep.subr.mxu0 0.0
    %v1274 = vand.u32 %v699, 4294901760
    %1275 = vmatpush1.msra.mxu0 %v1274
    %1276 = vmatprep.subr.mxu0 0.0
    %v1277 = vand.u32 %v698, 4294901760
    %1278 = vmatpush1.msra.mxu0 %v1277
    %1279 = vmatprep.subr.mxu0 0.0
    %v1280 = vand.u32 %v697, 4294901760
    %1281 = vmatpush1.msra.mxu0 %v1280
    %1282 = vmatprep.subr.mxu0 0.0
    %v1283 = vand.u32 %v696, 4294901760
    %1284 = vmatpush1.msra.mxu0 %v1283
    %1285 = vmatprep.subr.mxu0 0.0
    %v1286 = vand.u32 %v695, 4294901760
    %1287 = vmatpush1.msra.mxu0 %v1286
    %1288 = vmatprep.subr.mxu0 0.0
    %v1289 = vand.u32 %v694, 4294901760
    %1290 = vmatpush1.msra.mxu0 %v1289
    %1291 = vmatprep.subr.mxu0 0.0
    %v1292 = vand.u32 %v693, 4294901760
    %1293 = vmatpush1.msra.mxu0 %v1292
    %1294 = vmatprep.subr.mxu0 0.0
    %v1295 = vand.u32 %v692, 4294901760
    %1296 = vmatpush1.msra.mxu0 %v1295
    %1297 = vmatprep.subr.mxu0 0.0
    %v1298 = vand.u32 %v691, 4294901760
    %1299 = vmatpush1.msra.mxu0 %v1298
    %1300 = vmatprep.subr.mxu0 0.0
    %v1301 = vand.u32 %v690, 4294901760
    %1302 = vmatpush1.msra.mxu0 %v1301
    %1303 = vmatprep.subr.mxu0 0.0
    %1304 = vmatpush2.msra.mxu0 0.0
    %1305 = vmatprep.subr.mxu0 0.0
    %1306 = vmatpush2.msra.mxu0 0.0
    %1307 = vmatprep.subr.mxu0 0.0
    %1308 = vmatpush2.msra.mxu0 0.0
    %1309 = vmatprep.subr.mxu0 0.0
    %1310 = vmatpush2.msra.mxu0 0.0
    %1311 = vmatprep.subr.mxu0 0.0
    %1312 = vmatpush2.msra.mxu0 0.0
    %1313 = vmatprep.subr.mxu0 0.0
    %1314 = vmatpush2.msra.mxu0 0.0
    %1315 = vmatprep.subr.mxu0 0.0
    %1316 = vmatpush2.msra.mxu0 0.0
    %1317 = vmatprep.subr.mxu0 0.0
    %1318 = vmatpush2.msra.mxu0 0.0
    %1319 = vmatprep.subr.mxu0 0.0
    %1320 = vmatpush2.msra.mxu0 0.0
    %1321 = vmatprep.subr.mxu0 0.0
    %1322 = vmatpush2.msra.mxu0 0.0
    %1323 = vmatprep.subr.mxu0 0.0
    %1324 = vmatpush2.msra.mxu0 0.0
    %1325 = vmatprep.subr.mxu0 0.0
    %1326 = vmatpush2.msra.mxu0 0.0
    %1327 = vmatprep.subr.mxu0 0.0
    %1328 = vmatpush2.msra.mxu0 0.0
    %1329 = vmatprep.subr.mxu0 0.0
    %1330 = vmatpush2.msra.mxu0 0.0
    %1331 = vmatprep.subr.mxu0 0.0
    %1332 = vmatpush2.msra.mxu0 0.0
    %1333 = vmatprep.subr.mxu0 0.0
    %1334 = vmatpush2.msra.mxu0 0.0
    %1335 = vmatprep.mubr.f32.mxu0 0.0
    %v1336 = vand.u32 %v24, 4294901760
    %v1337 = vsub.f32 %v24, %v1336
    %v1338 = vand.u32 %v1337, 4294901760
    %v1339 = vsub.f32 %v1337, %v1338
    %v1340 = vand.u32 %v1339, 4294901760
    %1341 = vmatmul.mubr.f32.gmra.mxu0 %v1340
    %v1342 = vpop.f32.mrf.mxu0
    %v1343 = vadd.f32 %v1252, %v1342
    %v1344 = vpop.f32.mrf.mxu0
    %1345 = vdwg.mxu0
    %1346 = vmatprep.subr.mxu0 0.0
    %v1347 = vand.u32 %v705, 4294901760
    %v1348 = vsub.f32 %v705, %v1347
    %v1349 = vand.u32 %v1348, 4294901760
    %v1350 = vsub.f32 %v1348, %v1349
    %v1351 = vand.u32 %v1350, 4294901760
    %1352 = vmatpush1.msra.mxu0 %v1351
    %1353 = vmatprep.subr.mxu0 0.0
    %v1354 = vand.u32 %v704, 4294901760
    %v1355 = vsub.f32 %v704, %v1354
    %v1356 = vand.u32 %v1355, 4294901760
    %v1357 = vsub.f32 %v1355, %v1356
    %v1358 = vand.u32 %v1357, 4294901760
    %1359 = vmatpush1.msra.mxu0 %v1358
    %1360 = vmatprep.subr.mxu0 0.0
    %v1361 = vand.u32 %v703, 4294901760
    %v1362 = vsub.f32 %v703, %v1361
    %v1363 = vand.u32 %v1362, 4294901760
    %v1364 = vsub.f32 %v1362, %v1363
    %v1365 = vand.u32 %v1364, 4294901760
    %1366 = vmatpush1.msra.mxu0 %v1365
    %1367 = vmatprep.subr.mxu0 0.0
    %v1368 = vand.u32 %v702, 4294901760
    %v1369 = vsub.f32 %v702, %v1368
    %v1370 = vand.u32 %v1369, 4294901760
    %v1371 = vsub.f32 %v1369, %v1370
    %v1372 = vand.u32 %v1371, 4294901760
    %1373 = vmatpush1.msra.mxu0 %v1372
    %1374 = vmatprep.subr.mxu0 0.0
    %v1375 = vand.u32 %v701, 4294901760
    %v1376 = vsub.f32 %v701, %v1375
    %v1377 = vand.u32 %v1376, 4294901760
    %v1378 = vsub.f32 %v1376, %v1377
    %v1379 = vand.u32 %v1378, 4294901760
    %1380 = vmatpush1.msra.mxu0 %v1379
    %1381 = vmatprep.subr.mxu0 0.0
    %v1382 = vand.u32 %v700, 4294901760
    %v1383 = vsub.f32 %v700, %v1382
    %v1384 = vand.u32 %v1383, 4294901760
    %v1385 = vsub.f32 %v1383, %v1384
    %v1386 = vand.u32 %v1385, 4294901760
    %1387 = vmatpush1.msra.mxu0 %v1386
    %1388 = vmatprep.subr.mxu0 0.0
    %v1389 = vand.u32 %v699, 4294901760
    %v1390 = vsub.f32 %v699, %v1389
    %v1391 = vand.u32 %v1390, 4294901760
    %v1392 = vsub.f32 %v1390, %v1391
    %v1393 = vand.u32 %v1392, 4294901760
    %1394 = vmatpush1.msra.mxu0 %v1393
    %1395 = vmatprep.subr.mxu0 0.0
    %v1396 = vand.u32 %v698, 4294901760
    %v1397 = vsub.f32 %v698, %v1396
    %v1398 = vand.u32 %v1397, 4294901760
    %v1399 = vsub.f32 %v1397, %v1398
    %v1400 = vand.u32 %v1399, 4294901760
    %1401 = vmatpush1.msra.mxu0 %v1400
    %1402 = vmatprep.subr.mxu0 0.0
    %v1403 = vand.u32 %v697, 4294901760
    %v1404 = vsub.f32 %v697, %v1403
    %v1405 = vand.u32 %v1404, 4294901760
    %v1406 = vsub.f32 %v1404, %v1405
    %v1407 = vand.u32 %v1406, 4294901760
    %1408 = vmatpush1.msra.mxu0 %v1407
    %1409 = vmatprep.subr.mxu0 0.0
    %v1410 = vand.u32 %v696, 4294901760
    %v1411 = vsub.f32 %v696, %v1410
    %v1412 = vand.u32 %v1411, 4294901760
    %v1413 = vsub.f32 %v1411, %v1412
    %v1414 = vand.u32 %v1413, 4294901760
    %1415 = vmatpush1.msra.mxu0 %v1414
    %1416 = vmatprep.subr.mxu0 0.0
    %v1417 = vand.u32 %v695, 4294901760
    %v1418 = vsub.f32 %v695, %v1417
    %v1419 = vand.u32 %v1418, 4294901760
    %v1420 = vsub.f32 %v1418, %v1419
    %v1421 = vand.u32 %v1420, 4294901760
    %1422 = vmatpush1.msra.mxu0 %v1421
    %1423 = vmatprep.subr.mxu0 0.0
    %v1424 = vand.u32 %v694, 4294901760
    %v1425 = vsub.f32 %v694, %v1424
    %v1426 = vand.u32 %v1425, 4294901760
    %v1427 = vsub.f32 %v1425, %v1426
    %v1428 = vand.u32 %v1427, 4294901760
    %1429 = vmatpush1.msra.mxu0 %v1428
    %1430 = vmatprep.subr.mxu0 0.0
    %v1431 = vand.u32 %v693, 4294901760
    %v1432 = vsub.f32 %v693, %v1431
    %v1433 = vand.u32 %v1432, 4294901760
    %v1434 = vsub.f32 %v1432, %v1433
    %v1435 = vand.u32 %v1434, 4294901760
    %1436 = vmatpush1.msra.mxu0 %v1435
    %1437 = vmatprep.subr.mxu0 0.0
    %v1438 = vand.u32 %v692, 4294901760
    %v1439 = vsub.f32 %v692, %v1438
    %v1440 = vand.u32 %v1439, 4294901760
    %v1441 = vsub.f32 %v1439, %v1440
    %v1442 = vand.u32 %v1441, 4294901760
    %1443 = vmatpush1.msra.mxu0 %v1442
    %1444 = vmatprep.subr.mxu0 0.0
    %v1445 = vand.u32 %v691, 4294901760
    %v1446 = vsub.f32 %v691, %v1445
    %v1447 = vand.u32 %v1446, 4294901760
    %v1448 = vsub.f32 %v1446, %v1447
    %v1449 = vand.u32 %v1448, 4294901760
    %1450 = vmatpush1.msra.mxu0 %v1449
    %1451 = vmatprep.subr.mxu0 0.0
    %v1452 = vand.u32 %v690, 4294901760
    %v1453 = vsub.f32 %v690, %v1452
    %v1454 = vand.u32 %v1453, 4294901760
    %v1455 = vsub.f32 %v1453, %v1454
    %v1456 = vand.u32 %v1455, 4294901760
    %1457 = vmatpush1.msra.mxu0 %v1456
    %1458 = vmatprep.subr.mxu0 0.0
    %1459 = vmatpush2.msra.mxu0 0.0
    %1460 = vmatprep.subr.mxu0 0.0
    %1461 = vmatpush2.msra.mxu0 0.0
    %1462 = vmatprep.subr.mxu0 0.0
    %1463 = vmatpush2.msra.mxu0 0.0
    %1464 = vmatprep.subr.mxu0 0.0
    %1465 = vmatpush2.msra.mxu0 0.0
    %1466 = vmatprep.subr.mxu0 0.0
    %1467 = vmatpush2.msra.mxu0 0.0
    %1468 = vmatprep.subr.mxu0 0.0
    %1469 = vmatpush2.msra.mxu0 0.0
    %1470 = vmatprep.subr.mxu0 0.0
    %1471 = vmatpush2.msra.mxu0 0.0
    %1472 = vmatprep.subr.mxu0 0.0
    %1473 = vmatpush2.msra.mxu0 0.0
    %1474 = vmatprep.subr.mxu0 0.0
    %1475 = vmatpush2.msra.mxu0 0.0
    %1476 = vmatprep.subr.mxu0 0.0
    %1477 = vmatpush2.msra.mxu0 0.0
    %1478 = vmatprep.subr.mxu0 0.0
    %1479 = vmatpush2.msra.mxu0 0.0
    %1480 = vmatprep.subr.mxu0 0.0
    %1481 = vmatpush2.msra.mxu0 0.0
    %1482 = vmatprep.subr.mxu0 0.0
    %1483 = vmatpush2.msra.mxu0 0.0
    %1484 = vmatprep.subr.mxu0 0.0
    %1485 = vmatpush2.msra.mxu0 0.0
    %1486 = vmatprep.subr.mxu0 0.0
    %1487 = vmatpush2.msra.mxu0 0.0
    %1488 = vmatprep.subr.mxu0 0.0
    %1489 = vmatpush2.msra.mxu0 0.0
    %1490 = vmatprep.mubr.f32.mxu0 0.0
    %v1491 = vand.u32 %v24, 4294901760
    %1492 = vmatmul.mubr.f32.gmra.mxu0 %v1491
    %v1493 = vpop.f32.mrf.mxu0
    %v1494 = vadd.f32 %v1343, %v1493
    %v1495 = vpop.f32.mrf.mxu0
    %1496 = vdwg.mxu0
    %1497 = vmatprep.subr.mxu0 0.0
    %v1498 = vand.u32 %v705, 4294901760
    %v1499 = vsub.f32 %v705, %v1498
    %1500 = vmatpush1.msra.mxu0 %v1499
    %1501 = vmatprep.subr.mxu0 0.0
    %v1502 = vand.u32 %v704, 4294901760
    %v1503 = vsub.f32 %v704, %v1502
    %1504 = vmatpush1.msra.mxu0 %v1503
    %1505 = vmatprep.subr.mxu0 0.0
    %v1506 = vand.u32 %v703, 4294901760
    %v1507 = vsub.f32 %v703, %v1506
    %1508 = vmatpush1.msra.mxu0 %v1507
    %1509 = vmatprep.subr.mxu0 0.0
    %v1510 = vand.u32 %v702, 4294901760
    %v1511 = vsub.f32 %v702, %v1510
    %1512 = vmatpush1.msra.mxu0 %v1511
    %1513 = vmatprep.subr.mxu0 0.0
    %v1514 = vand.u32 %v701, 4294901760
    %v1515 = vsub.f32 %v701, %v1514
    %1516 = vmatpush1.msra.mxu0 %v1515
    %1517 = vmatprep.subr.mxu0 0.0
    %v1518 = vand.u32 %v700, 4294901760
    %v1519 = vsub.f32 %v700, %v1518
    %1520 = vmatpush1.msra.mxu0 %v1519
    %1521 = vmatprep.subr.mxu0 0.0
    %v1522 = vand.u32 %v699, 4294901760
    %v1523 = vsub.f32 %v699, %v1522
    %1524 = vmatpush1.msra.mxu0 %v1523
    %1525 = vmatprep.subr.mxu0 0.0
    %v1526 = vand.u32 %v698, 4294901760
    %v1527 = vsub.f32 %v698, %v1526
    %1528 = vmatpush1.msra.mxu0 %v1527
    %1529 = vmatprep.subr.mxu0 0.0
    %v1530 = vand.u32 %v697, 4294901760
    %v1531 = vsub.f32 %v697, %v1530
    %1532 = vmatpush1.msra.mxu0 %v1531
    %1533 = vmatprep.subr.mxu0 0.0
    %v1534 = vand.u32 %v696, 4294901760
    %v1535 = vsub.f32 %v696, %v1534
    %1536 = vmatpush1.msra.mxu0 %v1535
    %1537 = vmatprep.subr.mxu0 0.0
    %v1538 = vand.u32 %v695, 4294901760
    %v1539 = vsub.f32 %v695, %v1538
    %1540 = vmatpush1.msra.mxu0 %v1539
    %1541 = vmatprep.subr.mxu0 0.0
    %v1542 = vand.u32 %v694, 4294901760
    %v1543 = vsub.f32 %v694, %v1542
    %1544 = vmatpush1.msra.mxu0 %v1543
    %1545 = vmatprep.subr.mxu0 0.0
    %v1546 = vand.u32 %v693, 4294901760
    %v1547 = vsub.f32 %v693, %v1546
    %1548 = vmatpush1.msra.mxu0 %v1547
    %1549 = vmatprep.subr.mxu0 0.0
    %v1550 = vand.u32 %v692, 4294901760
    %v1551 = vsub.f32 %v692, %v1550
    %1552 = vmatpush1.msra.mxu0 %v1551
    %1553 = vmatprep.subr.mxu0 0.0
    %v1554 = vand.u32 %v691, 4294901760
    %v1555 = vsub.f32 %v691, %v1554
    %1556 = vmatpush1.msra.mxu0 %v1555
    %1557 = vmatprep.subr.mxu0 0.0
    %v1558 = vand.u32 %v690, 4294901760
    %v1559 = vsub.f32 %v690, %v1558
    %1560 = vmatpush1.msra.mxu0 %v1559
    %1561 = vmatprep.subr.mxu0 0.0
    %1562 = vmatpush2.msra.mxu0 0.0
    %1563 = vmatprep.subr.mxu0 0.0
    %1564 = vmatpush2.msra.mxu0 0.0
    %1565 = vmatprep.subr.mxu0 0.0
    %1566 = vmatpush2.msra.mxu0 0.0
    %1567 = vmatprep.subr.mxu0 0.0
    %1568 = vmatpush2.msra.mxu0 0.0
    %1569 = vmatprep.subr.mxu0 0.0
    %1570 = vmatpush2.msra.mxu0 0.0
    %1571 = vmatprep.subr.mxu0 0.0
    %1572 = vmatpush2.msra.mxu0 0.0
    %1573 = vmatprep.subr.mxu0 0.0
    %1574 = vmatpush2.msra.mxu0 0.0
    %1575 = vmatprep.subr.mxu0 0.0
    %1576 = vmatpush2.msra.mxu0 0.0
    %1577 = vmatprep.subr.mxu0 0.0
    %1578 = vmatpush2.msra.mxu0 0.0
    %1579 = vmatprep.subr.mxu0 0.0
    %1580 = vmatpush2.msra.mxu0 0.0
    %1581 = vmatprep.subr.mxu0 0.0
    %1582 = vmatpush2.msra.mxu0 0.0
    %1583 = vmatprep.subr.mxu0 0.0
    %1584 = vmatpush2.msra.mxu0 0.0
    %1585 = vmatprep.subr.mxu0 0.0
    %1586 = vmatpush2.msra.mxu0 0.0
    %1587 = vmatprep.subr.mxu0 0.0
    %1588 = vmatpush2.msra.mxu0 0.0
    %1589 = vmatprep.subr.mxu0 0.0
    %1590 = vmatpush2.msra.mxu0 0.0
    %1591 = vmatprep.subr.mxu0 0.0
    %1592 = vmatpush2.msra.mxu0 0.0
    %1593 = vmatprep.mubr.f32.mxu0 0.0
    %v1594 = vand.u32 %v24, 4294901760
    %v1595 = vsub.f32 %v24, %v1594
    %1596 = vmatmul.mubr.f32.gmra.mxu0 %v1595
    %v1597 = vpop.f32.mrf.mxu0
    %v1598 = vadd.f32 %v1494, %v1597
    %v1599 = vpop.f32.mrf.mxu0
    %1600 = vdwg.mxu0
    %1601 = vmatprep.subr.mxu0 0.0
    %v1602 = vand.u32 %v705, 4294901760
    %1603 = vmatpush1.msra.mxu0 %v1602
    %1604 = vmatprep.subr.mxu0 0.0
    %v1605 = vand.u32 %v704, 4294901760
    %1606 = vmatpush1.msra.mxu0 %v1605
    %1607 = vmatprep.subr.mxu0 0.0
    %v1608 = vand.u32 %v703, 4294901760
    %1609 = vmatpush1.msra.mxu0 %v1608
    %1610 = vmatprep.subr.mxu0 0.0
    %v1611 = vand.u32 %v702, 4294901760
    %1612 = vmatpush1.msra.mxu0 %v1611
    %1613 = vmatprep.subr.mxu0 0.0
    %v1614 = vand.u32 %v701, 4294901760
    %1615 = vmatpush1.msra.mxu0 %v1614
    %1616 = vmatprep.subr.mxu0 0.0
    %v1617 = vand.u32 %v700, 4294901760
    %1618 = vmatpush1.msra.mxu0 %v1617
    %1619 = vmatprep.subr.mxu0 0.0
    %v1620 = vand.u32 %v699, 4294901760
    %1621 = vmatpush1.msra.mxu0 %v1620
    %1622 = vmatprep.subr.mxu0 0.0
    %v1623 = vand.u32 %v698, 4294901760
    %1624 = vmatpush1.msra.mxu0 %v1623
    %1625 = vmatprep.subr.mxu0 0.0
    %v1626 = vand.u32 %v697, 4294901760
    %1627 = vmatpush1.msra.mxu0 %v1626
    %1628 = vmatprep.subr.mxu0 0.0
    %v1629 = vand.u32 %v696, 4294901760
    %1630 = vmatpush1.msra.mxu0 %v1629
    %1631 = vmatprep.subr.mxu0 0.0
    %v1632 = vand.u32 %v695, 4294901760
    %1633 = vmatpush1.msra.mxu0 %v1632
    %1634 = vmatprep.subr.mxu0 0.0
    %v1635 = vand.u32 %v694, 4294901760
    %1636 = vmatpush1.msra.mxu0 %v1635
    %1637 = vmatprep.subr.mxu0 0.0
    %v1638 = vand.u32 %v693, 4294901760
    %1639 = vmatpush1.msra.mxu0 %v1638
    %1640 = vmatprep.subr.mxu0 0.0
    %v1641 = vand.u32 %v692, 4294901760
    %1642 = vmatpush1.msra.mxu0 %v1641
    %1643 = vmatprep.subr.mxu0 0.0
    %v1644 = vand.u32 %v691, 4294901760
    %1645 = vmatpush1.msra.mxu0 %v1644
    %1646 = vmatprep.subr.mxu0 0.0
    %v1647 = vand.u32 %v690, 4294901760
    %1648 = vmatpush1.msra.mxu0 %v1647
    %1649 = vmatprep.subr.mxu0 0.0
    %1650 = vmatpush2.msra.mxu0 0.0
    %1651 = vmatprep.subr.mxu0 0.0
    %1652 = vmatpush2.msra.mxu0 0.0
    %1653 = vmatprep.subr.mxu0 0.0
    %1654 = vmatpush2.msra.mxu0 0.0
    %1655 = vmatprep.subr.mxu0 0.0
    %1656 = vmatpush2.msra.mxu0 0.0
    %1657 = vmatprep.subr.mxu0 0.0
    %1658 = vmatpush2.msra.mxu0 0.0
    %1659 = vmatprep.subr.mxu0 0.0
    %1660 = vmatpush2.msra.mxu0 0.0
    %1661 = vmatprep.subr.mxu0 0.0
    %1662 = vmatpush2.msra.mxu0 0.0
    %1663 = vmatprep.subr.mxu0 0.0
    %1664 = vmatpush2.msra.mxu0 0.0
    %1665 = vmatprep.subr.mxu0 0.0
    %1666 = vmatpush2.msra.mxu0 0.0
    %1667 = vmatprep.subr.mxu0 0.0
    %1668 = vmatpush2.msra.mxu0 0.0
    %1669 = vmatprep.subr.mxu0 0.0
    %1670 = vmatpush2.msra.mxu0 0.0
    %1671 = vmatprep.subr.mxu0 0.0
    %1672 = vmatpush2.msra.mxu0 0.0
    %1673 = vmatprep.subr.mxu0 0.0
    %1674 = vmatpush2.msra.mxu0 0.0
    %1675 = vmatprep.subr.mxu0 0.0
    %1676 = vmatpush2.msra.mxu0 0.0
    %1677 = vmatprep.subr.mxu0 0.0
    %1678 = vmatpush2.msra.mxu0 0.0
    %1679 = vmatprep.subr.mxu0 0.0
    %1680 = vmatpush2.msra.mxu0 0.0
    %1681 = vmatprep.mubr.f32.mxu0 0.0
    %v1682 = vand.u32 %v24, 4294901760
    %v1683 = vsub.f32 %v24, %v1682
    %v1684 = vand.u32 %v1683, 4294901760
    %1685 = vmatmul.mubr.f32.gmra.mxu0 %v1684
    %v1686 = vpop.f32.mrf.mxu0
    %v1687 = vadd.f32 %v1598, %v1686
    %v1688 = vpop.f32.mrf.mxu0
    %1689 = vdwg.mxu0
    %1690 = vmatprep.subr.mxu0 0.0
    %v1691 = vand.u32 %v705, 4294901760
    %v1692 = vsub.f32 %v705, %v1691
    %v1693 = vand.u32 %v1692, 4294901760
    %1694 = vmatpush1.msra.mxu0 %v1693
    %1695 = vmatprep.subr.mxu0 0.0
    %v1696 = vand.u32 %v704, 4294901760
    %v1697 = vsub.f32 %v704, %v1696
    %v1698 = vand.u32 %v1697, 4294901760
    %1699 = vmatpush1.msra.mxu0 %v1698
    %1700 = vmatprep.subr.mxu0 0.0
    %v1701 = vand.u32 %v703, 4294901760
    %v1702 = vsub.f32 %v703, %v1701
    %v1703 = vand.u32 %v1702, 4294901760
    %1704 = vmatpush1.msra.mxu0 %v1703
    %1705 = vmatprep.subr.mxu0 0.0
    %v1706 = vand.u32 %v702, 4294901760
    %v1707 = vsub.f32 %v702, %v1706
    %v1708 = vand.u32 %v1707, 4294901760
    %1709 = vmatpush1.msra.mxu0 %v1708
    %1710 = vmatprep.subr.mxu0 0.0
    %v1711 = vand.u32 %v701, 4294901760
    %v1712 = vsub.f32 %v701, %v1711
    %v1713 = vand.u32 %v1712, 4294901760
    %1714 = vmatpush1.msra.mxu0 %v1713
    %1715 = vmatprep.subr.mxu0 0.0
    %v1716 = vand.u32 %v700, 4294901760
    %v1717 = vsub.f32 %v700, %v1716
    %v1718 = vand.u32 %v1717, 4294901760
    %1719 = vmatpush1.msra.mxu0 %v1718
    %1720 = vmatprep.subr.mxu0 0.0
    %v1721 = vand.u32 %v699, 4294901760
    %v1722 = vsub.f32 %v699, %v1721
    %v1723 = vand.u32 %v1722, 4294901760
    %1724 = vmatpush1.msra.mxu0 %v1723
    %1725 = vmatprep.subr.mxu0 0.0
    %v1726 = vand.u32 %v698, 4294901760
    %v1727 = vsub.f32 %v698, %v1726
    %v1728 = vand.u32 %v1727, 4294901760
    %1729 = vmatpush1.msra.mxu0 %v1728
    %1730 = vmatprep.subr.mxu0 0.0
    %v1731 = vand.u32 %v697, 4294901760
    %v1732 = vsub.f32 %v697, %v1731
    %v1733 = vand.u32 %v1732, 4294901760
    %1734 = vmatpush1.msra.mxu0 %v1733
    %1735 = vmatprep.subr.mxu0 0.0
    %v1736 = vand.u32 %v696, 4294901760
    %v1737 = vsub.f32 %v696, %v1736
    %v1738 = vand.u32 %v1737, 4294901760
    %1739 = vmatpush1.msra.mxu0 %v1738
    %1740 = vmatprep.subr.mxu0 0.0
    %v1741 = vand.u32 %v695, 4294901760
    %v1742 = vsub.f32 %v695, %v1741
    %v1743 = vand.u32 %v1742, 4294901760
    %1744 = vmatpush1.msra.mxu0 %v1743
    %1745 = vmatprep.subr.mxu0 0.0
    %v1746 = vand.u32 %v694, 4294901760
    %v1747 = vsub.f32 %v694, %v1746
    %v1748 = vand.u32 %v1747, 4294901760
    %1749 = vmatpush1.msra.mxu0 %v1748
    %1750 = vmatprep.subr.mxu0 0.0
    %v1751 = vand.u32 %v693, 4294901760
    %v1752 = vsub.f32 %v693, %v1751
    %v1753 = vand.u32 %v1752, 4294901760
    %1754 = vmatpush1.msra.mxu0 %v1753
    %1755 = vmatprep.subr.mxu0 0.0
    %v1756 = vand.u32 %v692, 4294901760
    %v1757 = vsub.f32 %v692, %v1756
    %v1758 = vand.u32 %v1757, 4294901760
    %1759 = vmatpush1.msra.mxu0 %v1758
    %1760 = vmatprep.subr.mxu0 0.0
    %v1761 = vand.u32 %v691, 4294901760
    %v1762 = vsub.f32 %v691, %v1761
    %v1763 = vand.u32 %v1762, 4294901760
    %1764 = vmatpush1.msra.mxu0 %v1763
    %1765 = vmatprep.subr.mxu0 0.0
    %v1766 = vand.u32 %v690, 4294901760
    %v1767 = vsub.f32 %v690, %v1766
    %v1768 = vand.u32 %v1767, 4294901760
    %1769 = vmatpush1.msra.mxu0 %v1768
    %1770 = vmatprep.subr.mxu0 0.0
    %1771 = vmatpush2.msra.mxu0 0.0
    %1772 = vmatprep.subr.mxu0 0.0
    %1773 = vmatpush2.msra.mxu0 0.0
    %1774 = vmatprep.subr.mxu0 0.0
    %1775 = vmatpush2.msra.mxu0 0.0
    %1776 = vmatprep.subr.mxu0 0.0
    %1777 = vmatpush2.msra.mxu0 0.0
    %1778 = vmatprep.subr.mxu0 0.0
    %1779 = vmatpush2.msra.mxu0 0.0
    %1780 = vmatprep.subr.mxu0 0.0
    %1781 = vmatpush2.msra.mxu0 0.0
    %1782 = vmatprep.subr.mxu0 0.0
    %1783 = vmatpush2.msra.mxu0 0.0
    %1784 = vmatprep.subr.mxu0 0.0
    %1785 = vmatpush2.msra.mxu0 0.0
    %1786 = vmatprep.subr.mxu0 0.0
    %1787 = vmatpush2.msra.mxu0 0.0
    %1788 = vmatprep.subr.mxu0 0.0
    %1789 = vmatpush2.msra.mxu0 0.0
    %1790 = vmatprep.subr.mxu0 0.0
    %1791 = vmatpush2.msra.mxu0 0.0
    %1792 = vmatprep.subr.mxu0 0.0
    %1793 = vmatpush2.msra.mxu0 0.0
    %1794 = vmatprep.subr.mxu0 0.0
    %1795 = vmatpush2.msra.mxu0 0.0
    %1796 = vmatprep.subr.mxu0 0.0
    %1797 = vmatpush2.msra.mxu0 0.0
    %1798 = vmatprep.subr.mxu0 0.0
    %1799 = vmatpush2.msra.mxu0 0.0
    %1800 = vmatprep.subr.mxu0 0.0
    %1801 = vmatpush2.msra.mxu0 0.0
    %1802 = vmatprep.mubr.f32.mxu0 0.0
    %v1803 = vand.u32 %v24, 4294901760
    %1804 = vmatmul.mubr.f32.gmra.mxu0 %v1803
    %v1805 = vpop.f32.mrf.mxu0
    %v1806 = vadd.f32 %v1687, %v1805
    %v1807 = vpop.f32.mrf.mxu0
    %1808 = vdwg.mxu0
    %1809 = vmatprep.subr.mxu0 0.0
    %v1810 = vand.u32 %v705, 4294901760
    %1811 = vmatpush1.msra.mxu0 %v1810
    %1812 = vmatprep.subr.mxu0 0.0
    %v1813 = vand.u32 %v704, 4294901760
    %1814 = vmatpush1.msra.mxu0 %v1813
    %1815 = vmatprep.subr.mxu0 0.0
    %v1816 = vand.u32 %v703, 4294901760
    %1817 = vmatpush1.msra.mxu0 %v1816
    %1818 = vmatprep.subr.mxu0 0.0
    %v1819 = vand.u32 %v702, 4294901760
    %1820 = vmatpush1.msra.mxu0 %v1819
    %1821 = vmatprep.subr.mxu0 0.0
    %v1822 = vand.u32 %v701, 4294901760
    %1823 = vmatpush1.msra.mxu0 %v1822
    %1824 = vmatprep.subr.mxu0 0.0
    %v1825 = vand.u32 %v700, 4294901760
    %1826 = vmatpush1.msra.mxu0 %v1825
    %1827 = vmatprep.subr.mxu0 0.0
    %v1828 = vand.u32 %v699, 4294901760
    %1829 = vmatpush1.msra.mxu0 %v1828
    %1830 = vmatprep.subr.mxu0 0.0
    %v1831 = vand.u32 %v698, 4294901760
    %1832 = vmatpush1.msra.mxu0 %v1831
    %1833 = vmatprep.subr.mxu0 0.0
    %v1834 = vand.u32 %v697, 4294901760
    %1835 = vmatpush1.msra.mxu0 %v1834
    %1836 = vmatprep.subr.mxu0 0.0
    %v1837 = vand.u32 %v696, 4294901760
    %1838 = vmatpush1.msra.mxu0 %v1837
    %1839 = vmatprep.subr.mxu0 0.0
    %v1840 = vand.u32 %v695, 4294901760
    %1841 = vmatpush1.msra.mxu0 %v1840
    %1842 = vmatprep.subr.mxu0 0.0
    %v1843 = vand.u32 %v694, 4294901760
    %1844 = vmatpush1.msra.mxu0 %v1843
    %1845 = vmatprep.subr.mxu0 0.0
    %v1846 = vand.u32 %v693, 4294901760
    %1847 = vmatpush1.msra.mxu0 %v1846
    %1848 = vmatprep.subr.mxu0 0.0
    %v1849 = vand.u32 %v692, 4294901760
    %1850 = vmatpush1.msra.mxu0 %v1849
    %1851 = vmatprep.subr.mxu0 0.0
    %v1852 = vand.u32 %v691, 4294901760
    %1853 = vmatpush1.msra.mxu0 %v1852
    %1854 = vmatprep.subr.mxu0 0.0
    %v1855 = vand.u32 %v690, 4294901760
    %1856 = vmatpush1.msra.mxu0 %v1855
    %1857 = vmatprep.subr.mxu0 0.0
    %1858 = vmatpush2.msra.mxu0 0.0
    %1859 = vmatprep.subr.mxu0 0.0
    %1860 = vmatpush2.msra.mxu0 0.0
    %1861 = vmatprep.subr.mxu0 0.0
    %1862 = vmatpush2.msra.mxu0 0.0
    %1863 = vmatprep.subr.mxu0 0.0
    %1864 = vmatpush2.msra.mxu0 0.0
    %1865 = vmatprep.subr.mxu0 0.0
    %1866 = vmatpush2.msra.mxu0 0.0
    %1867 = vmatprep.subr.mxu0 0.0
    %1868 = vmatpush2.msra.mxu0 0.0
    %1869 = vmatprep.subr.mxu0 0.0
    %1870 = vmatpush2.msra.mxu0 0.0
    %1871 = vmatprep.subr.mxu0 0.0
    %1872 = vmatpush2.msra.mxu0 0.0
    %1873 = vmatprep.subr.mxu0 0.0
    %1874 = vmatpush2.msra.mxu0 0.0
    %1875 = vmatprep.subr.mxu0 0.0
    %1876 = vmatpush2.msra.mxu0 0.0
    %1877 = vmatprep.subr.mxu0 0.0
    %1878 = vmatpush2.msra.mxu0 0.0
    %1879 = vmatprep.subr.mxu0 0.0
    %1880 = vmatpush2.msra.mxu0 0.0
    %1881 = vmatprep.subr.mxu0 0.0
    %1882 = vmatpush2.msra.mxu0 0.0
    %1883 = vmatprep.subr.mxu0 0.0
    %1884 = vmatpush2.msra.mxu0 0.0
    %1885 = vmatprep.subr.mxu0 0.0
    %1886 = vmatpush2.msra.mxu0 0.0
    %1887 = vmatprep.subr.mxu0 0.0
    %1888 = vmatpush2.msra.mxu0 0.0
    %1889 = vmatprep.mubr.f32.mxu0 0.0
    %v1890 = vand.u32 %v24, 4294901760
    %1891 = vmatmul.mubr.f32.gmra.mxu0 %v1890
    %v1892 = vpop.f32.mrf.mxu0
    %v1893 = vadd.f32 %v1806, %v1892
    %v1894 = vpop.f32.mrf.mxu0
    %1895 = vdwg.mxu0
    %v1896 = vld [vmem:[%s5] sm:$0x1]
    %v1898 = vlaneseq
    %v1899 = vshrl.u32 %v1898, 7
    %v1900 = vsub.s32 0, %v1899
    %v1901 = vrot.slane %v1896, %v1900
    %v1903 = vadd.f32 %v1893, %v1901
    %1904 = vst [vmem:[#allocation2] sm:$0x3] %v1903
    // Predicated region
    $region26: #{tpu_custom_call.1} parent=1 // pred_check
      _
    $region27: #{tpu_custom_call.1} parent=1 // pred_check_branch
      %1906 = sbr.rel (0) target = $region29
    $region28: #{tpu_custom_call.1} parent=1 // pred_region
      %s1908 = ssub.s32 32, 32
      %1909 = vsyncadd [#allocation3], %s1908
      %s1911 = sshll.u32 [#allocation2], 4
      %s1912 = int_to_ptr.vmem [resolvable:$true] %s1911
      %1914 = dma.vmem_to_hbm [thread:$0]  %s1912, 32, %s6, [#allocation3]
    $region29: #{tpu_custom_call.1} parent=1 // pred_fallthru
      _
    // Predicated region
    $region30: #{tpu_custom_call.1} parent=1 // pred_check
      _
    $region31: #{tpu_custom_call.1} parent=1 // pred_check_branch
      %1916 = sbr.rel (0) target = $region33
    $region32: #{tpu_custom_call.1} parent=1 // pred_region
      %1917 = dma.done [#allocation3], 32
    $region33: #{tpu_custom_call.1} parent=1 // pred_fallthru
      _
    %1918 = vsyncpa [#allocation3], 1

// kernel: tpu_custom_call.1
$region0: #{tpu_custom_call.1}
  #allocation0 [shape = 'u32[]', space=smem, size = 0x4, offset = 0x4, fixed_abs, tag = 'smem constant byte address 0x4 - core index']
  #allocation1 [shape = 'u32[144,128]{1,0:T(1,128)}', space=vmem, size = 0x12000, scoped, tag = 'internal scratch']
  %s0 = inlined_call_operand.vmem [shape: f32[2,128], index: 0, kind: input, shape index: {}]
  %s1 = inlined_call_operand.vmem [shape: f32[128,64], index: 1, kind: input, shape index: {}]
  %s2 = inlined_call_operand.vmem [shape: f32[1,64], index: 2, kind: input, shape index: {}]
  %s3 = inlined_call_operand.vmem [shape: f32[64,128], index: 3, kind: input, shape index: {}]
  %s4 = inlined_call_operand.vmem [shape: f32[128,128], index: 4, kind: input, shape index: {}]
  %s5 = inlined_call_operand.vmem [shape: f32[1,128], index: 5, kind: input, shape index: {}]
  %s6 = inlined_call_operand.hbm [shape: f32[2,128], index: 6, kind: output, shape index: {}]
  %s7 = sld [smem:[#allocation0]]
  $region34: #{tpu_custom_call.1} parent=0
    _
  %s9 = ssub.s32 1, %s7
  %s10 = scalar_select 0, %s9, %s7
  $region1: #{tpu_custom_call.1} parent=0
    #allocation2 [shape = 'u8[1024]{0}', space=vmem, size = 0x400, scoped, tag = 'output window, operand 0, single buffered']
    #allocation3 [shape = 's32[1]{0}', space=sflag, size = 0x4, scoped, tag = 'scoped memory for tpu_custom_call.1']
    %11 = vsyncpa [#allocation3], 0
    // Predicated region
    $region2: #{tpu_custom_call.1} parent=1 // pred_check
      _
    $region3: #{tpu_custom_call.1} parent=1 // pred_check_branch
      %13 = sbr.rel (0) target = $region5
    $region4: #{tpu_custom_call.1} parent=1 // pred_region
      _
    $region5: #{tpu_custom_call.1} parent=1 // pred_fallthru
      _
    // Predicated region
    $region6: #{tpu_custom_call.1} parent=1 // pred_check
      _
    $region7: #{tpu_custom_call.1} parent=1 // pred_check_branch
      %15 = sbr.rel (0) target = $region9
    $region8: #{tpu_custom_call.1} parent=1 // pred_region
      _
    $region9: #{tpu_custom_call.1} parent=1 // pred_fallthru
      _
    // Predicated region
    $region10: #{tpu_custom_call.1} parent=1 // pred_check
      _
    $region11: #{tpu_custom_call.1} parent=1 // pred_check_branch
      %17 = sbr.rel (0) target = $region13
    $region12: #{tpu_custom_call.1} parent=1 // pred_region
      _
    $region13: #{tpu_custom_call.1} parent=1 // pred_fallthru
      _
    // Predicated region
    $region14: #{tpu_custom_call.1} parent=1 // pred_check
      _
    $region15: #{tpu_custom_call.1} parent=1 // pred_check_branch
      %19 = sbr.rel (0) target = $region17
    $region16: #{tpu_custom_call.1} parent=1 // pred_region
      _
    $region17: #{tpu_custom_call.1} parent=1 // pred_fallthru
      _
    // Predicated region
    $region18: #{tpu_custom_call.1} parent=1 // pred_check
      _
    $region19: #{tpu_custom_call.1} parent=1 // pred_check_branch
      %21 = sbr.rel (0) target = $region21
    $region20: #{tpu_custom_call.1} parent=1 // pred_region
      _
    $region21: #{tpu_custom_call.1} parent=1 // pred_fallthru
      _
    // Predicated region
    $region22: #{tpu_custom_call.1} parent=1 // pred_check
      _
    $region23: #{tpu_custom_call.1} parent=1 // pred_check_branch
      %23 = sbr.rel (0) target = $region25
    $region24: #{tpu_custom_call.1} parent=1 // pred_region
      _
    $region25: #{tpu_custom_call.1} parent=1 // pred_fallthru
      _
    %v24 = vld [vmem:[%s0] sm:$0x3]
    %v25 = vld [vmem:[%s1] sm:$0xff]
    %v26 = vld [vmem:[%s1 + $0x8] sm:$0xff]
    %v27 = vld [vmem:[%s1 + $0x10] sm:$0xff]
    %v28 = vld [vmem:[%s1 + $0x18] sm:$0xff]
    %v29 = vld [vmem:[%s1 + $0x20] sm:$0xff]
    %v30 = vld [vmem:[%s1 + $0x28] sm:$0xff]
    %v31 = vld [vmem:[%s1 + $0x30] sm:$0xff]
    %v32 = vld [vmem:[%s1 + $0x38] sm:$0xff]
    %v33 = vld [vmem:[%s1 + $0x40] sm:$0xff]
    %v34 = vld [vmem:[%s1 + $0x48] sm:$0xff]
    %v35 = vld [vmem:[%s1 + $0x50] sm:$0xff]
    %v36 = vld [vmem:[%s1 + $0x58] sm:$0xff]
    %v37 = vld [vmem:[%s1 + $0x60] sm:$0xff]
    %v38 = vld [vmem:[%s1 + $0x68] sm:$0xff]
    %v39 = vld [vmem:[%s1 + $0x70] sm:$0xff]
    %v40 = vld [vmem:[%s1 + $0x78] sm:$0xff]
    %v41 = vld [vmem:[%s2] sm:$0x1]
    %v43 = vlaneseq
    %v44 = vshrl.u32 %v43, 7
    %v45 = vsub.s32 0, %v44
    %v46 = vrot.slane %v41, %v45
    %48 = vmatprep.subr.mxu0 0.0
    %v49 = vand.u32 %v40, 4294901760
    %50 = vmatpush1.msra.mxu0 %v49
    %51 = vmatprep.subr.mxu0 0.0
    %v52 = vand.u32 %v39, 4294901760
    %53 = vmatpush1.msra.mxu0 %v52
    %54 = vmatprep.subr.mxu0 0.0
    %v55 = vand.u32 %v38, 4294901760
    %56 = vmatpush1.msra.mxu0 %v55
    %57 = vmatprep.subr.mxu0 0.0
    %v58 = vand.u32 %v37, 4294901760
    %59 = vmatpush1.msra.mxu0 %v58
    %60 = vmatprep.subr.mxu0 0.0
    %v61 = vand.u32 %v36, 4294901760
    %62 = vmatpush1.msra.mxu0 %v61
    %63 = vmatprep.subr.mxu0 0.0
    %v64 = vand.u32 %v35, 4294901760
    %65 = vmatpush1.msra.mxu0 %v64
    %66 = vmatprep.subr.mxu0 0.0
    %v67 = vand.u32 %v34, 4294901760
    %68 = vmatpush1.msra.mxu0 %v67
    %69 = vmatprep.subr.mxu0 0.0
    %v70 = vand.u32 %v33, 4294901760
    %71 = vmatpush1.msra.mxu0 %v70
    %72 = vmatprep.subr.mxu0 0.0
    %v73 = vand.u32 %v32, 4294901760
    %74 = vmatpush1.msra.mxu0 %v73
    %75 = vmatprep.subr.mxu0 0.0
    %v76 = vand.u32 %v31, 4294901760
    %77 = vmatpush1.msra.mxu0 %v76
    %78 = vmatprep.subr.mxu0 0.0
    %v79 = vand.u32 %v30, 4294901760
    %80 = vmatpush1.msra.mxu0 %v79
    %81 = vmatprep.subr.mxu0 0.0
    %v82 = vand.u32 %v29, 4294901760
    %83 = vmatpush1.msra.mxu0 %v82
    %84 = vmatprep.subr.mxu0 0.0
    %v85 = vand.u32 %v28, 4294901760
    %86 = vmatpush1.msra.mxu0 %v85
    %87 = vmatprep.subr.mxu0 0.0
    %v88 = vand.u32 %v27, 4294901760
    %89 = vmatpush1.msra.mxu0 %v88
    %90 = vmatprep.subr.mxu0 0.0
    %v91 = vand.u32 %v26, 4294901760
    %92 = vmatpush1.msra.mxu0 %v91
    %93 = vmatprep.subr.mxu0 0.0
    %v94 = vand.u32 %v25, 4294901760
    %95 = vmatpush1.msra.mxu0 %v94
    %96 = vmatprep.subr.mxu0 0.0
    %97 = vmatpush2.msra.mxu0 0.0
    %98 = vmatprep.subr.mxu0 0.0
    %99 = vmatpush2.msra.mxu0 0.0
    %100 = vmatprep.subr.mxu0 0.0
    %101 = vmatpush2.msra.mxu0 0.0
    %102 = vmatprep.subr.mxu0 0.0
    %103 = vmatpush2.msra.mxu0 0.0
    %104 = vmatprep.subr.mxu0 0.0
    %105 = vmatpush2.msra.mxu0 0.0
    %106 = vmatprep.subr.mxu0 0.0
    %107 = vmatpush2.msra.mxu0 0.0
    %108 = vmatprep.subr.mxu0 0.0
    %109 = vmatpush2.msra.mxu0 0.0
    %110 = vmatprep.subr.mxu0 0.0
    %111 = vmatpush2.msra.mxu0 0.0
    %112 = vmatprep.subr.mxu0 0.0
    %113 = vmatpush2.msra.mxu0 0.0
    %114 = vmatprep.subr.mxu0 0.0
    %115 = vmatpush2.msra.mxu0 0.0
    %116 = vmatprep.subr.mxu0 0.0
    %117 = vmatpush2.msra.mxu0 0.0
    %118 = vmatprep.subr.mxu0 0.0
    %119 = vmatpush2.msra.mxu0 0.0
    %120 = vmatprep.subr.mxu0 0.0
    %121 = vmatpush2.msra.mxu0 0.0
    %122 = vmatprep.subr.mxu0 0.0
    %123 = vmatpush2.msra.mxu0 0.0
    %124 = vmatprep.subr.mxu0 0.0
    %125 = vmatpush2.msra.mxu0 0.0
    %126 = vmatprep.subr.mxu0 0.0
    %127 = vmatpush2.msra.mxu0 0.0
    %128 = vmatprep.mubr.f32.mxu0 0.0
    %v129 = vand.u32 %v24, 4294901760
    %v130 = vsub.f32 %v24, %v129
    %v131 = vand.u32 %v130, 4294901760
    %v132 = vsub.f32 %v130, %v131
    %v133 = vand.u32 %v132, 4294901760
    %134 = vmatmul.mubr.f32.gmra.mxu0 %v133
    %v135 = vpop.f32.mrf.mxu0
    %v136 = vadd.f32 %v46, %v135
    %v137 = vpop.f32.mrf.mxu0
    %138 = vdwg.mxu0
    %139 = vmatprep.subr.mxu0 0.0
    %v140 = vand.u32 %v40, 4294901760
    %v141 = vsub.f32 %v40, %v140
    %v142 = vand.u32 %v141, 4294901760
    %v143 = vsub.f32 %v141, %v142
    %v144 = vand.u32 %v143, 4294901760
    %145 = vmatpush1.msra.mxu0 %v144
    %146 = vmatprep.subr.mxu0 0.0
    %v147 = vand.u32 %v39, 4294901760
    %v148 = vsub.f32 %v39, %v147
    %v149 = vand.u32 %v148, 4294901760
    %v150 = vsub.f32 %v148, %v149
    %v151 = vand.u32 %v150, 4294901760
    %152 = vmatpush1.msra.mxu0 %v151
    %153 = vmatprep.subr.mxu0 0.0
    %v154 = vand.u32 %v38, 4294901760
    %v155 = vsub.f32 %v38, %v154
    %v156 = vand.u32 %v155, 4294901760
    %v157 = vsub.f32 %v155, %v156
    %v158 = vand.u32 %v157, 4294901760
    %159 = vmatpush1.msra.mxu0 %v158
    %160 = vmatprep.subr.mxu0 0.0
    %v161 = vand.u32 %v37, 4294901760
    %v162 = vsub.f32 %v37, %v161
    %v163 = vand.u32 %v162, 4294901760
    %v164 = vsub.f32 %v162, %v163
    %v165 = vand.u32 %v164, 4294901760
    %166 = vmatpush1.msra.mxu0 %v165
    %167 = vmatprep.subr.mxu0 0.0
    %v168 = vand.u32 %v36, 4294901760
    %v169 = vsub.f32 %v36, %v168
    %v170 = vand.u32 %v169, 4294901760
    %v171 = vsub.f32 %v169, %v170
    %v172 = vand.u32 %v171, 4294901760
    %173 = vmatpush1.msra.mxu0 %v172
    %174 = vmatprep.subr.mxu0 0.0
    %v175 = vand.u32 %v35, 4294901760
    %v176 = vsub.f32 %v35, %v175
    %v177 = vand.u32 %v176, 4294901760
    %v178 = vsub.f32 %v176, %v177
    %v179 = vand.u32 %v178, 4294901760
    %180 = vmatpush1.msra.mxu0 %v179
    %181 = vmatprep.subr.mxu0 0.0
    %v182 = vand.u32 %v34, 4294901760
    %v183 = vsub.f32 %v34, %v182
    %v184 = vand.u32 %v183, 4294901760
    %v185 = vsub.f32 %v183, %v184
    %v186 = vand.u32 %v185, 4294901760
    %187 = vmatpush1.msra.mxu0 %v186
    %188 = vmatprep.subr.mxu0 0.0
    %v189 = vand.u32 %v33, 4294901760
    %v190 = vsub.f32 %v33, %v189
    %v191 = vand.u32 %v190, 4294901760
    %v192 = vsub.f32 %v190, %v191
    %v193 = vand.u32 %v192, 4294901760
    %194 = vmatpush1.msra.mxu0 %v193
    %195 = vmatprep.subr.mxu0 0.0
    %v196 = vand.u32 %v32, 4294901760
    %v197 = vsub.f32 %v32, %v196
    %v198 = vand.u32 %v197, 4294901760
    %v199 = vsub.f32 %v197, %v198
    %v200 = vand.u32 %v199, 4294901760
    %201 = vmatpush1.msra.mxu0 %v200
    %202 = vmatprep.subr.mxu0 0.0
    %v203 = vand.u32 %v31, 4294901760
    %v204 = vsub.f32 %v31, %v203
    %v205 = vand.u32 %v204, 4294901760
    %v206 = vsub.f32 %v204, %v205
    %v207 = vand.u32 %v206, 4294901760
    %208 = vmatpush1.msra.mxu0 %v207
    %209 = vmatprep.subr.mxu0 0.0
    %v210 = vand.u32 %v30, 4294901760
    %v211 = vsub.f32 %v30, %v210
    %v212 = vand.u32 %v211, 4294901760
    %v213 = vsub.f32 %v211, %v212
    %v214 = vand.u32 %v213, 4294901760
    %215 = vmatpush1.msra.mxu0 %v214
    %216 = vmatprep.subr.mxu0 0.0
    %v217 = vand.u32 %v29, 4294901760
    %v218 = vsub.f32 %v29, %v217
    %v219 = vand.u32 %v218, 4294901760
    %v220 = vsub.f32 %v218, %v219
    %v221 = vand.u32 %v220, 4294901760
    %222 = vmatpush1.msra.mxu0 %v221
    %223 = vmatprep.subr.mxu0 0.0
    %v224 = vand.u32 %v28, 4294901760
    %v225 = vsub.f32 %v28, %v224
    %v226 = vand.u32 %v225, 4294901760
    %v227 = vsub.f32 %v225, %v226
    %v228 = vand.u32 %v227, 4294901760
    %229 = vmatpush1.msra.mxu0 %v228
    %230 = vmatprep.subr.mxu0 0.0
    %v231 = vand.u32 %v27, 4294901760
    %v232 = vsub.f32 %v27, %v231
    %v233 = vand.u32 %v232, 4294901760
    %v234 = vsub.f32 %v232, %v233
    %v235 = vand.u32 %v234, 4294901760
    %236 = vmatpush1.msra.mxu0 %v235
    %237 = vmatprep.subr.mxu0 0.0
    %v238 = vand.u32 %v26, 4294901760
    %v239 = vsub.f32 %v26, %v238
    %v240 = vand.u32 %v239, 4294901760
    %v241 = vsub.f32 %v239, %v240
    %v242 = vand.u32 %v241, 4294901760
    %243 = vmatpush1.msra.mxu0 %v242
    %244 = vmatprep.subr.mxu0 0.0
    %v245 = vand.u32 %v25, 4294901760
    %v246 = vsub.f32 %v25, %v245
    %v247 = vand.u32 %v246, 4294901760
    %v248 = vsub.f32 %v246, %v247
    %v249 = vand.u32 %v248, 4294901760
    %250 = vmatpush1.msra.mxu0 %v249
    %251 = vmatprep.subr.mxu0 0.0
    %252 = vmatpush2.msra.mxu0 0.0
    %253 = vmatprep.subr.mxu0 0.0
    %254 = vmatpush2.msra.mxu0 0.0
    %255 = vmatprep.subr.mxu0 0.0
    %256 = vmatpush2.msra.mxu0 0.0
    %257 = vmatprep.subr.mxu0 0.0
    %258 = vmatpush2.msra.mxu0 0.0
    %259 = vmatprep.subr.mxu0 0.0
    %260 = vmatpush2.msra.mxu0 0.0
    %261 = vmatprep.subr.mxu0 0.0
    %262 = vmatpush2.msra.mxu0 0.0
    %263 = vmatprep.subr.mxu0 0.0
    %264 = vmatpush2.msra.mxu0 0.0
    %265 = vmatprep.subr.mxu0 0.0
    %266 = vmatpush2.msra.mxu0 0.0
    %267 = vmatprep.subr.mxu0 0.0
    %268 = vmatpush2.msra.mxu0 0.0
    %269 = vmatprep.subr.mxu0 0.0
    %270 = vmatpush2.msra.mxu0 0.0
    %271 = vmatprep.subr.mxu0 0.0
    %272 = vmatpush2.msra.mxu0 0.0
    %273 = vmatprep.subr.mxu0 0.0
    %274 = vmatpush2.msra.mxu0 0.0
    %275 = vmatprep.subr.mxu0 0.0
    %276 = vmatpush2.msra.mxu0 0.0
    %277 = vmatprep.subr.mxu0 0.0
    %278 = vmatpush2.msra.mxu0 0.0
    %279 = vmatprep.subr.mxu0 0.0
    %280 = vmatpush2.msra.mxu0 0.0
    %281 = vmatprep.subr.mxu0 0.0
    %282 = vmatpush2.msra.mxu0 0.0
    %283 = vmatprep.mubr.f32.mxu0 0.0
    %v284 = vand.u32 %v24, 4294901760
    %285 = vmatmul.mubr.f32.gmra.mxu0 %v284
    %v286 = vpop.f32.mrf.mxu0
    %v287 = vadd.f32 %v136, %v286
    %v288 = vpop.f32.mrf.mxu0
    %289 = vdwg.mxu0
    %290 = vmatprep.subr.mxu0 0.0
    %v291 = vand.u32 %v40, 4294901760
    %v292 = vsub.f32 %v40, %v291
    %293 = vmatpush1.msra.mxu0 %v292
    %294 = vmatprep.subr.mxu0 0.0
    %v295 = vand.u32 %v39, 4294901760
    %v296 = vsub.f32 %v39, %v295
    %297 = vmatpush1.msra.mxu0 %v296
    %298 = vmatprep.subr.mxu0 0.0
    %v299 = vand.u32 %v38, 4294901760
    %v300 = vsub.f32 %v38, %v299
    %301 = vmatpush1.msra.mxu0 %v300
    %302 = vmatprep.subr.mxu0 0.0
    %v303 = vand.u32 %v37, 4294901760
    %v304 = vsub.f32 %v37, %v303
    %305 = vmatpush1.msra.mxu0 %v304
    %306 = vmatprep.subr.mxu0 0.0
    %v307 = vand.u32 %v36, 4294901760
    %v308 = vsub.f32 %v36, %v307
    %309 = vmatpush1.msra.mxu0 %v308
    %310 = vmatprep.subr.mxu0 0.0
    %v311 = vand.u32 %v35, 4294901760
    %v312 = vsub.f32 %v35, %v311
    %313 = vmatpush1.msra.mxu0 %v312
    %314 = vmatprep.subr.mxu0 0.0
    %v315 = vand.u32 %v34, 4294901760
    %v316 = vsub.f32 %v34, %v315
    %317 = vmatpush1.msra.mxu0 %v316
    %318 = vmatprep.subr.mxu0 0.0
    %v319 = vand.u32 %v33, 4294901760
    %v320 = vsub.f32 %v33, %v319
    %321 = vmatpush1.msra.mxu0 %v320
    %322 = vmatprep.subr.mxu0 0.0
    %v323 = vand.u32 %v32, 4294901760
    %v324 = vsub.f32 %v32, %v323
    %325 = vmatpush1.msra.mxu0 %v324
    %326 = vmatprep.subr.mxu0 0.0
    %v327 = vand.u32 %v31, 4294901760
    %v328 = vsub.f32 %v31, %v327
    %329 = vmatpush1.msra.mxu0 %v328
    %330 = vmatprep.subr.mxu0 0.0
    %v331 = vand.u32 %v30, 4294901760
    %v332 = vsub.f32 %v30, %v331
    %333 = vmatpush1.msra.mxu0 %v332
    %334 = vmatprep.subr.mxu0 0.0
    %v335 = vand.u32 %v29, 4294901760
    %v336 = vsub.f32 %v29, %v335
    %337 = vmatpush1.msra.mxu0 %v336
    %338 = vmatprep.subr.mxu0 0.0
    %v339 = vand.u32 %v28, 4294901760
    %v340 = vsub.f32 %v28, %v339
    %341 = vmatpush1.msra.mxu0 %v340
    %342 = vmatprep.subr.mxu0 0.0
    %v343 = vand.u32 %v27, 4294901760
    %v344 = vsub.f32 %v27, %v343
    %345 = vmatpush1.msra.mxu0 %v344
    %346 = vmatprep.subr.mxu0 0.0
    %v347 = vand.u32 %v26, 4294901760
    %v348 = vsub.f32 %v26, %v347
    %349 = vmatpush1.msra.mxu0 %v348
    %350 = vmatprep.subr.mxu0 0.0
    %v351 = vand.u32 %v25, 4294901760
    %v352 = vsub.f32 %v25, %v351
    %353 = vmatpush1.msra.mxu0 %v352
    %354 = vmatprep.subr.mxu0 0.0
    %355 = vmatpush2.msra.mxu0 0.0
    %356 = vmatprep.subr.mxu0 0.0
    %357 = vmatpush2.msra.mxu0 0.0
    %358 = vmatprep.subr.mxu0 0.0
    %359 = vmatpush2.msra.mxu0 0.0
    %360 = vmatprep.subr.mxu0 0.0
    %361 = vmatpush2.msra.mxu0 0.0
    %362 = vmatprep.subr.mxu0 0.0
    %363 = vmatpush2.msra.mxu0 0.0
    %364 = vmatprep.subr.mxu0 0.0
    %365 = vmatpush2.msra.mxu0 0.0
    %366 = vmatprep.subr.mxu0 0.0
    %367 = vmatpush2.msra.mxu0 0.0
    %368 = vmatprep.subr.mxu0 0.0
    %369 = vmatpush2.msra.mxu0 0.0
    %370 = vmatprep.subr.mxu0 0.0
    %371 = vmatpush2.msra.mxu0 0.0
    %372 = vmatprep.subr.mxu0 0.0
    %373 = vmatpush2.msra.mxu0 0.0
    %374 = vmatprep.subr.mxu0 0.0
    %375 = vmatpush2.msra.mxu0 0.0
    %376 = vmatprep.subr.mxu0 0.0
    %377 = vmatpush2.msra.mxu0 0.0
    %378 = vmatprep.subr.mxu0 0.0
    %379 = vmatpush2.msra.mxu0 0.0
    %380 = vmatprep.subr.mxu0 0.0
    %381 = vmatpush2.msra.mxu0 0.0
    %382 = vmatprep.subr.mxu0 0.0
    %383 = vmatpush2.msra.mxu0 0.0
    %384 = vmatprep.subr.mxu0 0.0
    %385 = vmatpush2.msra.mxu0 0.0
    %386 = vmatprep.mubr.f32.mxu0 0.0
    %v387 = vand.u32 %v24, 4294901760
    %v388 = vsub.f32 %v24, %v387
    %389 = vmatmul.mubr.f32.gmra.mxu0 %v388
    %v390 = vpop.f32.mrf.mxu0
    %v391 = vadd.f32 %v287, %v390
    %v392 = vpop.f32.mrf.mxu0
    %393 = vdwg.mxu0
    %394 = vmatprep.subr.mxu0 0.0
    %v395 = vand.u32 %v40, 4294901760
    %396 = vmatpush1.msra.mxu0 %v395
    %397 = vmatprep.subr.mxu0 0.0
    %v398 = vand.u32 %v39, 4294901760
    %399 = vmatpush1.msra.mxu0 %v398
    %400 = vmatprep.subr.mxu0 0.0
    %v401 = vand.u32 %v38, 4294901760
    %402 = vmatpush1.msra.mxu0 %v401
    %403 = vmatprep.subr.mxu0 0.0
    %v404 = vand.u32 %v37, 4294901760
    %405 = vmatpush1.msra.mxu0 %v404
    %406 = vmatprep.subr.mxu0 0.0
    %v407 = vand.u32 %v36, 4294901760
    %408 = vmatpush1.msra.mxu0 %v407
    %409 = vmatprep.subr.mxu0 0.0
    %v410 = vand.u32 %v35, 4294901760
    %411 = vmatpush1.msra.mxu0 %v410
    %412 = vmatprep.subr.mxu0 0.0
    %v413 = vand.u32 %v34, 4294901760
    %414 = vmatpush1.msra.mxu0 %v413
    %415 = vmatprep.subr.mxu0 0.0
    %v416 = vand.u32 %v33, 4294901760
    %417 = vmatpush1.msra.mxu0 %v416
    %418 = vmatprep.subr.mxu0 0.0
    %v419 = vand.u32 %v32, 4294901760
    %420 = vmatpush1.msra.mxu0 %v419
    %421 = vmatprep.subr.mxu0 0.0
    %v422 = vand.u32 %v31, 4294901760
    %423 = vmatpush1.msra.mxu0 %v422
    %424 = vmatprep.subr.mxu0 0.0
    %v425 = vand.u32 %v30, 4294901760
    %426 = vmatpush1.msra.mxu0 %v425
    %427 = vmatprep.subr.mxu0 0.0
    %v428 = vand.u32 %v29, 4294901760
    %429 = vmatpush1.msra.mxu0 %v428
    %430 = vmatprep.subr.mxu0 0.0
    %v431 = vand.u32 %v28, 4294901760
    %432 = vmatpush1.msra.mxu0 %v431
    %433 = vmatprep.subr.mxu0 0.0
    %v434 = vand.u32 %v27, 4294901760
    %435 = vmatpush1.msra.mxu0 %v434
    %436 = vmatprep.subr.mxu0 0.0
    %v437 = vand.u32 %v26, 4294901760
    %438 = vmatpush1.msra.mxu0 %v437
    %439 = vmatprep.subr.mxu0 0.0
    %v440 = vand.u32 %v25, 4294901760
    %441 = vmatpush1.msra.mxu0 %v440
    %442 = vmatprep.subr.mxu0 0.0
    %443 = vmatpush2.msra.mxu0 0.0
    %444 = vmatprep.subr.mxu0 0.0
    %445 = vmatpush2.msra.mxu0 0.0
    %446 = vmatprep.subr.mxu0 0.0
    %447 = vmatpush2.msra.mxu0 0.0
    %448 = vmatprep.subr.mxu0 0.0
    %449 = vmatpush2.msra.mxu0 0.0
    %450 = vmatprep.subr.mxu0 0.0
    %451 = vmatpush2.msra.mxu0 0.0
    %452 = vmatprep.subr.mxu0 0.0
    %453 = vmatpush2.msra.mxu0 0.0
    %454 = vmatprep.subr.mxu0 0.0
    %455 = vmatpush2.msra.mxu0 0.0
    %456 = vmatprep.subr.mxu0 0.0
    %457 = vmatpush2.msra.mxu0 0.0
    %458 = vmatprep.subr.mxu0 0.0
    %459 = vmatpush2.msra.mxu0 0.0
    %460 = vmatprep.subr.mxu0 0.0
    %461 = vmatpush2.msra.mxu0 0.0
    %462 = vmatprep.subr.mxu0 0.0
    %463 = vmatpush2.msra.mxu0 0.0
    %464 = vmatprep.subr.mxu0 0.0
    %465 = vmatpush2.msra.mxu0 0.0
    %466 = vmatprep.subr.mxu0 0.0
    %467 = vmatpush2.msra.mxu0 0.0
    %468 = vmatprep.subr.mxu0 0.0
    %469 = vmatpush2.msra.mxu0 0.0
    %470 = vmatprep.subr.mxu0 0.0
    %471 = vmatpush2.msra.mxu0 0.0
    %472 = vmatprep.subr.mxu0 0.0
    %473 = vmatpush2.msra.mxu0 0.0
    %474 = vmatprep.mubr.f32.mxu0 0.0
    %v475 = vand.u32 %v24, 4294901760
    %v476 = vsub.f32 %v24, %v475
    %v477 = vand.u32 %v476, 4294901760
    %478 = vmatmul.mubr.f32.gmra.mxu0 %v477
    %v479 = vpop.f32.mrf.mxu0
    %v480 = vadd.f32 %v391, %v479
    %v481 = vpop.f32.mrf.mxu0
    %482 = vdwg.mxu0
    %483 = vmatprep.subr.mxu0 0.0
    %v484 = vand.u32 %v40, 4294901760
    %v485 = vsub.f32 %v40, %v484
    %v486 = vand.u32 %v485, 4294901760
    %487 = vmatpush1.msra.mxu0 %v486
    %488 = vmatprep.subr.mxu0 0.0
    %v489 = vand.u32 %v39, 4294901760
    %v490 = vsub.f32 %v39, %v489
    %v491 = vand.u32 %v490, 4294901760
    %492 = vmatpush1.msra.mxu0 %v491
    %493 = vmatprep.subr.mxu0 0.0
    %v494 = vand.u32 %v38, 4294901760
    %v495 = vsub.f32 %v38, %v494
    %v496 = vand.u32 %v495, 4294901760
    %497 = vmatpush1.msra.mxu0 %v496
    %498 = vmatprep.subr.mxu0 0.0
    %v499 = vand.u32 %v37, 4294901760
    %v500 = vsub.f32 %v37, %v499
    %v501 = vand.u32 %v500, 4294901760
    %502 = vmatpush1.msra.mxu0 %v501
    %503 = vmatprep.subr.mxu0 0.0
    %v504 = vand.u32 %v36, 4294901760
    %v505 = vsub.f32 %v36, %v504
    %v506 = vand.u32 %v505, 4294901760
    %507 = vmatpush1.msra.mxu0 %v506
    %508 = vmatprep.subr.mxu0 0.0
    %v509 = vand.u32 %v35, 4294901760
    %v510 = vsub.f32 %v35, %v509
    %v511 = vand.u32 %v510, 4294901760
    %512 = vmatpush1.msra.mxu0 %v511
    %513 = vmatprep.subr.mxu0 0.0
    %v514 = vand.u32 %v34, 4294901760
    %v515 = vsub.f32 %v34, %v514
    %v516 = vand.u32 %v515, 4294901760
    %517 = vmatpush1.msra.mxu0 %v516
    %518 = vmatprep.subr.mxu0 0.0
    %v519 = vand.u32 %v33, 4294901760
    %v520 = vsub.f32 %v33, %v519
    %v521 = vand.u32 %v520, 4294901760
    %522 = vmatpush1.msra.mxu0 %v521
    %523 = vmatprep.subr.mxu0 0.0
    %v524 = vand.u32 %v32, 4294901760
    %v525 = vsub.f32 %v32, %v524
    %v526 = vand.u32 %v525, 4294901760
    %527 = vmatpush1.msra.mxu0 %v526
    %528 = vmatprep.subr.mxu0 0.0
    %v529 = vand.u32 %v31, 4294901760
    %v530 = vsub.f32 %v31, %v529
    %v531 = vand.u32 %v530, 4294901760
    %532 = vmatpush1.msra.mxu0 %v531
    %533 = vmatprep.subr.mxu0 0.0
    %v534 = vand.u32 %v30, 4294901760
    %v535 = vsub.f32 %v30, %v534
    %v536 = vand.u32 %v535, 4294901760
    %537 = vmatpush1.msra.mxu0 %v536
    %538 = vmatprep.subr.mxu0 0.0
    %v539 = vand.u32 %v29, 4294901760
    %v540 = vsub.f32 %v29, %v539
    %v541 = vand.u32 %v540, 4294901760
    %542 = vmatpush1.msra.mxu0 %v541
    %543 = vmatprep.subr.mxu0 0.0
    %v544 = vand.u32 %v28, 4294901760
    %v545 = vsub.f32 %v28, %v544
    %v546 = vand.u32 %v545, 4294901760
    %547 = vmatpush1.msra.mxu0 %v546
    %548 = vmatprep.subr.mxu0 0.0
    %v549 = vand.u32 %v27, 4294901760
    %v550 = vsub.f32 %v27, %v549
    %v551 = vand.u32 %v550, 4294901760
    %552 = vmatpush1.msra.mxu0 %v551
    %553 = vmatprep.subr.mxu0 0.0
    %v554 = vand.u32 %v26, 4294901760
    %v555 = vsub.f32 %v26, %v554
    %v556 = vand.u32 %v555, 4294901760
    %557 = vmatpush1.msra.mxu0 %v556
    %558 = vmatprep.subr.mxu0 0.0
    %v559 = vand.u32 %v25, 4294901760
    %v560 = vsub.f32 %v25, %v559
    %v561 = vand.u32 %v560, 4294901760
    %562 = vmatpush1.msra.mxu0 %v561
    %563 = vmatprep.subr.mxu0 0.0
    %564 = vmatpush2.msra.mxu0 0.0
    %565 = vmatprep.subr.mxu0 0.0
    %566 = vmatpush2.msra.mxu0 0.0
    %567 = vmatprep.subr.mxu0 0.0
    %568 = vmatpush2.msra.mxu0 0.0
    %569 = vmatprep.subr.mxu0 0.0
    %570 = vmatpush2.msra.mxu0 0.0
    %571 = vmatprep.subr.mxu0 0.0
    %572 = vmatpush2.msra.mxu0 0.0
    %573 = vmatprep.subr.mxu0 0.0
    %574 = vmatpush2.msra.mxu0 0.0
    %575 = vmatprep.subr.mxu0 0.0
    %576 = vmatpush2.msra.mxu0 0.0
    %577 = vmatprep.subr.mxu0 0.0
    %578 = vmatpush2.msra.mxu0 0.0
    %579 = vmatprep.subr.mxu0 0.0
    %580 = vmatpush2.msra.mxu0 0.0
    %581 = vmatprep.subr.mxu0 0.0
    %582 = vmatpush2.msra.mxu0 0.0
    %583 = vmatprep.subr.mxu0 0.0
    %584 = vmatpush2.msra.mxu0 0.0
    %585 = vmatprep.subr.mxu0 0.0
    %586 = vmatpush2.msra.mxu0 0.0
    %587 = vmatprep.subr.mxu0 0.0
    %588 = vmatpush2.msra.mxu0 0.0
    %589 = vmatprep.subr.mxu0 0.0
    %590 = vmatpush2.msra.mxu0 0.0
    %591 = vmatprep.subr.mxu0 0.0
    %592 = vmatpush2.msra.mxu0 0.0
    %593 = vmatprep.subr.mxu0 0.0
    %594 = vmatpush2.msra.mxu0 0.0
    %595 = vmatprep.mubr.f32.mxu0 0.0
    %v596 = vand.u32 %v24, 4294901760
    %597 = vmatmul.mubr.f32.gmra.mxu0 %v596
    %v598 = vpop.f32.mrf.mxu0
    %v599 = vadd.f32 %v480, %v598
    %v600 = vpop.f32.mrf.mxu0
    %601 = vdwg.mxu0
    %602 = vmatprep.subr.mxu0 0.0
    %v603 = vand.u32 %v40, 4294901760
    %604 = vmatpush1.msra.mxu0 %v603
    %605 = vmatprep.subr.mxu0 0.0
    %v606 = vand.u32 %v39, 4294901760
    %607 = vmatpush1.msra.mxu0 %v606
    %608 = vmatprep.subr.mxu0 0.0
    %v609 = vand.u32 %v38, 4294901760
    %610 = vmatpush1.msra.mxu0 %v609
    %611 = vmatprep.subr.mxu0 0.0
    %v612 = vand.u32 %v37, 4294901760
    %613 = vmatpush1.msra.mxu0 %v612
    %614 = vmatprep.subr.mxu0 0.0
    %v615 = vand.u32 %v36, 4294901760
    %616 = vmatpush1.msra.mxu0 %v615
    %617 = vmatprep.subr.mxu0 0.0
    %v618 = vand.u32 %v35, 4294901760
    %619 = vmatpush1.msra.mxu0 %v618
    %620 = vmatprep.subr.mxu0 0.0
    %v621 = vand.u32 %v34, 4294901760
    %622 = vmatpush1.msra.mxu0 %v621
    %623 = vmatprep.subr.mxu0 0.0
    %v624 = vand.u32 %v33, 4294901760
    %625 = vmatpush1.msra.mxu0 %v624
    %626 = vmatprep.subr.mxu0 0.0
    %v627 = vand.u32 %v32, 4294901760
    %628 = vmatpush1.msra.mxu0 %v627
    %629 = vmatprep.subr.mxu0 0.0
    %v630 = vand.u32 %v31, 4294901760
    %631 = vmatpush1.msra.mxu0 %v630
    %632 = vmatprep.subr.mxu0 0.0
    %v633 = vand.u32 %v30, 4294901760
    %634 = vmatpush1.msra.mxu0 %v633
    %635 = vmatprep.subr.mxu0 0.0
    %v636 = vand.u32 %v29, 4294901760
    %637 = vmatpush1.msra.mxu0 %v636
    %638 = vmatprep.subr.mxu0 0.0
    %v639 = vand.u32 %v28, 4294901760
    %640 = vmatpush1.msra.mxu0 %v639
    %641 = vmatprep.subr.mxu0 0.0
    %v642 = vand.u32 %v27, 4294901760
    %643 = vmatpush1.msra.mxu0 %v642
    %644 = vmatprep.subr.mxu0 0.0
    %v645 = vand.u32 %v26, 4294901760
    %646 = vmatpush1.msra.mxu0 %v645
    %647 = vmatprep.subr.mxu0 0.0
    %v648 = vand.u32 %v25, 4294901760
    %649 = vmatpush1.msra.mxu0 %v648
    %650 = vmatprep.subr.mxu0 0.0
    %651 = vmatpush2.msra.mxu0 0.0
    %652 = vmatprep.subr.mxu0 0.0
    %653 = vmatpush2.msra.mxu0 0.0
    %654 = vmatprep.subr.mxu0 0.0
    %655 = vmatpush2.msra.mxu0 0.0
    %656 = vmatprep.subr.mxu0 0.0
    %657 = vmatpush2.msra.mxu0 0.0
    %658 = vmatprep.subr.mxu0 0.0
    %659 = vmatpush2.msra.mxu0 0.0
    %660 = vmatprep.subr.mxu0 0.0
    %661 = vmatpush2.msra.mxu0 0.0
    %662 = vmatprep.subr.mxu0 0.0
    %663 = vmatpush2.msra.mxu0 0.0
    %664 = vmatprep.subr.mxu0 0.0
    %665 = vmatpush2.msra.mxu0 0.0
    %666 = vmatprep.subr.mxu0 0.0
    %667 = vmatpush2.msra.mxu0 0.0
    %668 = vmatprep.subr.mxu0 0.0
    %669 = vmatpush2.msra.mxu0 0.0
    %670 = vmatprep.subr.mxu0 0.0
    %671 = vmatpush2.msra.mxu0 0.0
    %672 = vmatprep.subr.mxu0 0.0
    %673 = vmatpush2.msra.mxu0 0.0
    %674 = vmatprep.subr.mxu0 0.0
    %675 = vmatpush2.msra.mxu0 0.0
    %676 = vmatprep.subr.mxu0 0.0
    %677 = vmatpush2.msra.mxu0 0.0
    %678 = vmatprep.subr.mxu0 0.0
    %679 = vmatpush2.msra.mxu0 0.0
    %680 = vmatprep.subr.mxu0 0.0
    %681 = vmatpush2.msra.mxu0 0.0
    %682 = vmatprep.mubr.f32.mxu0 0.0
    %v683 = vand.u32 %v24, 4294901760
    %684 = vmatmul.mubr.f32.gmra.mxu0 %v683
    %v685 = vpop.f32.mrf.mxu0
    %v686 = vadd.f32 %v599, %v685
    %v687 = vpop.f32.mrf.mxu0
    %688 = vdwg.mxu0
    %v689 = vmax.f32 %v686, 0.0
    %v690 = vld [vmem:[%s4] sm:$0xff]
    %v691 = vld [vmem:[%s4 + $0x8] sm:$0xff]
    %v692 = vld [vmem:[%s4 + $0x10] sm:$0xff]
    %v693 = vld [vmem:[%s4 + $0x18] sm:$0xff]
    %v694 = vld [vmem:[%s4 + $0x20] sm:$0xff]
    %v695 = vld [vmem:[%s4 + $0x28] sm:$0xff]
    %v696 = vld [vmem:[%s4 + $0x30] sm:$0xff]
    %v697 = vld [vmem:[%s4 + $0x38] sm:$0xff]
    %v698 = vld [vmem:[%s4 + $0x40] sm:$0xff]
    %v699 = vld [vmem:[%s4 + $0x48] sm:$0xff]
    %v700 = vld [vmem:[%s4 + $0x50] sm:$0xff]
    %v701 = vld [vmem:[%s4 + $0x58] sm:$0xff]
    %v702 = vld [vmem:[%s4 + $0x60] sm:$0xff]
    %v703 = vld [vmem:[%s4 + $0x68] sm:$0xff]
    %v704 = vld [vmem:[%s4 + $0x70] sm:$0xff]
    %v705 = vld [vmem:[%s4 + $0x78] sm:$0xff]
    %v706 = vld [vmem:[%s3] sm:$0xff]
    %v707 = vld [vmem:[%s3 + $0x8] sm:$0xff]
    %v708 = vld [vmem:[%s3 + $0x10] sm:$0xff]
    %v709 = vld [vmem:[%s3 + $0x18] sm:$0xff]
    %v710 = vld [vmem:[%s3 + $0x20] sm:$0xff]
    %v711 = vld [vmem:[%s3 + $0x28] sm:$0xff]
    %v712 = vld [vmem:[%s3 + $0x30] sm:$0xff]
    %v713 = vld [vmem:[%s3 + $0x38] sm:$0xff]
    %vm714 = vcmask 523264
    %v716 = vsel %vm714, %v689, 0
    %718 = vmatprep.subr.mxu0 0.0
    %719 = vmatpush1.msra.mxu0 0.0
    %720 = vmatprep.subr.mxu0 0.0
    %721 = vmatpush1.msra.mxu0 0.0
    %722 = vmatprep.subr.mxu0 0.0
    %723 = vmatpush1.msra.mxu0 0.0
    %724 = vmatprep.subr.mxu0 0.0
    %725 = vmatpush1.msra.mxu0 0.0
    %726 = vmatprep.subr.mxu0 0.0
    %727 = vmatpush1.msra.mxu0 0.0
    %728 = vmatprep.subr.mxu0 0.0
    %729 = vmatpush1.msra.mxu0 0.0
    %730 = vmatprep.subr.mxu0 0.0
    %731 = vmatpush1.msra.mxu0 0.0
    %732 = vmatprep.subr.mxu0 0.0
    %733 = vmatpush1.msra.mxu0 0.0
    %734 = vmatprep.subr.mxu0 0.0
    %v735 = vand.u32 %v713, 4294901760
    %736 = vmatpush1.msra.mxu0 %v735
    %737 = vmatprep.subr.mxu0 0.0
    %v738 = vand.u32 %v712, 4294901760
    %739 = vmatpush1.msra.mxu0 %v738
    %740 = vmatprep.subr.mxu0 0.0
    %v741 = vand.u32 %v711, 4294901760
    %742 = vmatpush1.msra.mxu0 %v741
    %743 = vmatprep.subr.mxu0 0.0
    %v744 = vand.u32 %v710, 4294901760
    %745 = vmatpush1.msra.mxu0 %v744
    %746 = vmatprep.subr.mxu0 0.0
    %v747 = vand.u32 %v709, 4294901760
    %748 = vmatpush1.msra.mxu0 %v747
    %749 = vmatprep.subr.mxu0 0.0
    %v750 = vand.u32 %v708, 4294901760
    %751 = vmatpush1.msra.mxu0 %v750
    %752 = vmatprep.subr.mxu0 0.0
    %v753 = vand.u32 %v707, 4294901760
    %754 = vmatpush1.msra.mxu0 %v753
    %755 = vmatprep.subr.mxu0 0.0
    %v756 = vand.u32 %v706, 4294901760
    %757 = vmatpush1.msra.mxu0 %v756
    %758 = vmatprep.subr.mxu0 0.0
    %759 = vmatpush2.msra.mxu0 0.0
    %760 = vmatprep.subr.mxu0 0.0
    %761 = vmatpush2.msra.mxu0 0.0
    %762 = vmatprep.subr.mxu0 0.0
    %763 = vmatpush2.msra.mxu0 0.0
    %764 = vmatprep.subr.mxu0 0.0
    %765 = vmatpush2.msra.mxu0 0.0
    %766 = vmatprep.subr.mxu0 0.0
    %767 = vmatpush2.msra.mxu0 0.0
    %768 = vmatprep.subr.mxu0 0.0
    %769 = vmatpush2.msra.mxu0 0.0
    %770 = vmatprep.subr.mxu0 0.0
    %771 = vmatpush2.msra.mxu0 0.0
    %772 = vmatprep.subr.mxu0 0.0
    %773 = vmatpush2.msra.mxu0 0.0
    %774 = vmatprep.subr.mxu0 0.0
    %775 = vmatpush2.msra.mxu0 0.0
    %776 = vmatprep.subr.mxu0 0.0
    %777 = vmatpush2.msra.mxu0 0.0
    %778 = vmatprep.subr.mxu0 0.0
    %779 = vmatpush2.msra.mxu0 0.0
    %780 = vmatprep.subr.mxu0 0.0
    %781 = vmatpush2.msra.mxu0 0.0
    %782 = vmatprep.subr.mxu0 0.0
    %783 = vmatpush2.msra.mxu0 0.0
    %784 = vmatprep.subr.mxu0 0.0
    %785 = vmatpush2.msra.mxu0 0.0
    %786 = vmatprep.subr.mxu0 0.0
    %787 = vmatpush2.msra.mxu0 0.0
    %788 = vmatprep.subr.mxu0 0.0
    %789 = vmatpush2.msra.mxu0 0.0
    %790 = vmatprep.mubr.f32.mxu0 0.0
    %v791 = vand.u32 %v716, 4294901760
    %v792 = vsub.f32 %v716, %v791
    %v793 = vand.u32 %v792, 4294901760
    %v794 = vsub.f32 %v792, %v793
    %v795 = vand.u32 %v794, 4294901760
    %796 = vmatmul.mubr.f32.gmra.mxu0 %v795
    %v797 = vpop.f32.mrf.mxu0
    %v798 = vadd.f32 0.0, %v797
    %v799 = vpop.f32.mrf.mxu0
    %800 = vdwg.mxu0
    %801 = vmatprep.subr.mxu0 0.0
    %802 = vmatpush1.msra.mxu0 0.0
    %803 = vmatprep.subr.mxu0 0.0
    %804 = vmatpush1.msra.mxu0 0.0
    %805 = vmatprep.subr.mxu0 0.0
    %806 = vmatpush1.msra.mxu0 0.0
    %807 = vmatprep.subr.mxu0 0.0
    %808 = vmatpush1.msra.mxu0 0.0
    %809 = vmatprep.subr.mxu0 0.0
    %810 = vmatpush1.msra.mxu0 0.0
    %811 = vmatprep.subr.mxu0 0.0
    %812 = vmatpush1.msra.mxu0 0.0
    %813 = vmatprep.subr.mxu0 0.0
    %814 = vmatpush1.msra.mxu0 0.0
    %815 = vmatprep.subr.mxu0 0.0
    %816 = vmatpush1.msra.mxu0 0.0
    %817 = vmatprep.subr.mxu0 0.0
    %v818 = vand.u32 %v713, 4294901760
    %v819 = vsub.f32 %v713, %v818
    %v820 = vand.u32 %v819, 4294901760
    %v821 = vsub.f32 %v819, %v820
    %v822 = vand.u32 %v821, 4294901760
    %823 = vmatpush1.msra.mxu0 %v822
    %824 = vmatprep.subr.mxu0 0.0
    %v825 = vand.u32 %v712, 4294901760
    %v826 = vsub.f32 %v712, %v825
    %v827 = vand.u32 %v826, 4294901760
    %v828 = vsub.f32 %v826, %v827
    %v829 = vand.u32 %v828, 4294901760
    %830 = vmatpush1.msra.mxu0 %v829
    %831 = vmatprep.subr.mxu0 0.0
    %v832 = vand.u32 %v711, 4294901760
    %v833 = vsub.f32 %v711, %v832
    %v834 = vand.u32 %v833, 4294901760
    %v835 = vsub.f32 %v833, %v834
    %v836 = vand.u32 %v835, 4294901760
    %837 = vmatpush1.msra.mxu0 %v836
    %838 = vmatprep.subr.mxu0 0.0
    %v839 = vand.u32 %v710, 4294901760
    %v840 = vsub.f32 %v710, %v839
    %v841 = vand.u32 %v840, 4294901760
    %v842 = vsub.f32 %v840, %v841
    %v843 = vand.u32 %v842, 4294901760
    %844 = vmatpush1.msra.mxu0 %v843
    %845 = vmatprep.subr.mxu0 0.0
    %v846 = vand.u32 %v709, 4294901760
    %v847 = vsub.f32 %v709, %v846
    %v848 = vand.u32 %v847, 4294901760
    %v849 = vsub.f32 %v847, %v848
    %v850 = vand.u32 %v849, 4294901760
    %851 = vmatpush1.msra.mxu0 %v850
    %852 = vmatprep.subr.mxu0 0.0
    %v853 = vand.u32 %v708, 4294901760
    %v854 = vsub.f32 %v708, %v853
    %v855 = vand.u32 %v854, 4294901760
    %v856 = vsub.f32 %v854, %v855
    %v857 = vand.u32 %v856, 4294901760
    %858 = vmatpush1.msra.mxu0 %v857
    %859 = vmatprep.subr.mxu0 0.0
    %v860 = vand.u32 %v707, 4294901760
    %v861 = vsub.f32 %v707, %v860
    %v862 = vand.u32 %v861, 4294901760
    %v863 = vsub.f32 %v861, %v862
    %v864 = vand.u32 %v863, 4294901760
    %865 = vmatpush1.msra.mxu0 %v864
    %866 = vmatprep.subr.mxu0 0.0
    %v867 = vand.u32 %v706, 4294901760
    %v868 = vsub.f32 %v706, %v867
    %v869 = vand.u32 %v868, 4294901760
    %v870 = vsub.f32 %v868, %v869
    %v871 = vand.u32 %v870, 4294901760
    %872 = vmatpush1.msra.mxu0 %v871
    %873 = vmatprep.subr.mxu0 0.0
    %874 = vmatpush2.msra.mxu0 0.0
    %875 = vmatprep.subr.mxu0 0.0
    %876 = vmatpush2.msra.mxu0 0.0
    %877 = vmatprep.subr.mxu0 0.0
    %878 = vmatpush2.msra.mxu0 0.0
    %879 = vmatprep.subr.mxu0 0.0
    %880 = vmatpush2.msra.mxu0 0.0
    %881 = vmatprep.subr.mxu0 0.0
    %882 = vmatpush2.msra.mxu0 0.0
    %883 = vmatprep.subr.mxu0 0.0
    %884 = vmatpush2.msra.mxu0 0.0
    %885 = vmatprep.subr.mxu0 0.0
    %886 = vmatpush2.msra.mxu0 0.0
    %887 = vmatprep.subr.mxu0 0.0
    %888 = vmatpush2.msra.mxu0 0.0
    %889 = vmatprep.subr.mxu0 0.0
    %890 = vmatpush2.msra.mxu0 0.0
    %891 = vmatprep.subr.mxu0 0.0
    %892 = vmatpush2.msra.mxu0 0.0
    %893 = vmatprep.subr.mxu0 0.0
    %894 = vmatpush2.msra.mxu0 0.0
    %895 = vmatprep.subr.mxu0 0.0
    %896 = vmatpush2.msra.mxu0 0.0
    %897 = vmatprep.subr.mxu0 0.0
    %898 = vmatpush2.msra.mxu0 0.0
    %899 = vmatprep.subr.mxu0 0.0
    %900 = vmatpush2.msra.mxu0 0.0
    %901 = vmatprep.subr.mxu0 0.0
    %902 = vmatpush2.msra.mxu0 0.0
    %903 = vmatprep.subr.mxu0 0.0
    %904 = vmatpush2.msra.mxu0 0.0
    %905 = vmatprep.mubr.f32.mxu0 0.0
    %v906 = vand.u32 %v716, 4294901760
    %907 = vmatmul.mubr.f32.gmra.mxu0 %v906
    %v908 = vpop.f32.mrf.mxu0
    %v909 = vadd.f32 %v798, %v908
    %v910 = vpop.f32.mrf.mxu0
    %911 = vdwg.mxu0
    %912 = vmatprep.subr.mxu0 0.0
    %913 = vmatpush1.msra.mxu0 0.0
    %914 = vmatprep.subr.mxu0 0.0
    %915 = vmatpush1.msra.mxu0 0.0
    %916 = vmatprep.subr.mxu0 0.0
    %917 = vmatpush1.msra.mxu0 0.0
    %918 = vmatprep.subr.mxu0 0.0
    %919 = vmatpush1.msra.mxu0 0.0
    %920 = vmatprep.subr.mxu0 0.0
    %921 = vmatpush1.msra.mxu0 0.0
    %922 = vmatprep.subr.mxu0 0.0
    %923 = vmatpush1.msra.mxu0 0.0
    %924 = vmatprep.subr.mxu0 0.0
    %925 = vmatpush1.msra.mxu0 0.0
    %926 = vmatprep.subr.mxu0 0.0
    %927 = vmatpush1.msra.mxu0 0.0
    %928 = vmatprep.subr.mxu0 0.0
    %v929 = vand.u32 %v713, 4294901760
    %v930 = vsub.f32 %v713, %v929
    %931 = vmatpush1.msra.mxu0 %v930
    %932 = vmatprep.subr.mxu0 0.0
    %v933 = vand.u32 %v712, 4294901760
    %v934 = vsub.f32 %v712, %v933
    %935 = vmatpush1.msra.mxu0 %v934
    %936 = vmatprep.subr.mxu0 0.0
    %v937 = vand.u32 %v711, 4294901760
    %v938 = vsub.f32 %v711, %v937
    %939 = vmatpush1.msra.mxu0 %v938
    %940 = vmatprep.subr.mxu0 0.0
    %v941 = vand.u32 %v710, 4294901760
    %v942 = vsub.f32 %v710, %v941
    %943 = vmatpush1.msra.mxu0 %v942
    %944 = vmatprep.subr.mxu0 0.0
    %v945 = vand.u32 %v709, 4294901760
    %v946 = vsub.f32 %v709, %v945
    %947 = vmatpush1.msra.mxu0 %v946
    %948 = vmatprep.subr.mxu0 0.0
    %v949 = vand.u32 %v708, 4294901760
    %v950 = vsub.f32 %v708, %v949
    %951 = vmatpush1.msra.mxu0 %v950
    %952 = vmatprep.subr.mxu0 0.0
    %v953 = vand.u32 %v707, 4294901760
    %v954 = vsub.f32 %v707, %v953
    %955 = vmatpush1.msra.mxu0 %v954
    %956 = vmatprep.subr.mxu0 0.0
    %v957 = vand.u32 %v706, 4294901760
    %v958 = vsub.f32 %v706, %v957
    %959 = vmatpush1.msra.mxu0 %v958
    %960 = vmatprep.subr.mxu0 0.0
    %961 = vmatpush2.msra.mxu0 0.0
    %962 = vmatprep.subr.mxu0 0.0
    %963 = vmatpush2.msra.mxu0 0.0
    %964 = vmatprep.subr.mxu0 0.0
    %965 = vmatpush2.msra.mxu0 0.0
    %966 = vmatprep.subr.mxu0 0.0
    %967 = vmatpush2.msra.mxu0 0.0
    %968 = vmatprep.subr.mxu0 0.0
    %969 = vmatpush2.msra.mxu0 0.0
    %970 = vmatprep.subr.mxu0 0.0
    %971 = vmatpush2.msra.mxu0 0.0
    %972 = vmatprep.subr.mxu0 0.0
    %973 = vmatpush2.msra.mxu0 0.0
    %974 = vmatprep.subr.mxu0 0.0
    %975 = vmatpush2.msra.mxu0 0.0
    %976 = vmatprep.subr.mxu0 0.0
    %977 = vmatpush2.msra.mxu0 0.0
    %978 = vmatprep.subr.mxu0 0.0
    %979 = vmatpush2.msra.mxu0 0.0
    %980 = vmatprep.subr.mxu0 0.0
    %981 = vmatpush2.msra.mxu0 0.0
    %982 = vmatprep.subr.mxu0 0.0
    %983 = vmatpush2.msra.mxu0 0.0
    %984 = vmatprep.subr.mxu0 0.0
    %985 = vmatpush2.msra.mxu0 0.0
    %986 = vmatprep.subr.mxu0 0.0
    %987 = vmatpush2.msra.mxu0 0.0
    %988 = vmatprep.subr.mxu0 0.0
    %989 = vmatpush2.msra.mxu0 0.0
    %990 = vmatprep.subr.mxu0 0.0
    %991 = vmatpush2.msra.mxu0 0.0
    %992 = vmatprep.mubr.f32.mxu0 0.0
    %v993 = vand.u32 %v716, 4294901760
    %v994 = vsub.f32 %v716, %v993
    %995 = vmatmul.mubr.f32.gmra.mxu0 %v994
    %v996 = vpop.f32.mrf.mxu0
    %v997 = vadd.f32 %v909, %v996
    %v998 = vpop.f32.mrf.mxu0
    %999 = vdwg.mxu0
    %1000 = vmatprep.subr.mxu0 0.0
    %1001 = vmatpush1.msra.mxu0 0.0
    %1002 = vmatprep.subr.mxu0 0.0
    %1003 = vmatpush1.msra.mxu0 0.0
    %1004 = vmatprep.subr.mxu0 0.0
    %1005 = vmatpush1.msra.mxu0 0.0
    %1006 = vmatprep.subr.mxu0 0.0
    %1007 = vmatpush1.msra.mxu0 0.0
    %1008 = vmatprep.subr.mxu0 0.0
    %1009 = vmatpush1.msra.mxu0 0.0
    %1010 = vmatprep.subr.mxu0 0.0
    %1011 = vmatpush1.msra.mxu0 0.0
    %1012 = vmatprep.subr.mxu0 0.0
    %1013 = vmatpush1.msra.mxu0 0.0
    %1014 = vmatprep.subr.mxu0 0.0
    %1015 = vmatpush1.msra.mxu0 0.0
    %1016 = vmatprep.subr.mxu0 0.0
    %v1017 = vand.u32 %v713, 4294901760
    %1018 = vmatpush1.msra.mxu0 %v1017
    %1019 = vmatprep.subr.mxu0 0.0
    %v1020 = vand.u32 %v712, 4294901760
    %1021 = vmatpush1.msra.mxu0 %v1020
    %1022 = vmatprep.subr.mxu0 0.0
    %v1023 = vand.u32 %v711, 4294901760
    %1024 = vmatpush1.msra.mxu0 %v1023
    %1025 = vmatprep.subr.mxu0 0.0
    %v1026 = vand.u32 %v710, 4294901760
    %1027 = vmatpush1.msra.mxu0 %v1026
    %1028 = vmatprep.subr.mxu0 0.0
    %v1029 = vand.u32 %v709, 4294901760
    %1030 = vmatpush1.msra.mxu0 %v1029
    %1031 = vmatprep.subr.mxu0 0.0
    %v1032 = vand.u32 %v708, 4294901760
    %1033 = vmatpush1.msra.mxu0 %v1032
    %1034 = vmatprep.subr.mxu0 0.0
    %v1035 = vand.u32 %v707, 4294901760
    %1036 = vmatpush1.msra.mxu0 %v1035
    %1037 = vmatprep.subr.mxu0 0.0
    %v1038 = vand.u32 %v706, 4294901760
    %1039 = vmatpush1.msra.mxu0 %v1038
    %1040 = vmatprep.subr.mxu0 0.0
    %1041 = vmatpush2.msra.mxu0 0.0
    %1042 = vmatprep.subr.mxu0 0.0
    %1043 = vmatpush2.msra.mxu0 0.0
    %1044 = vmatprep.subr.mxu0 0.0
    %1045 = vmatpush2.msra.mxu0 0.0
    %1046 = vmatprep.subr.mxu0 0.0
    %1047 = vmatpush2.msra.mxu0 0.0
    %1048 = vmatprep.subr.mxu0 0.0
    %1049 = vmatpush2.msra.mxu0 0.0
    %1050 = vmatprep.subr.mxu0 0.0
    %1051 = vmatpush2.msra.mxu0 0.0
    %1052 = vmatprep.subr.mxu0 0.0
    %1053 = vmatpush2.msra.mxu0 0.0
    %1054 = vmatprep.subr.mxu0 0.0
    %1055 = vmatpush2.msra.mxu0 0.0
    %1056 = vmatprep.subr.mxu0 0.0
    %1057 = vmatpush2.msra.mxu0 0.0
    %1058 = vmatprep.subr.mxu0 0.0
    %1059 = vmatpush2.msra.mxu0 0.0
    %1060 = vmatprep.subr.mxu0 0.0
    %1061 = vmatpush2.msra.mxu0 0.0
    %1062 = vmatprep.subr.mxu0 0.0
    %1063 = vmatpush2.msra.mxu0 0.0
    %1064 = vmatprep.subr.mxu0 0.0
    %1065 = vmatpush2.msra.mxu0 0.0
    %1066 = vmatprep.subr.mxu0 0.0
    %1067 = vmatpush2.msra.mxu0 0.0
    %1068 = vmatprep.subr.mxu0 0.0
    %1069 = vmatpush2.msra.mxu0 0.0
    %1070 = vmatprep.subr.mxu0 0.0
    %1071 = vmatpush2.msra.mxu0 0.0
    %1072 = vmatprep.mubr.f32.mxu0 0.0
    %v1073 = vand.u32 %v716, 4294901760
    %v1074 = vsub.f32 %v716, %v1073
    %v1075 = vand.u32 %v1074, 4294901760
    %1076 = vmatmul.mubr.f32.gmra.mxu0 %v1075
    %v1077 = vpop.f32.mrf.mxu0
    %v1078 = vadd.f32 %v997, %v1077
    %v1079 = vpop.f32.mrf.mxu0
    %1080 = vdwg.mxu0
    %1081 = vmatprep.subr.mxu0 0.0
    %1082 = vmatpush1.msra.mxu0 0.0
    %1083 = vmatprep.subr.mxu0 0.0
    %1084 = vmatpush1.msra.mxu0 0.0
    %1085 = vmatprep.subr.mxu0 0.0
    %1086 = vmatpush1.msra.mxu0 0.0
    %1087 = vmatprep.subr.mxu0 0.0
    %1088 = vmatpush1.msra.mxu0 0.0
    %1089 = vmatprep.subr.mxu0 0.0
    %1090 = vmatpush1.msra.mxu0 0.0
    %1091 = vmatprep.subr.mxu0 0.0
    %1092 = vmatpush1.msra.mxu0 0.0
    %1093 = vmatprep.subr.mxu0 0.0
    %1094 = vmatpush1.msra.mxu0 0.0
    %1095 = vmatprep.subr.mxu0 0.0
    %1096 = vmatpush1.msra.mxu0 0.0
    %1097 = vmatprep.subr.mxu0 0.0
    %v1098 = vand.u32 %v713, 4294901760
    %v1099 = vsub.f32 %v713, %v1098
    %v1100 = vand.u32 %v1099, 4294901760
    %1101 = vmatpush1.msra.mxu0 %v1100
    %1102 = vmatprep.subr.mxu0 0.0
    %v1103 = vand.u32 %v712, 4294901760
    %v1104 = vsub.f32 %v712, %v1103
    %v1105 = vand.u32 %v1104, 4294901760
    %1106 = vmatpush1.msra.mxu0 %v1105
    %1107 = vmatprep.subr.mxu0 0.0
    %v1108 = vand.u32 %v711, 4294901760
    %v1109 = vsub.f32 %v711, %v1108
    %v1110 = vand.u32 %v1109, 4294901760
    %1111 = vmatpush1.msra.mxu0 %v1110
    %1112 = vmatprep.subr.mxu0 0.0
    %v1113 = vand.u32 %v710, 4294901760
    %v1114 = vsub.f32 %v710, %v1113
    %v1115 = vand.u32 %v1114, 4294901760
    %1116 = vmatpush1.msra.mxu0 %v1115
    %1117 = vmatprep.subr.mxu0 0.0
    %v1118 = vand.u32 %v709, 4294901760
    %v1119 = vsub.f32 %v709, %v1118
    %v1120 = vand.u32 %v1119, 4294901760
    %1121 = vmatpush1.msra.mxu0 %v1120
    %1122 = vmatprep.subr.mxu0 0.0
    %v1123 = vand.u32 %v708, 4294901760
    %v1124 = vsub.f32 %v708, %v1123
    %v1125 = vand.u32 %v1124, 4294901760
    %1126 = vmatpush1.msra.mxu0 %v1125
    %1127 = vmatprep.subr.mxu0 0.0
    %v1128 = vand.u32 %v707, 4294901760
    %v1129 = vsub.f32 %v707, %v1128
    %v1130 = vand.u32 %v1129, 4294901760
    %1131 = vmatpush1.msra.mxu0 %v1130
    %1132 = vmatprep.subr.mxu0 0.0
    %v1133 = vand.u32 %v706, 4294901760
    %v1134 = vsub.f32 %v706, %v1133
    %v1135 = vand.u32 %v1134, 4294901760
    %1136 = vmatpush1.msra.mxu0 %v1135
    %1137 = vmatprep.subr.mxu0 0.0
    %1138 = vmatpush2.msra.mxu0 0.0
    %1139 = vmatprep.subr.mxu0 0.0
    %1140 = vmatpush2.msra.mxu0 0.0
    %1141 = vmatprep.subr.mxu0 0.0
    %1142 = vmatpush2.msra.mxu0 0.0
    %1143 = vmatprep.subr.mxu0 0.0
    %1144 = vmatpush2.msra.mxu0 0.0
    %1145 = vmatprep.subr.mxu0 0.0
    %1146 = vmatpush2.msra.mxu0 0.0
    %1147 = vmatprep.subr.mxu0 0.0
    %1148 = vmatpush2.msra.mxu0 0.0
    %1149 = vmatprep.subr.mxu0 0.0
    %1150 = vmatpush2.msra.mxu0 0.0
    %1151 = vmatprep.subr.mxu0 0.0
    %1152 = vmatpush2.msra.mxu0 0.0
    %1153 = vmatprep.subr.mxu0 0.0
    %1154 = vmatpush2.msra.mxu0 0.0
    %1155 = vmatprep.subr.mxu0 0.0
    %1156 = vmatpush2.msra.mxu0 0.0
    %1157 = vmatprep.subr.mxu0 0.0
    %1158 = vmatpush2.msra.mxu0 0.0
    %1159 = vmatprep.subr.mxu0 0.0
    %1160 = vmatpush2.msra.mxu0 0.0
    %1161 = vmatprep.subr.mxu0 0.0
    %1162 = vmatpush2.msra.mxu0 0.0
    %1163 = vmatprep.subr.mxu0 0.0
    %1164 = vmatpush2.msra.mxu0 0.0
    %1165 = vmatprep.subr.mxu0 0.0
    %1166 = vmatpush2.msra.mxu0 0.0
    %1167 = vmatprep.subr.mxu0 0.0
    %1168 = vmatpush2.msra.mxu0 0.0
    %1169 = vmatprep.mubr.f32.mxu0 0.0
    %v1170 = vand.u32 %v716, 4294901760
    %1171 = vmatmul.mubr.f32.gmra.mxu0 %v1170
    %v1172 = vpop.f32.mrf.mxu0
    %v1173 = vadd.f32 %v1078, %v1172
    %v1174 = vpop.f32.mrf.mxu0
    %1175 = vdwg.mxu0
    %1176 = vmatprep.subr.mxu0 0.0
    %1177 = vmatpush1.msra.mxu0 0.0
    %1178 = vmatprep.subr.mxu0 0.0
    %1179 = vmatpush1.msra.mxu0 0.0
    %1180 = vmatprep.subr.mxu0 0.0
    %1181 = vmatpush1.msra.mxu0 0.0
    %1182 = vmatprep.subr.mxu0 0.0
    %1183 = vmatpush1.msra.mxu0 0.0
    %1184 = vmatprep.subr.mxu0 0.0
    %1185 = vmatpush1.msra.mxu0 0.0
    %1186 = vmatprep.subr.mxu0 0.0
    %1187 = vmatpush1.msra.mxu0 0.0
    %1188 = vmatprep.subr.mxu0 0.0
    %1189 = vmatpush1.msra.mxu0 0.0
    %1190 = vmatprep.subr.mxu0 0.0
    %1191 = vmatpush1.msra.mxu0 0.0
    %1192 = vmatprep.subr.mxu0 0.0
    %v1193 = vand.u32 %v713, 4294901760
    %1194 = vmatpush1.msra.mxu0 %v1193
    %1195 = vmatprep.subr.mxu0 0.0
    %v1196 = vand.u32 %v712, 4294901760
    %1197 = vmatpush1.msra.mxu0 %v1196
    %1198 = vmatprep.subr.mxu0 0.0
    %v1199 = vand.u32 %v711, 4294901760
    %1200 = vmatpush1.msra.mxu0 %v1199
    %1201 = vmatprep.subr.mxu0 0.0
    %v1202 = vand.u32 %v710, 4294901760
    %1203 = vmatpush1.msra.mxu0 %v1202
    %1204 = vmatprep.subr.mxu0 0.0
    %v1205 = vand.u32 %v709, 4294901760
    %1206 = vmatpush1.msra.mxu0 %v1205
    %1207 = vmatprep.subr.mxu0 0.0
    %v1208 = vand.u32 %v708, 4294901760
    %1209 = vmatpush1.msra.mxu0 %v1208
    %1210 = vmatprep.subr.mxu0 0.0
    %v1211 = vand.u32 %v707, 4294901760
    %1212 = vmatpush1.msra.mxu0 %v1211
    %1213 = vmatprep.subr.mxu0 0.0
    %v1214 = vand.u32 %v706, 4294901760
    %1215 = vmatpush1.msra.mxu0 %v1214
    %1216 = vmatprep.subr.mxu0 0.0
    %1217 = vmatpush2.msra.mxu0 0.0
    %1218 = vmatprep.subr.mxu0 0.0
    %1219 = vmatpush2.msra.mxu0 0.0
    %1220 = vmatprep.subr.mxu0 0.0
    %1221 = vmatpush2.msra.mxu0 0.0
    %1222 = vmatprep.subr.mxu0 0.0
    %1223 = vmatpush2.msra.mxu0 0.0
    %1224 = vmatprep.subr.mxu0 0.0
    %1225 = vmatpush2.msra.mxu0 0.0
    %1226 = vmatprep.subr.mxu0 0.0
    %1227 = vmatpush2.msra.mxu0 0.0
    %1228 = vmatprep.subr.mxu0 0.0
    %1229 = vmatpush2.msra.mxu0 0.0
    %1230 = vmatprep.subr.mxu0 0.0
    %1231 = vmatpush2.msra.mxu0 0.0
    %1232 = vmatprep.subr.mxu0 0.0
    %1233 = vmatpush2.msra.mxu0 0.0
    %1234 = vmatprep.subr.mxu0 0.0
    %1235 = vmatpush2.msra.mxu0 0.0
    %1236 = vmatprep.subr.mxu0 0.0
    %1237 = vmatpush2.msra.mxu0 0.0
    %1238 = vmatprep.subr.mxu0 0.0
    %1239 = vmatpush2.msra.mxu0 0.0
    %1240 = vmatprep.subr.mxu0 0.0
    %1241 = vmatpush2.msra.mxu0 0.0
    %1242 = vmatprep.subr.mxu0 0.0
    %1243 = vmatpush2.msra.mxu0 0.0
    %1244 = vmatprep.subr.mxu0 0.0
    %1245 = vmatpush2.msra.mxu0 0.0
    %1246 = vmatprep.subr.mxu0 0.0
    %1247 = vmatpush2.msra.mxu0 0.0
    %1248 = vmatprep.mubr.f32.mxu0 0.0
    %v1249 = vand.u32 %v716, 4294901760
    %1250 = vmatmul.mubr.f32.gmra.mxu0 %v1249
    %v1251 = vpop.f32.mrf.mxu0
    %v1252 = vadd.f32 %v1173, %v1251
    %v1253 = vpop.f32.mrf.mxu0
    %1254 = vdwg.mxu0
    %1255 = vmatprep.subr.mxu0 0.0
    %v1256 = vand.u32 %v705, 4294901760
    %1257 = vmatpush1.msra.mxu0 %v1256
    %1258 = vmatprep.subr.mxu0 0.0
    %v1259 = vand.u32 %v704, 4294901760
    %1260 = vmatpush1.msra.mxu0 %v1259
    %1261 = vmatprep.subr.mxu0 0.0
    %v1262 = vand.u32 %v703, 4294901760
    %1263 = vmatpush1.msra.mxu0 %v1262
    %1264 = vmatprep.subr.mxu0 0.0
    %v1265 = vand.u32 %v702, 4294901760
    %1266 = vmatpush1.msra.mxu0 %v1265
    %1267 = vmatprep.subr.mxu0 0.0
    %v1268 = vand.u32 %v701, 4294901760
    %1269 = vmatpush1.msra.mxu0 %v1268
    %1270 = vmatprep.subr.mxu0 0.0
    %v1271 = vand.u32 %v700, 4294901760
    %1272 = vmatpush1.msra.mxu0 %v1271
    %1273 = vmatprep.subr.mxu0 0.0
    %v1274 = vand.u32 %v699, 4294901760
    %1275 = vmatpush1.msra.mxu0 %v1274
    %1276 = vmatprep.subr.mxu0 0.0
    %v1277 = vand.u32 %v698, 4294901760
    %1278 = vmatpush1.msra.mxu0 %v1277
    %1279 = vmatprep.subr.mxu0 0.0
    %v1280 = vand.u32 %v697, 4294901760
    %1281 = vmatpush1.msra.mxu0 %v1280
    %1282 = vmatprep.subr.mxu0 0.0
    %v1283 = vand.u32 %v696, 4294901760
    %1284 = vmatpush1.msra.mxu0 %v1283
    %1285 = vmatprep.subr.mxu0 0.0
    %v1286 = vand.u32 %v695, 4294901760
    %1287 = vmatpush1.msra.mxu0 %v1286
    %1288 = vmatprep.subr.mxu0 0.0
    %v1289 = vand.u32 %v694, 4294901760
    %1290 = vmatpush1.msra.mxu0 %v1289
    %1291 = vmatprep.subr.mxu0 0.0
    %v1292 = vand.u32 %v693, 4294901760
    %1293 = vmatpush1.msra.mxu0 %v1292
    %1294 = vmatprep.subr.mxu0 0.0
    %v1295 = vand.u32 %v692, 4294901760
    %1296 = vmatpush1.msra.mxu0 %v1295
    %1297 = vmatprep.subr.mxu0 0.0
    %v1298 = vand.u32 %v691, 4294901760
    %1299 = vmatpush1.msra.mxu0 %v1298
    %1300 = vmatprep.subr.mxu0 0.0
    %v1301 = vand.u32 %v690, 4294901760
    %1302 = vmatpush1.msra.mxu0 %v1301
    %1303 = vmatprep.subr.mxu0 0.0
    %1304 = vmatpush2.msra.mxu0 0.0
    %1305 = vmatprep.subr.mxu0 0.0
    %1306 = vmatpush2.msra.mxu0 0.0
    %1307 = vmatprep.subr.mxu0 0.0
    %1308 = vmatpush2.msra.mxu0 0.0
    %1309 = vmatprep.subr.mxu0 0.0
    %1310 = vmatpush2.msra.mxu0 0.0
    %1311 = vmatprep.subr.mxu0 0.0
    %1312 = vmatpush2.msra.mxu0 0.0
    %1313 = vmatprep.subr.mxu0 0.0
    %1314 = vmatpush2.msra.mxu0 0.0
    %1315 = vmatprep.subr.mxu0 0.0
    %1316 = vmatpush2.msra.mxu0 0.0
    %1317 = vmatprep.subr.mxu0 0.0
    %1318 = vmatpush2.msra.mxu0 0.0
    %1319 = vmatprep.subr.mxu0 0.0
    %1320 = vmatpush2.msra.mxu0 0.0
    %1321 = vmatprep.subr.mxu0 0.0
    %1322 = vmatpush2.msra.mxu0 0.0
    %1323 = vmatprep.subr.mxu0 0.0
    %1324 = vmatpush2.msra.mxu0 0.0
    %1325 = vmatprep.subr.mxu0 0.0
    %1326 = vmatpush2.msra.mxu0 0.0
    %1327 = vmatprep.subr.mxu0 0.0
    %1328 = vmatpush2.msra.mxu0 0.0
    %1329 = vmatprep.subr.mxu0 0.0
    %1330 = vmatpush2.msra.mxu0 0.0
    %1331 = vmatprep.subr.mxu0 0.0
    %1332 = vmatpush2.msra.mxu0 0.0
    %1333 = vmatprep.subr.mxu0 0.0
    %1334 = vmatpush2.msra.mxu0 0.0
    %1335 = vmatprep.mubr.f32.mxu0 0.0
    %v1336 = vand.u32 %v24, 4294901760
    %v1337 = vsub.f32 %v24, %v1336
    %v1338 = vand.u32 %v1337, 4294901760
    %v1339 = vsub.f32 %v1337, %v1338
    %v1340 = vand.u32 %v1339, 4294901760
    %1341 = vmatmul.mubr.f32.gmra.mxu0 %v1340
    %v1342 = vpop.f32.mrf.mxu0
    %v1343 = vadd.f32 %v1252, %v1342
    %v1344 = vpop.f32.mrf.mxu0
    %1345 = vdwg.mxu0
    %1346 = vmatprep.subr.mxu0 0.0
    %v1347 = vand.u32 %v705, 4294901760
    %v1348 = vsub.f32 %v705, %v1347
    %v1349 = vand.u32 %v1348, 4294901760
    %v1350 = vsub.f32 %v1348, %v1349
    %v1351 = vand.u32 %v1350, 4294901760
    %1352 = vmatpush1.msra.mxu0 %v1351
    %1353 = vmatprep.subr.mxu0 0.0
    %v1354 = vand.u32 %v704, 4294901760
    %v1355 = vsub.f32 %v704, %v1354
    %v1356 = vand.u32 %v1355, 4294901760
    %v1357 = vsub.f32 %v1355, %v1356
    %v1358 = vand.u32 %v1357, 4294901760
    %1359 = vmatpush1.msra.mxu0 %v1358
    %1360 = vmatprep.subr.mxu0 0.0
    %v1361 = vand.u32 %v703, 4294901760
    %v1362 = vsub.f32 %v703, %v1361
    %v1363 = vand.u32 %v1362, 4294901760
    %v1364 = vsub.f32 %v1362, %v1363
    %v1365 = vand.u32 %v1364, 4294901760
    %1366 = vmatpush1.msra.mxu0 %v1365
    %1367 = vmatprep.subr.mxu0 0.0
    %v1368 = vand.u32 %v702, 4294901760
    %v1369 = vsub.f32 %v702, %v1368
    %v1370 = vand.u32 %v1369, 4294901760
    %v1371 = vsub.f32 %v1369, %v1370
    %v1372 = vand.u32 %v1371, 4294901760
    %1373 = vmatpush1.msra.mxu0 %v1372
    %1374 = vmatprep.subr.mxu0 0.0
    %v1375 = vand.u32 %v701, 4294901760
    %v1376 = vsub.f32 %v701, %v1375
    %v1377 = vand.u32 %v1376, 4294901760
    %v1378 = vsub.f32 %v1376, %v1377
    %v1379 = vand.u32 %v1378, 4294901760
    %1380 = vmatpush1.msra.mxu0 %v1379
    %1381 = vmatprep.subr.mxu0 0.0
    %v1382 = vand.u32 %v700, 4294901760
    %v1383 = vsub.f32 %v700, %v1382
    %v1384 = vand.u32 %v1383, 4294901760
    %v1385 = vsub.f32 %v1383, %v1384
    %v1386 = vand.u32 %v1385, 4294901760
    %1387 = vmatpush1.msra.mxu0 %v1386
    %1388 = vmatprep.subr.mxu0 0.0
    %v1389 = vand.u32 %v699, 4294901760
    %v1390 = vsub.f32 %v699, %v1389
    %v1391 = vand.u32 %v1390, 4294901760
    %v1392 = vsub.f32 %v1390, %v1391
    %v1393 = vand.u32 %v1392, 4294901760
    %1394 = vmatpush1.msra.mxu0 %v1393
    %1395 = vmatprep.subr.mxu0 0.0
    %v1396 = vand.u32 %v698, 4294901760
    %v1397 = vsub.f32 %v698, %v1396
    %v1398 = vand.u32 %v1397, 4294901760
    %v1399 = vsub.f32 %v1397, %v1398
    %v1400 = vand.u32 %v1399, 4294901760
    %1401 = vmatpush1.msra.mxu0 %v1400
    %1402 = vmatprep.subr.mxu0 0.0
    %v1403 = vand.u32 %v697, 4294901760
    %v1404 = vsub.f32 %v697, %v1403
    %v1405 = vand.u32 %v1404, 4294901760
    %v1406 = vsub.f32 %v1404, %v1405
    %v1407 = vand.u32 %v1406, 4294901760
    %1408 = vmatpush1.msra.mxu0 %v1407
    %1409 = vmatprep.subr.mxu0 0.0
    %v1410 = vand.u32 %v696, 4294901760
    %v1411 = vsub.f32 %v696, %v1410
    %v1412 = vand.u32 %v1411, 4294901760
    %v1413 = vsub.f32 %v1411, %v1412
    %v1414 = vand.u32 %v1413, 4294901760
    %1415 = vmatpush1.msra.mxu0 %v1414
    %1416 = vmatprep.subr.mxu0 0.0
    %v1417 = vand.u32 %v695, 4294901760
    %v1418 = vsub.f32 %v695, %v1417
    %v1419 = vand.u32 %v1418, 4294901760
    %v1420 = vsub.f32 %v1418, %v1419
    %v1421 = vand.u32 %v1420, 4294901760
    %1422 = vmatpush1.msra.mxu0 %v1421
    %1423 = vmatprep.subr.mxu0 0.0
    %v1424 = vand.u32 %v694, 4294901760
    %v1425 = vsub.f32 %v694, %v1424
    %v1426 = vand.u32 %v1425, 4294901760
    %v1427 = vsub.f32 %v1425, %v1426
    %v1428 = vand.u32 %v1427, 4294901760
    %1429 = vmatpush1.msra.mxu0 %v1428
    %1430 = vmatprep.subr.mxu0 0.0
    %v1431 = vand.u32 %v693, 4294901760
    %v1432 = vsub.f32 %v693, %v1431
    %v1433 = vand.u32 %v1432, 4294901760
    %v1434 = vsub.f32 %v1432, %v1433
    %v1435 = vand.u32 %v1434, 4294901760
    %1436 = vmatpush1.msra.mxu0 %v1435
    %1437 = vmatprep.subr.mxu0 0.0
    %v1438 = vand.u32 %v692, 4294901760
    %v1439 = vsub.f32 %v692, %v1438
    %v1440 = vand.u32 %v1439, 4294901760
    %v1441 = vsub.f32 %v1439, %v1440
    %v1442 = vand.u32 %v1441, 4294901760
    %1443 = vmatpush1.msra.mxu0 %v1442
    %1444 = vmatprep.subr.mxu0 0.0
    %v1445 = vand.u32 %v691, 4294901760
    %v1446 = vsub.f32 %v691, %v1445
    %v1447 = vand.u32 %v1446, 4294901760
    %v1448 = vsub.f32 %v1446, %v1447
    %v1449 = vand.u32 %v1448, 4294901760
    %1450 = vmatpush1.msra.mxu0 %v1449
    %1451 = vmatprep.subr.mxu0 0.0
    %v1452 = vand.u32 %v690, 4294901760
    %v1453 = vsub.f32 %v690, %v1452
    %v1454 = vand.u32 %v1453, 4294901760
    %v1455 = vsub.f32 %v1453, %v1454
    %v1456 = vand.u32 %v1455, 4294901760
    %1457 = vmatpush1.msra.mxu0 %v1456
    %1458 = vmatprep.subr.mxu0 0.0
    %1459 = vmatpush2.msra.mxu0 0.0
    %1460 = vmatprep.subr.mxu0 0.0
    %1461 = vmatpush2.msra.mxu0 0.0
    %1462 = vmatprep.subr.mxu0 0.0
    %1463 = vmatpush2.msra.mxu0 0.0
    %1464 = vmatprep.subr.mxu0 0.0
    %1465 = vmatpush2.msra.mxu0 0.0
    %1466 = vmatprep.subr.mxu0 0.0
    %1467 = vmatpush2.msra.mxu0 0.0
    %1468 = vmatprep.subr.mxu0 0.0
    %1469 = vmatpush2.msra.mxu0 0.0
    %1470 = vmatprep.subr.mxu0 0.0
    %1471 = vmatpush2.msra.mxu0 0.0
    %1472 = vmatprep.subr.mxu0 0.0
    %1473 = vmatpush2.msra.mxu0 0.0
    %1474 = vmatprep.subr.mxu0 0.0
    %1475 = vmatpush2.msra.mxu0 0.0
    %1476 = vmatprep.subr.mxu0 0.0
    %1477 = vmatpush2.msra.mxu0 0.0
    %1478 = vmatprep.subr.mxu0 0.0
    %1479 = vmatpush2.msra.mxu0 0.0
    %1480 = vmatprep.subr.mxu0 0.0
    %1481 = vmatpush2.msra.mxu0 0.0
    %1482 = vmatprep.subr.mxu0 0.0
    %1483 = vmatpush2.msra.mxu0 0.0
    %1484 = vmatprep.subr.mxu0 0.0
    %1485 = vmatpush2.msra.mxu0 0.0
    %1486 = vmatprep.subr.mxu0 0.0
    %1487 = vmatpush2.msra.mxu0 0.0
    %1488 = vmatprep.subr.mxu0 0.0
    %1489 = vmatpush2.msra.mxu0 0.0
    %1490 = vmatprep.mubr.f32.mxu0 0.0
    %v1491 = vand.u32 %v24, 4294901760
    %1492 = vmatmul.mubr.f32.gmra.mxu0 %v1491
    %v1493 = vpop.f32.mrf.mxu0
    %v1494 = vadd.f32 %v1343, %v1493
    %v1495 = vpop.f32.mrf.mxu0
    %1496 = vdwg.mxu0
    %1497 = vmatprep.subr.mxu0 0.0
    %v1498 = vand.u32 %v705, 4294901760
    %v1499 = vsub.f32 %v705, %v1498
    %1500 = vmatpush1.msra.mxu0 %v1499
    %1501 = vmatprep.subr.mxu0 0.0
    %v1502 = vand.u32 %v704, 4294901760
    %v1503 = vsub.f32 %v704, %v1502
    %1504 = vmatpush1.msra.mxu0 %v1503
    %1505 = vmatprep.subr.mxu0 0.0
    %v1506 = vand.u32 %v703, 4294901760
    %v1507 = vsub.f32 %v703, %v1506
    %1508 = vmatpush1.msra.mxu0 %v1507
    %1509 = vmatprep.subr.mxu0 0.0
    %v1510 = vand.u32 %v702, 4294901760
    %v1511 = vsub.f32 %v702, %v1510
    %1512 = vmatpush1.msra.mxu0 %v1511
    %1513 = vmatprep.subr.mxu0 0.0
    %v1514 = vand.u32 %v701, 4294901760
    %v1515 = vsub.f32 %v701, %v1514
    %1516 = vmatpush1.msra.mxu0 %v1515
    %1517 = vmatprep.subr.mxu0 0.0
    %v1518 = vand.u32 %v700, 4294901760
    %v1519 = vsub.f32 %v700, %v1518
    %1520 = vmatpush1.msra.mxu0 %v1519
    %1521 = vmatprep.subr.mxu0 0.0
    %v1522 = vand.u32 %v699, 4294901760
    %v1523 = vsub.f32 %v699, %v1522
    %1524 = vmatpush1.msra.mxu0 %v1523
    %1525 = vmatprep.subr.mxu0 0.0
    %v1526 = vand.u32 %v698, 4294901760
    %v1527 = vsub.f32 %v698, %v1526
    %1528 = vmatpush1.msra.mxu0 %v1527
    %1529 = vmatprep.subr.mxu0 0.0
    %v1530 = vand.u32 %v697, 4294901760
    %v1531 = vsub.f32 %v697, %v1530
    %1532 = vmatpush1.msra.mxu0 %v1531
    %1533 = vmatprep.subr.mxu0 0.0
    %v1534 = vand.u32 %v696, 4294901760
    %v1535 = vsub.f32 %v696, %v1534
    %1536 = vmatpush1.msra.mxu0 %v1535
    %1537 = vmatprep.subr.mxu0 0.0
    %v1538 = vand.u32 %v695, 4294901760
    %v1539 = vsub.f32 %v695, %v1538
    %1540 = vmatpush1.msra.mxu0 %v1539
    %1541 = vmatprep.subr.mxu0 0.0
    %v1542 = vand.u32 %v694, 4294901760
    %v1543 = vsub.f32 %v694, %v1542
    %1544 = vmatpush1.msra.mxu0 %v1543
    %1545 = vmatprep.subr.mxu0 0.0
    %v1546 = vand.u32 %v693, 4294901760
    %v1547 = vsub.f32 %v693, %v1546
    %1548 = vmatpush1.msra.mxu0 %v1547
    %1549 = vmatprep.subr.mxu0 0.0
    %v1550 = vand.u32 %v692, 4294901760
    %v1551 = vsub.f32 %v692, %v1550
    %1552 = vmatpush1.msra.mxu0 %v1551
    %1553 = vmatprep.subr.mxu0 0.0
    %v1554 = vand.u32 %v691, 4294901760
    %v1555 = vsub.f32 %v691, %v1554
    %1556 = vmatpush1.msra.mxu0 %v1555
    %1557 = vmatprep.subr.mxu0 0.0
    %v1558 = vand.u32 %v690, 4294901760
    %v1559 = vsub.f32 %v690, %v1558
    %1560 = vmatpush1.msra.mxu0 %v1559
    %1561 = vmatprep.subr.mxu0 0.0
    %1562 = vmatpush2.msra.mxu0 0.0
    %1563 = vmatprep.subr.mxu0 0.0
    %1564 = vmatpush2.msra.mxu0 0.0
    %1565 = vmatprep.subr.mxu0 0.0
    %1566 = vmatpush2.msra.mxu0 0.0
    %1567 = vmatprep.subr.mxu0 0.0
    %1568 = vmatpush2.msra.mxu0 0.0
    %1569 = vmatprep.subr.mxu0 0.0
    %1570 = vmatpush2.msra.mxu0 0.0
    %1571 = vmatprep.subr.mxu0 0.0
    %1572 = vmatpush2.msra.mxu0 0.0
    %1573 = vmatprep.subr.mxu0 0.0
    %1574 = vmatpush2.msra.mxu0 0.0
    %1575 = vmatprep.subr.mxu0 0.0
    %1576 = vmatpush2.msra.mxu0 0.0
    %1577 = vmatprep.subr.mxu0 0.0
    %1578 = vmatpush2.msra.mxu0 0.0
    %1579 = vmatprep.subr.mxu0 0.0
    %1580 = vmatpush2.msra.mxu0 0.0
    %1581 = vmatprep.subr.mxu0 0.0
    %1582 = vmatpush2.msra.mxu0 0.0
    %1583 = vmatprep.subr.mxu0 0.0
    %1584 = vmatpush2.msra.mxu0 0.0
    %1585 = vmatprep.subr.mxu0 0.0
    %1586 = vmatpush2.msra.mxu0 0.0
    %1587 = vmatprep.subr.mxu0 0.0
    %1588 = vmatpush2.msra.mxu0 0.0
    %1589 = vmatprep.subr.mxu0 0.0
    %1590 = vmatpush2.msra.mxu0 0.0
    %1591 = vmatprep.subr.mxu0 0.0
    %1592 = vmatpush2.msra.mxu0 0.0
    %1593 = vmatprep.mubr.f32.mxu0 0.0
    %v1594 = vand.u32 %v24, 4294901760
    %v1595 = vsub.f32 %v24, %v1594
    %1596 = vmatmul.mubr.f32.gmra.mxu0 %v1595
    %v1597 = vpop.f32.mrf.mxu0
    %v1598 = vadd.f32 %v1494, %v1597
    %v1599 = vpop.f32.mrf.mxu0
    %1600 = vdwg.mxu0
    %1601 = vmatprep.subr.mxu0 0.0
    %v1602 = vand.u32 %v705, 4294901760
    %1603 = vmatpush1.msra.mxu0 %v1602
    %1604 = vmatprep.subr.mxu0 0.0
    %v1605 = vand.u32 %v704, 4294901760
    %1606 = vmatpush1.msra.mxu0 %v1605
    %1607 = vmatprep.subr.mxu0 0.0
    %v1608 = vand.u32 %v703, 4294901760
    %1609 = vmatpush1.msra.mxu0 %v1608
    %1610 = vmatprep.subr.mxu0 0.0
    %v1611 = vand.u32 %v702, 4294901760
    %1612 = vmatpush1.msra.mxu0 %v1611
    %1613 = vmatprep.subr.mxu0 0.0
    %v1614 = vand.u32 %v701, 4294901760
    %1615 = vmatpush1.msra.mxu0 %v1614
    %1616 = vmatprep.subr.mxu0 0.0
    %v1617 = vand.u32 %v700, 4294901760
    %1618 = vmatpush1.msra.mxu0 %v1617
    %1619 = vmatprep.subr.mxu0 0.0
    %v1620 = vand.u32 %v699, 4294901760
    %1621 = vmatpush1.msra.mxu0 %v1620
    %1622 = vmatprep.subr.mxu0 0.0
    %v1623 = vand.u32 %v698, 4294901760
    %1624 = vmatpush1.msra.mxu0 %v1623
    %1625 = vmatprep.subr.mxu0 0.0
    %v1626 = vand.u32 %v697, 4294901760
    %1627 = vmatpush1.msra.mxu0 %v1626
    %1628 = vmatprep.subr.mxu0 0.0
    %v1629 = vand.u32 %v696, 4294901760
    %1630 = vmatpush1.msra.mxu0 %v1629
    %1631 = vmatprep.subr.mxu0 0.0
    %v1632 = vand.u32 %v695, 4294901760
    %1633 = vmatpush1.msra.mxu0 %v1632
    %1634 = vmatprep.subr.mxu0 0.0
    %v1635 = vand.u32 %v694, 4294901760
    %1636 = vmatpush1.msra.mxu0 %v1635
    %1637 = vmatprep.subr.mxu0 0.0
    %v1638 = vand.u32 %v693, 4294901760
    %1639 = vmatpush1.msra.mxu0 %v1638
    %1640 = vmatprep.subr.mxu0 0.0
    %v1641 = vand.u32 %v692, 4294901760
    %1642 = vmatpush1.msra.mxu0 %v1641
    %1643 = vmatprep.subr.mxu0 0.0
    %v1644 = vand.u32 %v691, 4294901760
    %1645 = vmatpush1.msra.mxu0 %v1644
    %1646 = vmatprep.subr.mxu0 0.0
    %v1647 = vand.u32 %v690, 4294901760
    %1648 = vmatpush1.msra.mxu0 %v1647
    %1649 = vmatprep.subr.mxu0 0.0
    %1650 = vmatpush2.msra.mxu0 0.0
    %1651 = vmatprep.subr.mxu0 0.0
    %1652 = vmatpush2.msra.mxu0 0.0
    %1653 = vmatprep.subr.mxu0 0.0
    %1654 = vmatpush2.msra.mxu0 0.0
    %1655 = vmatprep.subr.mxu0 0.0
    %1656 = vmatpush2.msra.mxu0 0.0
    %1657 = vmatprep.subr.mxu0 0.0
    %1658 = vmatpush2.msra.mxu0 0.0
    %1659 = vmatprep.subr.mxu0 0.0
    %1660 = vmatpush2.msra.mxu0 0.0
    %1661 = vmatprep.subr.mxu0 0.0
    %1662 = vmatpush2.msra.mxu0 0.0
    %1663 = vmatprep.subr.mxu0 0.0
    %1664 = vmatpush2.msra.mxu0 0.0
    %1665 = vmatprep.subr.mxu0 0.0
    %1666 = vmatpush2.msra.mxu0 0.0
    %1667 = vmatprep.subr.mxu0 0.0
    %1668 = vmatpush2.msra.mxu0 0.0
    %1669 = vmatprep.subr.mxu0 0.0
    %1670 = vmatpush2.msra.mxu0 0.0
    %1671 = vmatprep.subr.mxu0 0.0
    %1672 = vmatpush2.msra.mxu0 0.0
    %1673 = vmatprep.subr.mxu0 0.0
    %1674 = vmatpush2.msra.mxu0 0.0
    %1675 = vmatprep.subr.mxu0 0.0
    %1676 = vmatpush2.msra.mxu0 0.0
    %1677 = vmatprep.subr.mxu0 0.0
    %1678 = vmatpush2.msra.mxu0 0.0
    %1679 = vmatprep.subr.mxu0 0.0
    %1680 = vmatpush2.msra.mxu0 0.0
    %1681 = vmatprep.mubr.f32.mxu0 0.0
    %v1682 = vand.u32 %v24, 4294901760
    %v1683 = vsub.f32 %v24, %v1682
    %v1684 = vand.u32 %v1683, 4294901760
    %1685 = vmatmul.mubr.f32.gmra.mxu0 %v1684
    %v1686 = vpop.f32.mrf.mxu0
    %v1687 = vadd.f32 %v1598, %v1686
    %v1688 = vpop.f32.mrf.mxu0
    %1689 = vdwg.mxu0
    %1690 = vmatprep.subr.mxu0 0.0
    %v1691 = vand.u32 %v705, 4294901760
    %v1692 = vsub.f32 %v705, %v1691
    %v1693 = vand.u32 %v1692, 4294901760
    %1694 = vmatpush1.msra.mxu0 %v1693
    %1695 = vmatprep.subr.mxu0 0.0
    %v1696 = vand.u32 %v704, 4294901760
    %v1697 = vsub.f32 %v704, %v1696
    %v1698 = vand.u32 %v1697, 4294901760
    %1699 = vmatpush1.msra.mxu0 %v1698
    %1700 = vmatprep.subr.mxu0 0.0
    %v1701 = vand.u32 %v703, 4294901760
    %v1702 = vsub.f32 %v703, %v1701
    %v1703 = vand.u32 %v1702, 4294901760
    %1704 = vmatpush1.msra.mxu0 %v1703
    %1705 = vmatprep.subr.mxu0 0.0
    %v1706 = vand.u32 %v702, 4294901760
    %v1707 = vsub.f32 %v702, %v1706
    %v1708 = vand.u32 %v1707, 4294901760
    %1709 = vmatpush1.msra.mxu0 %v1708
    %1710 = vmatprep.subr.mxu0 0.0
    %v1711 = vand.u32 %v701, 4294901760
    %v1712 = vsub.f32 %v701, %v1711
    %v1713 = vand.u32 %v1712, 4294901760
    %1714 = vmatpush1.msra.mxu0 %v1713
    %1715 = vmatprep.subr.mxu0 0.0
    %v1716 = vand.u32 %v700, 4294901760
    %v1717 = vsub.f32 %v700, %v1716
    %v1718 = vand.u32 %v1717, 4294901760
    %1719 = vmatpush1.msra.mxu0 %v1718
    %1720 = vmatprep.subr.mxu0 0.0
    %v1721 = vand.u32 %v699, 4294901760
    %v1722 = vsub.f32 %v699, %v1721
    %v1723 = vand.u32 %v1722, 4294901760
    %1724 = vmatpush1.msra.mxu0 %v1723
    %1725 = vmatprep.subr.mxu0 0.0
    %v1726 = vand.u32 %v698, 4294901760
    %v1727 = vsub.f32 %v698, %v1726
    %v1728 = vand.u32 %v1727, 4294901760
    %1729 = vmatpush1.msra.mxu0 %v1728
    %1730 = vmatprep.subr.mxu0 0.0
    %v1731 = vand.u32 %v697, 4294901760
    %v1732 = vsub.f32 %v697, %v1731
    %v1733 = vand.u32 %v1732, 4294901760
    %1734 = vmatpush1.msra.mxu0 %v1733
    %1735 = vmatprep.subr.mxu0 0.0
    %v1736 = vand.u32 %v696, 4294901760
    %v1737 = vsub.f32 %v696, %v1736
    %v1738 = vand.u32 %v1737, 4294901760
    %1739 = vmatpush1.msra.mxu0 %v1738
    %1740 = vmatprep.subr.mxu0 0.0
    %v1741 = vand.u32 %v695, 4294901760
    %v1742 = vsub.f32 %v695, %v1741
    %v1743 = vand.u32 %v1742, 4294901760
    %1744 = vmatpush1.msra.mxu0 %v1743
    %1745 = vmatprep.subr.mxu0 0.0
    %v1746 = vand.u32 %v694, 4294901760
    %v1747 = vsub.f32 %v694, %v1746
    %v1748 = vand.u32 %v1747, 4294901760
    %1749 = vmatpush1.msra.mxu0 %v1748
    %1750 = vmatprep.subr.mxu0 0.0
    %v1751 = vand.u32 %v693, 4294901760
    %v1752 = vsub.f32 %v693, %v1751
    %v1753 = vand.u32 %v1752, 4294901760
    %1754 = vmatpush1.msra.mxu0 %v1753
    %1755 = vmatprep.subr.mxu0 0.0
    %v1756 = vand.u32 %v692, 4294901760
    %v1757 = vsub.f32 %v692, %v1756
    %v1758 = vand.u32 %v1757, 4294901760
    %1759 = vmatpush1.msra.mxu0 %v1758
    %1760 = vmatprep.subr.mxu0 0.0
    %v1761 = vand.u32 %v691, 4294901760
    %v1762 = vsub.f32 %v691, %v1761
    %v1763 = vand.u32 %v1762, 4294901760
    %1764 = vmatpush1.msra.mxu0 %v1763
    %1765 = vmatprep.subr.mxu0 0.0
    %v1766 = vand.u32 %v690, 4294901760
    %v1767 = vsub.f32 %v690, %v1766
    %v1768 = vand.u32 %v1767, 4294901760
    %1769 = vmatpush1.msra.mxu0 %v1768
    %1770 = vmatprep.subr.mxu0 0.0
    %1771 = vmatpush2.msra.mxu0 0.0
    %1772 = vmatprep.subr.mxu0 0.0
    %1773 = vmatpush2.msra.mxu0 0.0
    %1774 = vmatprep.subr.mxu0 0.0
    %1775 = vmatpush2.msra.mxu0 0.0
    %1776 = vmatprep.subr.mxu0 0.0
    %1777 = vmatpush2.msra.mxu0 0.0
    %1778 = vmatprep.subr.mxu0 0.0
    %1779 = vmatpush2.msra.mxu0 0.0
    %1780 = vmatprep.subr.mxu0 0.0
    %1781 = vmatpush2.msra.mxu0 0.0
    %1782 = vmatprep.subr.mxu0 0.0
    %1783 = vmatpush2.msra.mxu0 0.0
    %1784 = vmatprep.subr.mxu0 0.0
    %1785 = vmatpush2.msra.mxu0 0.0
    %1786 = vmatprep.subr.mxu0 0.0
    %1787 = vmatpush2.msra.mxu0 0.0
    %1788 = vmatprep.subr.mxu0 0.0
    %1789 = vmatpush2.msra.mxu0 0.0
    %1790 = vmatprep.subr.mxu0 0.0
    %1791 = vmatpush2.msra.mxu0 0.0
    %1792 = vmatprep.subr.mxu0 0.0
    %1793 = vmatpush2.msra.mxu0 0.0
    %1794 = vmatprep.subr.mxu0 0.0
    %1795 = vmatpush2.msra.mxu0 0.0
    %1796 = vmatprep.subr.mxu0 0.0
    %1797 = vmatpush2.msra.mxu0 0.0
    %1798 = vmatprep.subr.mxu0 0.0
    %1799 = vmatpush2.msra.mxu0 0.0
    %1800 = vmatprep.subr.mxu0 0.0
    %1801 = vmatpush2.msra.mxu0 0.0
    %1802 = vmatprep.mubr.f32.mxu0 0.0
    %v1803 = vand.u32 %v24, 4294901760
    %1804 = vmatmul.mubr.f32.gmra.mxu0 %v1803
    %v1805 = vpop.f32.mrf.mxu0
    %v1806 = vadd.f32 %v1687, %v1805
    %v1807 = vpop.f32.mrf.mxu0
    %1808 = vdwg.mxu0
    %1809 = vmatprep.subr.mxu0 0.0
    %v1810 = vand.u32 %v705, 4294901760
    %1811 = vmatpush1.msra.mxu0 %v1810
    %1812 = vmatprep.subr.mxu0 0.0
    %v1813 = vand.u32 %v704, 4294901760
    %1814 = vmatpush1.msra.mxu0 %v1813
    %1815 = vmatprep.subr.mxu0 0.0
    %v1816 = vand.u32 %v703, 4294901760
    %1817 = vmatpush1.msra.mxu0 %v1816
    %1818 = vmatprep.subr.mxu0 0.0
    %v1819 = vand.u32 %v702, 4294901760
    %1820 = vmatpush1.msra.mxu0 %v1819
    %1821 = vmatprep.subr.mxu0 0.0
    %v1822 = vand.u32 %v701, 4294901760
    %1823 = vmatpush1.msra.mxu0 %v1822
    %1824 = vmatprep.subr.mxu0 0.0
    %v1825 = vand.u32 %v700, 4294901760
    %1826 = vmatpush1.msra.mxu0 %v1825
    %1827 = vmatprep.subr.mxu0 0.0
    %v1828 = vand.u32 %v699, 4294901760
    %1829 = vmatpush1.msra.mxu0 %v1828
    %1830 = vmatprep.subr.mxu0 0.0
    %v1831 = vand.u32 %v698, 4294901760
    %1832 = vmatpush1.msra.mxu0 %v1831
    %1833 = vmatprep.subr.mxu0 0.0
    %v1834 = vand.u32 %v697, 4294901760
    %1835 = vmatpush1.msra.mxu0 %v1834
    %1836 = vmatprep.subr.mxu0 0.0
    %v1837 = vand.u32 %v696, 4294901760
    %1838 = vmatpush1.msra.mxu0 %v1837
    %1839 = vmatprep.subr.mxu0 0.0
    %v1840 = vand.u32 %v695, 4294901760
    %1841 = vmatpush1.msra.mxu0 %v1840
    %1842 = vmatprep.subr.mxu0 0.0
    %v1843 = vand.u32 %v694, 4294901760
    %1844 = vmatpush1.msra.mxu0 %v1843
    %1845 = vmatprep.subr.mxu0 0.0
    %v1846 = vand.u32 %v693, 4294901760
    %1847 = vmatpush1.msra.mxu0 %v1846
    %1848 = vmatprep.subr.mxu0 0.0
    %v1849 = vand.u32 %v692, 4294901760
    %1850 = vmatpush1.msra.mxu0 %v1849
    %1851 = vmatprep.subr.mxu0 0.0
    %v1852 = vand.u32 %v691, 4294901760
    %1853 = vmatpush1.msra.mxu0 %v1852
    %1854 = vmatprep.subr.mxu0 0.0
    %v1855 = vand.u32 %v690, 4294901760
    %1856 = vmatpush1.msra.mxu0 %v1855
    %1857 = vmatprep.subr.mxu0 0.0
    %1858 = vmatpush2.msra.mxu0 0.0
    %1859 = vmatprep.subr.mxu0 0.0
    %1860 = vmatpush2.msra.mxu0 0.0
    %1861 = vmatprep.subr.mxu0 0.0
    %1862 = vmatpush2.msra.mxu0 0.0
    %1863 = vmatprep.subr.mxu0 0.0
    %1864 = vmatpush2.msra.mxu0 0.0
    %1865 = vmatprep.subr.mxu0 0.0
    %1866 = vmatpush2.msra.mxu0 0.0
    %1867 = vmatprep.subr.mxu0 0.0
    %1868 = vmatpush2.msra.mxu0 0.0
    %1869 = vmatprep.subr.mxu0 0.0
    %1870 = vmatpush2.msra.mxu0 0.0
    %1871 = vmatprep.subr.mxu0 0.0
    %1872 = vmatpush2.msra.mxu0 0.0
    %1873 = vmatprep.subr.mxu0 0.0
    %1874 = vmatpush2.msra.mxu0 0.0
    %1875 = vmatprep.subr.mxu0 0.0
    %1876 = vmatpush2.msra.mxu0 0.0
    %1877 = vmatprep.subr.mxu0 0.0
    %1878 = vmatpush2.msra.mxu0 0.0
    %1879 = vmatprep.subr.mxu0 0.0
    %1880 = vmatpush2.msra.mxu0 0.0
    %1881 = vmatprep.subr.mxu0 0.0
    %1882 = vmatpush2.msra.mxu0 0.0
    %1883 = vmatprep.subr.mxu0 0.0
    %1884 = vmatpush2.msra.mxu0 0.0
    %1885 = vmatprep.subr.mxu0 0.0
    %1886 = vmatpush2.msra.mxu0 0.0
    %1887 = vmatprep.subr.mxu0 0.0
    %1888 = vmatpush2.msra.mxu0 0.0
    %1889 = vmatprep.mubr.f32.mxu0 0.0
    %v1890 = vand.u32 %v24, 4294901760
    %1891 = vmatmul.mubr.f32.gmra.mxu0 %v1890
    %v1892 = vpop.f32.mrf.mxu0
    %v1893 = vadd.f32 %v1806, %v1892
    %v1894 = vpop.f32.mrf.mxu0
    %1895 = vdwg.mxu0
    %v1896 = vld [vmem:[%s5] sm:$0x1]
    %v1898 = vlaneseq
    %v1899 = vshrl.u32 %v1898, 7
    %v1900 = vsub.s32 0, %v1899
    %v1901 = vrot.slane %v1896, %v1900
    %v1903 = vadd.f32 %v1893, %v1901
    %1904 = vst [vmem:[#allocation2] sm:$0x3] %v1903
    // Predicated region
    $region26: #{tpu_custom_call.1} parent=1 // pred_check
      _
    $region27: #{tpu_custom_call.1} parent=1 // pred_check_branch
      %1906 = sbr.rel (0) target = $region29
    $region28: #{tpu_custom_call.1} parent=1 // pred_region
      %s1908 = ssub.s32 32, 32
      %1909 = vsyncadd [#allocation3], %s1908
      %s1911 = sshll.u32 [#allocation2], 4
      %s1912 = int_to_ptr.vmem [resolvable:$true] %s1911
      %1914 = dma.vmem_to_hbm [thread:$0]  %s1912, 32, %s6, [#allocation3]
    $region29: #{tpu_custom_call.1} parent=1 // pred_fallthru
      _
    // Predicated region
    $region30: #{tpu_custom_call.1} parent=1 // pred_check
      _
    $region31: #{tpu_custom_call.1} parent=1 // pred_check_branch
      %1916 = sbr.rel (0) target = $region33
    $region32: #{tpu_custom_call.1} parent=1 // pred_region
      %1917 = dma.done [#allocation3], 32
    $region33: #{tpu_custom_call.1} parent=1 // pred_fallthru
      _
    %1918 = vsyncpa [#allocation3], 1

</llo_original>
